<compile_context>
chip_gen: v7x
topology: tpu7x:2x2x1
jax: 0.10.0
libtpu: 0.0.40
codegen_flags: <defaults>
</compile_context>

<pallas_src>
import functools

import jax
import jax.numpy as jnp
from jax import lax
from jax.experimental import pallas as pl
from jax.experimental.pallas import tpu as pltpu

PAD_IDX = 0
NUM_LAYERS = 2
LANE = 128


def _round_up(x, m):
    return (x + m - 1) // m * m


def _encoder_gru2_kernel(ids_ref, emb_ref,
                         wi0_ref, wh0_ref, bi0_ref, bhn0_ref,
                         wi1_ref, wh1_ref, bi1_ref, bhn1_ref,
                         hn_ref, *, S, B, H, HP, V):
    """Fused embedding + 2-layer GRU over the full sequence.

    ids_ref : (S*B, 1)  int32 time-major-flattened token ids (VMEM)
    emb_ref : (V, E)    bf16 embedding table (padding row zero)
    wiL_ref : (in, 3*HP) bf16 fused input->hidden weights, gate g in lanes [g*HP, g*HP+H)
    whL_ref : (HP, 3*HP) bf16 fused hidden->hidden weights
    biL_ref : (1, 3*HP) f32 fused bias: [b_ir+b_hr | b_iz+b_hz | b_in], zero-padded
    bhnL_ref: (1, HP)   f32 hidden bias of the n gate (scaled by r in the cell)
    hn_ref  : (2, B, H) f32 final hidden state per layer (written once)
    """
    f32 = jnp.float32
    bf16 = jnp.bfloat16

    # ---- Fused embedding gather: one-hot matmul on the MXU ------------------
    ids = ids_ref[...]                                            # (S*B, 1) i32
    vocab_iota = lax.broadcasted_iota(jnp.int32, (S * B, V), 1)   # (S*B, V)
    onehot = jnp.where(ids == vocab_iota, 1.0, 0.0).astype(bf16)  # (S*B, V)
    x_flat = jnp.dot(onehot, emb_ref[...],
                     preferred_element_type=f32)                  # (S*B, E) f32

    # ---- Hoisted layer-0 input projection (batched over all time steps) -----
    gi0_all = jnp.dot(x_flat.astype(bf16), wi0_ref[...],
                      preferred_element_type=f32) + bi0_ref[...]  # (S*B, 3*HP)

    # ---- Hoist weight loads and bias broadcasts out of the unrolled loop ----
    wh0 = wh0_ref[...]
    wi1 = wi1_ref[...]
    wh1 = wh1_ref[...]
    bi1_b = jnp.broadcast_to(bi1_ref[...], (B, 3 * HP))
    bhn0_b = jnp.broadcast_to(bhn0_ref[...], (B, HP))
    bhn1_b = jnp.broadcast_to(bhn1_ref[...], (B, HP))

    def gates(gi, gh, bhn, h_prev):
        # Whole-vreg gate slices (each gate occupies its own 128-lane block).
        r = jax.nn.sigmoid(gi[:, 0:HP] + gh[:, 0:HP])
        z = jax.nn.sigmoid(gi[:, HP:2 * HP] + gh[:, HP:2 * HP])
        n = jnp.tanh(gi[:, 2 * HP:3 * HP] + r * (gh[:, 2 * HP:3 * HP] + bhn))
        return (1.0 - z) * n + z * h_prev

    h0 = jnp.zeros((B, HP), f32)
    h1 = jnp.zeros((B, HP), f32)

    # Fully unrolled recurrence; static slices of the precomputed projections.
    for t in range(S):
        gi0 = gi0_all[t * B:(t + 1) * B, :]                       # (B, 3*HP)
        gh0 = jnp.dot(h0.astype(bf16), wh0, preferred_element_type=f32)
        h0 = gates(gi0, gh0, bhn0_b, h0)                          # layer 0
        # layer 1 (eval mode: no inter-layer dropout)
        gi1 = jnp.dot(h0.astype(bf16), wi1, preferred_element_type=f32) + bi1_b
        gh1 = jnp.dot(h1.astype(bf16), wh1, preferred_element_type=f32)
        h1 = gates(gi1, gh1, bhn1_b, h1)

    # Final hidden state written exactly once.
    hn_ref[0] = h0[:, 0:H].astype(hn_ref.dtype)
    hn_ref[1] = h1[:, 0:H].astype(hn_ref.dtype)


def init_encoder_params(key, vocab_size, embed_size, hidden_size,
                        num_layers=NUM_LAYERS):
    assert num_layers == NUM_LAYERS, "fused kernel is specialized for 2 layers"
    HP = _round_up(hidden_size, LANE)
    keys = jax.random.split(key, 1 + 4 * num_layers)

    # Embedding: N(0,1) like PyTorch default, padding row zeroed, stored bf16
    # (it is only ever an MXU operand).
    emb = jax.random.normal(keys[0], (vocab_size, embed_size), dtype=jnp.float32)
    emb = emb.at[PAD_IDX].set(0.0)
    params = {"embedding": emb.astype(jnp.bfloat16)}

    bound = 1.0 / float(hidden_size) ** 0.5
    for layer in range(num_layers):
        in_size = embed_size if layer == 0 else hidden_size
        in_rows = embed_size if layer == 0 else HP   # layer-1 input is HP-padded h0
        k0, k1, k2, k3 = keys[1 + 4 * layer: 1 + 4 * (layer + 1)]
        # Per-gate (r, z, n) weights, PyTorch-style U(-1/sqrt(H), 1/sqrt(H)),
        # stored pre-transposed (in, H) and packed into 128-lane-aligned blocks.
        w_i = jax.random.uniform(k0, (3, in_size, hidden_size), jnp.float32, -bound, bound)
        w_h = jax.random.uniform(k1, (3, hidden_size, hidden_size), jnp.float32, -bound, bound)
        b_i = jax.random.uniform(k2, (3, hidden_size), jnp.float32, -bound, bound)
        b_h = jax.random.uniform(k3, (3, hidden_size), jnp.float32, -bound, bound)

        wi = jnp.zeros((in_rows, 3 * HP), jnp.float32)
        wh = jnp.zeros((HP, 3 * HP), jnp.float32)
        bi = jnp.zeros((1, 3 * HP), jnp.float32)
        bhn = jnp.zeros((1, HP), jnp.float32)
        for g in range(3):
            wi = wi.at[:in_size, g * HP:g * HP + hidden_size].set(w_i[g])
            wh = wh.at[:hidden_size, g * HP:g * HP + hidden_size].set(w_h[g])
        # Pre-folded biases: r/z get b_i+b_h once; n keeps b_in fused here and
        # b_hn separate (it is multiplied by r inside the cell).
        bi = bi.at[0, 0 * HP:0 * HP + hidden_size].set(b_i[0] + b_h[0])
        bi = bi.at[0, 1 * HP:1 * HP + hidden_size].set(b_i[1] + b_h[1])
        bi = bi.at[0, 2 * HP:2 * HP + hidden_size].set(b_i[2])
        bhn = bhn.at[0, :hidden_size].set(b_h[2])

        params[f"wi{layer}"] = wi.astype(jnp.bfloat16)
        params[f"wh{layer}"] = wh.astype(jnp.bfloat16)
        params[f"bi{layer}"] = bi
        params[f"bhn{layer}"] = bhn
    return params


@functools.partial(jax.jit, static_argnames=("hidden_size",))
def encoder_forward(params, token_ids, hidden_size):
    """token_ids: (batch, seq) int32 -> (h_n, c_n) each (NUM_LAYERS, batch, hidden)."""
    B, S = token_ids.shape
    V, E = params["embedding"].shape
    HP = params["wh0"].shape[0]

    # Time-major flattening of the ids (tiny int op); the embedding gather and
    # everything downstream happen inside the single Pallas kernel.
    ids_col = token_ids.T.reshape(S * B, 1).astype(jnp.int32)

    kernel = functools.partial(_encoder_gru2_kernel,
                               S=S, B=B, H=hidden_size, HP=HP, V=V)
    vmem = pl.BlockSpec(memory_space=pltpu.MemorySpace.VMEM)
    h_n = pl.pallas_call(
        kernel,
        out_shape=jax.ShapeDtypeStruct((NUM_LAYERS, B, hidden_size), jnp.float32),
        in_specs=[vmem] * 10,
        out_specs=vmem,
    )(ids_col, params["embedding"],
      params["wi0"], params["wh0"], params["bi0"], params["bhn0"],
      params["wi1"], params["wh1"], params["bi1"], params["bhn1"])

    c_n = jnp.zeros_like(h_n)   # nn.GRU has no cell state; zeros mimic the LSTM-style API.
    return h_n, c_n


def _encoder_forward_ref(params, token_ids, hidden_size):
    """Pure-JAX reference mirroring the kernel math (bf16 matmul operands, f32 gates)."""
    B, S = token_ids.shape
    HP = params["wh0"].shape[0]
    f32, bf16 = jnp.float32, jnp.bfloat16
    x = jnp.take(params["embedding"].astype(f32), token_ids.T, axis=0)   # (S, B, E)

    def cell(gi, h, wh, bhn):
        gh = jnp.dot(h.astype(bf16), wh, preferred_element_type=f32)
        r = jax.nn.sigmoid(gi[:, :HP] + gh[:, :HP])
        z = jax.nn.sigmoid(gi[:, HP:2 * HP] + gh[:, HP:2 * HP])
        n = jnp.tanh(gi[:, 2 * HP:] + r * (gh[:, 2 * HP:] + bhn))
        return (1.0 - z) * n + z * h

    h0 = jnp.zeros((B, HP), f32)
    h1 = jnp.zeros((B, HP), f32)
    for t in range(S):
        gi0 = jnp.dot(x[t].astype(bf16), params["wi0"],
                      preferred_element_type=f32) + params["bi0"]
        h0 = cell(gi0, h0, params["wh0"], params["bhn0"])
        gi1 = jnp.dot(h0.astype(bf16), params["wi1"],
                      preferred_element_type=f32) + params["bi1"]
        h1 = cell(gi1, h1, params["wh1"], params["bhn1"])
    return jnp.stack([h0[:, :hidden_size], h1[:, :hidden_size]], axis=0)


if __name__ == "__main__":
    vocab_size, embed_size, hidden_size = 50, 32, 32
    batch, seq_len = 2, 8

    key = jax.random.PRNGKey(0)
    pkey, dkey = jax.random.split(key)
    params = init_encoder_params(pkey, vocab_size, embed_size, hidden_size)
    token_ids = jax.random.randint(dkey, (batch, seq_len), 0, vocab_size, dtype=jnp.int32)

    h_n, c_n = encoder_forward(params, token_ids, hidden_size)
    jax.block_until_ready((h_n, c_n))

    assert h_n.shape == (NUM_LAYERS, batch, hidden_size)
    assert c_n.shape == (NUM_LAYERS, batch, hidden_size)
    assert bool(jnp.all(c_n == 0.0))

    h_ref = _encoder_forward_ref(params, token_ids, hidden_size)
    max_err = float(jnp.max(jnp.abs(h_n - h_ref)))
    assert max_err < 5e-3, f"mismatch vs reference: {max_err}"

    print("KERNEL_OK")
</pallas_src>

<mosaic_0001>
module attributes {stable_mosaic.version = 11 : i64} {
  func.func @_encoder_gru2_kernel(%arg0: memref<16x1xi32, #tpu.memory_space<vmem>>, %arg1: memref<50x32xbf16, #tpu.memory_space<vmem>>, %arg2: memref<32x384xbf16, #tpu.memory_space<vmem>>, %arg3: memref<128x384xbf16, #tpu.memory_space<vmem>>, %arg4: memref<1x384xf32, #tpu.memory_space<vmem>>, %arg5: memref<1x128xf32, #tpu.memory_space<vmem>>, %arg6: memref<128x384xbf16, #tpu.memory_space<vmem>>, %arg7: memref<128x384xbf16, #tpu.memory_space<vmem>>, %arg8: memref<1x384xf32, #tpu.memory_space<vmem>>, %arg9: memref<1x128xf32, #tpu.memory_space<vmem>>, %arg10: memref<2x2x32xf32, #tpu.memory_space<vmem>>) attributes {dimension_semantics = [], scalar_prefetch = 0 : i64, scratch_operands = 0 : i64, tpu.core_type = #tpu.core_type<tc>} {
    %c0 = arith.constant 0 : index
    %c0_0 = arith.constant 0 : index
    %0 = vector.load %arg0[%c0, %c0_0] : memref<16x1xi32, #tpu.memory_space<vmem>>, vector<16x1xi32>
    %1 = tpu.iota {dimensions = array<i32: 1>} : vector<16x50xi32>
    %2 = vector.broadcast %0 : vector<16x1xi32> to vector<16x50xi32>
    %3 = arith.cmpi eq, %2, %1 : vector<16x50xi32>
    %cst = arith.constant 1.000000e+00 : f32
    %cst_1 = arith.constant 0.000000e+00 : f32
    %4 = vector.broadcast %cst : f32 to vector<16x50xf32>
    %5 = vector.broadcast %cst_1 : f32 to vector<16x50xf32>
    %6 = arith.select %3, %4, %5 : vector<16x50xi1>, vector<16x50xf32>
    %7 = arith.truncf %6 : vector<16x50xf32> to vector<16x50xbf16>
    %c0_2 = arith.constant 0 : index
    %c0_3 = arith.constant 0 : index
    %8 = vector.load %arg1[%c0_2, %c0_3] : memref<50x32xbf16, #tpu.memory_space<vmem>>, vector<50x32xbf16>
    %cst_4 = arith.constant dense<0.000000e+00> : vector<16x32xf32>
    %9 = tpu.matmul %7, %8, %cst_4 {dimension_numbers = #tpu.dot_dimension_numbers<[1], [0], [0], [1], [0, 0, 1, 1], [], []>} : vector<16x50xbf16>, vector<50x32xbf16>, vector<16x32xf32> -> vector<16x32xf32>
    %10 = arith.truncf %9 : vector<16x32xf32> to vector<16x32xbf16>
    %c0_5 = arith.constant 0 : index
    %c0_6 = arith.constant 0 : index
    %11 = vector.load %arg2[%c0_5, %c0_6] : memref<32x384xbf16, #tpu.memory_space<vmem>>, vector<32x384xbf16>
    %cst_7 = arith.constant dense<0.000000e+00> : vector<16x384xf32>
    %12 = tpu.matmul %10, %11, %cst_7 {dimension_numbers = #tpu.dot_dimension_numbers<[1], [0], [0], [1], [0, 0, 1, 1], [], []>} : vector<16x32xbf16>, vector<32x384xbf16>, vector<16x384xf32> -> vector<16x384xf32>
    %c0_8 = arith.constant 0 : index
    %c0_9 = arith.constant 0 : index
    %13 = vector.load %arg4[%c0_8, %c0_9] : memref<1x384xf32, #tpu.memory_space<vmem>>, vector<1x384xf32>
    %14 = vector.broadcast %13 : vector<1x384xf32> to vector<16x384xf32>
    %15 = arith.addf %12, %14 : vector<16x384xf32>
    %c0_10 = arith.constant 0 : index
    %c0_11 = arith.constant 0 : index
    %16 = vector.load %arg3[%c0_10, %c0_11] : memref<128x384xbf16, #tpu.memory_space<vmem>>, vector<128x384xbf16>
    %c0_12 = arith.constant 0 : index
    %c0_13 = arith.constant 0 : index
    %17 = vector.load %arg6[%c0_12, %c0_13] : memref<128x384xbf16, #tpu.memory_space<vmem>>, vector<128x384xbf16>
    %c0_14 = arith.constant 0 : index
    %c0_15 = arith.constant 0 : index
    %18 = vector.load %arg7[%c0_14, %c0_15] : memref<128x384xbf16, #tpu.memory_space<vmem>>, vector<128x384xbf16>
    %c0_16 = arith.constant 0 : index
    %c0_17 = arith.constant 0 : index
    %19 = vector.load %arg8[%c0_16, %c0_17] : memref<1x384xf32, #tpu.memory_space<vmem>>, vector<1x384xf32>
    %20 = vector.shape_cast %19 : vector<1x384xf32> to vector<1x384xf32>
    %21 = vector.broadcast %20 : vector<1x384xf32> to vector<2x384xf32>
    %c0_18 = arith.constant 0 : index
    %c0_19 = arith.constant 0 : index
    %22 = vector.load %arg5[%c0_18, %c0_19] : memref<1x128xf32, #tpu.memory_space<vmem>>, vector<1x128xf32>
    %23 = vector.shape_cast %22 : vector<1x128xf32> to vector<1x128xf32>
    %24 = vector.broadcast %23 : vector<1x128xf32> to vector<2x128xf32>
    %c0_20 = arith.constant 0 : index
    %c0_21 = arith.constant 0 : index
    %25 = vector.load %arg9[%c0_20, %c0_21] : memref<1x128xf32, #tpu.memory_space<vmem>>, vector<1x128xf32>
    %26 = vector.shape_cast %25 : vector<1x128xf32> to vector<1x128xf32>
    %27 = vector.broadcast %26 : vector<1x128xf32> to vector<2x128xf32>
    %cst_22 = arith.constant 0.000000e+00 : f32
    %28 = vector.broadcast %cst_22 : f32 to vector<2x128xf32>
    %cst_23 = arith.constant 0.000000e+00 : f32
    %29 = vector.broadcast %cst_23 : f32 to vector<2x128xf32>
    %30 = vector.extract_strided_slice %15 {offsets = [0, 0], sizes = [2, 384], strides = [1, 1]} : vector<16x384xf32> to vector<2x384xf32>
    %31 = arith.truncf %28 : vector<2x128xf32> to vector<2x128xbf16>
    %cst_24 = arith.constant dense<0.000000e+00> : vector<2x384xf32>
    %32 = tpu.matmul %31, %16, %cst_24 {dimension_numbers = #tpu.dot_dimension_numbers<[1], [0], [0], [1], [0, 0, 1, 1], [], []>} : vector<2x128xbf16>, vector<128x384xbf16>, vector<2x384xf32> -> vector<2x384xf32>
    %33 = vector.extract_strided_slice %30 {offsets = [0, 0], sizes = [2, 128], strides = [1, 1]} : vector<2x384xf32> to vector<2x128xf32>
    %34 = vector.extract_strided_slice %32 {offsets = [0, 0], sizes = [2, 128], strides = [1, 1]} : vector<2x384xf32> to vector<2x128xf32>
    %35 = arith.addf %33, %34 : vector<2x128xf32>
    %36 = arith.negf %35 : vector<2x128xf32>
    %37 = math.exp %36 : vector<2x128xf32>
    %cst_25 = arith.constant 1.000000e+00 : f32
    %38 = vector.broadcast %cst_25 : f32 to vector<2x128xf32>
    %39 = arith.addf %38, %37 : vector<2x128xf32>
    %40 = arith.divf %38, %39 : vector<2x128xf32>
    %41 = vector.extract_strided_slice %30 {offsets = [0, 128], sizes = [2, 128], strides = [1, 1]} : vector<2x384xf32> to vector<2x128xf32>
    %42 = vector.extract_strided_slice %32 {offsets = [0, 128], sizes = [2, 128], strides = [1, 1]} : vector<2x384xf32> to vector<2x128xf32>
    %43 = arith.addf %41, %42 : vector<2x128xf32>
    %44 = arith.negf %43 : vector<2x128xf32>
    %45 = math.exp %44 : vector<2x128xf32>
    %cst_26 = arith.constant 1.000000e+00 : f32
    %46 = vector.broadcast %cst_26 : f32 to vector<2x128xf32>
    %47 = arith.addf %46, %45 : vector<2x128xf32>
    %48 = arith.divf %46, %47 : vector<2x128xf32>
    %49 = vector.extract_strided_slice %30 {offsets = [0, 256], sizes = [2, 128], strides = [1, 1]} : vector<2x384xf32> to vector<2x128xf32>
    %50 = vector.extract_strided_slice %32 {offsets = [0, 256], sizes = [2, 128], strides = [1, 1]} : vector<2x384xf32> to vector<2x128xf32>
    %51 = arith.addf %50, %24 : vector<2x128xf32>
    %52 = arith.mulf %40, %51 : vector<2x128xf32>
    %53 = arith.addf %49, %52 : vector<2x128xf32>
    %54 = math.tanh %53 : vector<2x128xf32>
    %cst_27 = arith.constant 1.000000e+00 : f32
    %55 = vector.broadcast %cst_27 : f32 to vector<2x128xf32>
    %56 = arith.subf %55, %48 : vector<2x128xf32>
    %57 = arith.mulf %56, %54 : vector<2x128xf32>
    %58 = arith.mulf %48, %28 : vector<2x128xf32>
    %59 = arith.addf %57, %58 : vector<2x128xf32>
    %60 = arith.truncf %59 : vector<2x128xf32> to vector<2x128xbf16>
    %cst_28 = arith.constant dense<0.000000e+00> : vector<2x384xf32>
    %61 = tpu.matmul %60, %17, %cst_28 {dimension_numbers = #tpu.dot_dimension_numbers<[1], [0], [0], [1], [0, 0, 1, 1], [], []>} : vector<2x128xbf16>, vector<128x384xbf16>, vector<2x384xf32> -> vector<2x384xf32>
    %62 = arith.addf %61, %21 : vector<2x384xf32>
    %63 = arith.truncf %29 : vector<2x128xf32> to vector<2x128xbf16>
    %cst_29 = arith.constant dense<0.000000e+00> : vector<2x384xf32>
    %64 = tpu.matmul %63, %18, %cst_29 {dimension_numbers = #tpu.dot_dimension_numbers<[1], [0], [0], [1], [0, 0, 1, 1], [], []>} : vector<2x128xbf16>, vector<128x384xbf16>, vector<2x384xf32> -> vector<2x384xf32>
    %65 = vector.extract_strided_slice %62 {offsets = [0, 0], sizes = [2, 128], strides = [1, 1]} : vector<2x384xf32> to vector<2x128xf32>
    %66 = vector.extract_strided_slice %64 {offsets = [0, 0], sizes = [2, 128], strides = [1, 1]} : vector<2x384xf32> to vector<2x128xf32>
    %67 = arith.addf %65, %66 : vector<2x128xf32>
    %68 = arith.negf %67 : vector<2x128xf32>
    %69 = math.exp %68 : vector<2x128xf32>
    %cst_30 = arith.constant 1.000000e+00 : f32
    %70 = vector.broadcast %cst_30 : f32 to vector<2x128xf32>
    %71 = arith.addf %70, %69 : vector<2x128xf32>
    %72 = arith.divf %70, %71 : vector<2x128xf32>
    %73 = vector.extract_strided_slice %62 {offsets = [0, 128], sizes = [2, 128], strides = [1, 1]} : vector<2x384xf32> to vector<2x128xf32>
    %74 = vector.extract_strided_slice %64 {offsets = [0, 128], sizes = [2, 128], strides = [1, 1]} : vector<2x384xf32> to vector<2x128xf32>
    %75 = arith.addf %73, %74 : vector<2x128xf32>
    %76 = arith.negf %75 : vector<2x128xf32>
    %77 = math.exp %76 : vector<2x128xf32>
    %cst_31 = arith.constant 1.000000e+00 : f32
    %78 = vector.broadcast %cst_31 : f32 to vector<2x128xf32>
    %79 = arith.addf %78, %77 : vector<2x128xf32>
    %80 = arith.divf %78, %79 : vector<2x128xf32>
    %81 = vector.extract_strided_slice %62 {offsets = [0, 256], sizes = [2, 128], strides = [1, 1]} : vector<2x384xf32> to vector<2x128xf32>
    %82 = vector.extract_strided_slice %64 {offsets = [0, 256], sizes = [2, 128], strides = [1, 1]} : vector<2x384xf32> to vector<2x128xf32>
    %83 = arith.addf %82, %27 : vector<2x128xf32>
    %84 = arith.mulf %72, %83 : vector<2x128xf32>
    %85 = arith.addf %81, %84 : vector<2x128xf32>
    %86 = math.tanh %85 : vector<2x128xf32>
    %cst_32 = arith.constant 1.000000e+00 : f32
    %87 = vector.broadcast %cst_32 : f32 to vector<2x128xf32>
    %88 = arith.subf %87, %80 : vector<2x128xf32>
    %89 = arith.mulf %88, %86 : vector<2x128xf32>
    %90 = arith.mulf %80, %29 : vector<2x128xf32>
    %91 = arith.addf %89, %90 : vector<2x128xf32>
    %92 = vector.extract_strided_slice %15 {offsets = [2, 0], sizes = [2, 384], strides = [1, 1]} : vector<16x384xf32> to vector<2x384xf32>
    %93 = arith.truncf %59 : vector<2x128xf32> to vector<2x128xbf16>
    %cst_33 = arith.constant dense<0.000000e+00> : vector<2x384xf32>
    %94 = tpu.matmul %93, %16, %cst_33 {dimension_numbers = #tpu.dot_dimension_numbers<[1], [0], [0], [1], [0, 0, 1, 1], [], []>} : vector<2x128xbf16>, vector<128x384xbf16>, vector<2x384xf32> -> vector<2x384xf32>
    %95 = vector.extract_strided_slice %92 {offsets = [0, 0], sizes = [2, 128], strides = [1, 1]} : vector<2x384xf32> to vector<2x128xf32>
    %96 = vector.extract_strided_slice %94 {offsets = [0, 0], sizes = [2, 128], strides = [1, 1]} : vector<2x384xf32> to vector<2x128xf32>
    %97 = arith.addf %95, %96 : vector<2x128xf32>
    %98 = arith.negf %97 : vector<2x128xf32>
    %99 = math.exp %98 : vector<2x128xf32>
    %cst_34 = arith.constant 1.000000e+00 : f32
    %100 = vector.broadcast %cst_34 : f32 to vector<2x128xf32>
    %101 = arith.addf %100, %99 : vector<2x128xf32>
    %102 = arith.divf %100, %101 : vector<2x128xf32>
    %103 = vector.extract_strided_slice %92 {offsets = [0, 128], sizes = [2, 128], strides = [1, 1]} : vector<2x384xf32> to vector<2x128xf32>
    %104 = vector.extract_strided_slice %94 {offsets = [0, 128], sizes = [2, 128], strides = [1, 1]} : vector<2x384xf32> to vector<2x128xf32>
    %105 = arith.addf %103, %104 : vector<2x128xf32>
    %106 = arith.negf %105 : vector<2x128xf32>
    %107 = math.exp %106 : vector<2x128xf32>
    %cst_35 = arith.constant 1.000000e+00 : f32
    %108 = vector.broadcast %cst_35 : f32 to vector<2x128xf32>
    %109 = arith.addf %108, %107 : vector<2x128xf32>
    %110 = arith.divf %108, %109 : vector<2x128xf32>
    %111 = vector.extract_strided_slice %92 {offsets = [0, 256], sizes = [2, 128], strides = [1, 1]} : vector<2x384xf32> to vector<2x128xf32>
    %112 = vector.extract_strided_slice %94 {offsets = [0, 256], sizes = [2, 128], strides = [1, 1]} : vector<2x384xf32> to vector<2x128xf32>
    %113 = arith.addf %112, %24 : vector<2x128xf32>
    %114 = arith.mulf %102, %113 : vector<2x128xf32>
    %115 = arith.addf %111, %114 : vector<2x128xf32>
    %116 = math.tanh %115 : vector<2x128xf32>
    %cst_36 = arith.constant 1.000000e+00 : f32
    %117 = vector.broadcast %cst_36 : f32 to vector<2x128xf32>
    %118 = arith.subf %117, %110 : vector<2x128xf32>
    %119 = arith.mulf %118, %116 : vector<2x128xf32>
    %120 = arith.mulf %110, %59 : vector<2x128xf32>
    %121 = arith.addf %119, %120 : vector<2x128xf32>
    %122 = arith.truncf %121 : vector<2x128xf32> to vector<2x128xbf16>
    %cst_37 = arith.constant dense<0.000000e+00> : vector<2x384xf32>
    %123 = tpu.matmul %122, %17, %cst_37 {dimension_numbers = #tpu.dot_dimension_numbers<[1], [0], [0], [1], [0, 0, 1, 1], [], []>} : vector<2x128xbf16>, vector<128x384xbf16>, vector<2x384xf32> -> vector<2x384xf32>
    %124 = arith.addf %123, %21 : vector<2x384xf32>
    %125 = arith.truncf %91 : vector<2x128xf32> to vector<2x128xbf16>
    %cst_38 = arith.constant dense<0.000000e+00> : vector<2x384xf32>
    %126 = tpu.matmul %125, %18, %cst_38 {dimension_numbers = #tpu.dot_dimension_numbers<[1], [0], [0], [1], [0, 0, 1, 1], [], []>} : vector<2x128xbf16>, vector<128x384xbf16>, vector<2x384xf32> -> vector<2x384xf32>
    %127 = vector.extract_strided_slice %124 {offsets = [0, 0], sizes = [2, 128], strides = [1, 1]} : vector<2x384xf32> to vector<2x128xf32>
    %128 = vector.extract_strided_slice %126 {offsets = [0, 0], sizes = [2, 128], strides = [1, 1]} : vector<2x384xf32> to vector<2x128xf32>
    %129 = arith.addf %127, %128 : vector<2x128xf32>
    %130 = arith.negf %129 : vector<2x128xf32>
    %131 = math.exp %130 : vector<2x128xf32>
    %cst_39 = arith.constant 1.000000e+00 : f32
    %132 = vector.broadcast %cst_39 : f32 to vector<2x128xf32>
    %133 = arith.addf %132, %131 : vector<2x128xf32>
    %134 = arith.divf %132, %133 : vector<2x128xf32>
    %135 = vector.extract_strided_slice %124 {offsets = [0, 128], sizes = [2, 128], strides = [1, 1]} : vector<2x384xf32> to vector<2x128xf32>
    %136 = vector.extract_strided_slice %126 {offsets = [0, 128], sizes = [2, 128], strides = [1, 1]} : vector<2x384xf32> to vector<2x128xf32>
    %137 = arith.addf %135, %136 : vector<2x128xf32>
    %138 = arith.negf %137 : vector<2x128xf32>
    %139 = math.exp %138 : vector<2x128xf32>
    %cst_40 = arith.constant 1.000000e+00 : f32
    %140 = vector.broadcast %cst_40 : f32 to vector<2x128xf32>
    %141 = arith.addf %140, %139 : vector<2x128xf32>
    %142 = arith.divf %140, %141 : vector<2x128xf32>
    %143 = vector.extract_strided_slice %124 {offsets = [0, 256], sizes = [2, 128], strides = [1, 1]} : vector<2x384xf32> to vector<2x128xf32>
    %144 = vector.extract_strided_slice %126 {offsets = [0, 256], sizes = [2, 128], strides = [1, 1]} : vector<2x384xf32> to vector<2x128xf32>
    %145 = arith.addf %144, %27 : vector<2x128xf32>
    %146 = arith.mulf %134, %145 : vector<2x128xf32>
    %147 = arith.addf %143, %146 : vector<2x128xf32>
    %148 = math.tanh %147 : vector<2x128xf32>
    %cst_41 = arith.constant 1.000000e+00 : f32
    %149 = vector.broadcast %cst_41 : f32 to vector<2x128xf32>
    %150 = arith.subf %149, %142 : vector<2x128xf32>
    %151 = arith.mulf %150, %148 : vector<2x128xf32>
    %152 = arith.mulf %142, %91 : vector<2x128xf32>
    %153 = arith.addf %151, %152 : vector<2x128xf32>
    %154 = vector.extract_strided_slice %15 {offsets = [4, 0], sizes = [2, 384], strides = [1, 1]} : vector<16x384xf32> to vector<2x384xf32>
    %155 = arith.truncf %121 : vector<2x128xf32> to vector<2x128xbf16>
    %cst_42 = arith.constant dense<0.000000e+00> : vector<2x384xf32>
    %156 = tpu.matmul %155, %16, %cst_42 {dimension_numbers = #tpu.dot_dimension_numbers<[1], [0], [0], [1], [0, 0, 1, 1], [], []>} : vector<2x128xbf16>, vector<128x384xbf16>, vector<2x384xf32> -> vector<2x384xf32>
    %157 = vector.extract_strided_slice %154 {offsets = [0, 0], sizes = [2, 128], strides = [1, 1]} : vector<2x384xf32> to vector<2x128xf32>
    %158 = vector.extract_strided_slice %156 {offsets = [0, 0], sizes = [2, 128], strides = [1, 1]} : vector<2x384xf32> to vector<2x128xf32>
    %159 = arith.addf %157, %158 : vector<2x128xf32>
    %160 = arith.negf %159 : vector<2x128xf32>
    %161 = math.exp %160 : vector<2x128xf32>
    %cst_43 = arith.constant 1.000000e+00 : f32
    %162 = vector.broadcast %cst_43 : f32 to vector<2x128xf32>
    %163 = arith.addf %162, %161 : vector<2x128xf32>
    %164 = arith.divf %162, %163 : vector<2x128xf32>
    %165 = vector.extract_strided_slice %154 {offsets = [0, 128], sizes = [2, 128], strides = [1, 1]} : vector<2x384xf32> to vector<2x128xf32>
    %166 = vector.extract_strided_slice %156 {offsets = [0, 128], sizes = [2, 128], strides = [1, 1]} : vector<2x384xf32> to vector<2x128xf32>
    %167 = arith.addf %165, %166 : vector<2x128xf32>
    %168 = arith.negf %167 : vector<2x128xf32>
    %169 = math.exp %168 : vector<2x128xf32>
    %cst_44 = arith.constant 1.000000e+00 : f32
    %170 = vector.broadcast %cst_44 : f32 to vector<2x128xf32>
    %171 = arith.addf %170, %169 : vector<2x128xf32>
    %172 = arith.divf %170, %171 : vector<2x128xf32>
    %173 = vector.extract_strided_slice %154 {offsets = [0, 256], sizes = [2, 128], strides = [1, 1]} : vector<2x384xf32> to vector<2x128xf32>
    %174 = vector.extract_strided_slice %156 {offsets = [0, 256], sizes = [2, 128], strides = [1, 1]} : vector<2x384xf32> to vector<2x128xf32>
    %175 = arith.addf %174, %24 : vector<2x128xf32>
    %176 = arith.mulf %164, %175 : vector<2x128xf32>
    %177 = arith.addf %173, %176 : vector<2x128xf32>
    %178 = math.tanh %177 : vector<2x128xf32>
    %cst_45 = arith.constant 1.000000e+00 : f32
    %179 = vector.broadcast %cst_45 : f32 to vector<2x128xf32>
    %180 = arith.subf %179, %172 : vector<2x128xf32>
    %181 = arith.mulf %180, %178 : vector<2x128xf32>
    %182 = arith.mulf %172, %121 : vector<2x128xf32>
    %183 = arith.addf %181, %182 : vector<2x128xf32>
    %184 = arith.truncf %183 : vector<2x128xf32> to vector<2x128xbf16>
    %cst_46 = arith.constant dense<0.000000e+00> : vector<2x384xf32>
    %185 = tpu.matmul %184, %17, %cst_46 {dimension_numbers = #tpu.dot_dimension_numbers<[1], [0], [0], [1], [0, 0, 1, 1], [], []>} : vector<2x128xbf16>, vector<128x384xbf16>, vector<2x384xf32> -> vector<2x384xf32>
    %186 = arith.addf %185, %21 : vector<2x384xf32>
    %187 = arith.truncf %153 : vector<2x128xf32> to vector<2x128xbf16>
    %cst_47 = arith.constant dense<0.000000e+00> : vector<2x384xf32>
    %188 = tpu.matmul %187, %18, %cst_47 {dimension_numbers = #tpu.dot_dimension_numbers<[1], [0], [0], [1], [0, 0, 1, 1], [], []>} : vector<2x128xbf16>, vector<128x384xbf16>, vector<2x384xf32> -> vector<2x384xf32>
    %189 = vector.extract_strided_slice %186 {offsets = [0, 0], sizes = [2, 128], strides = [1, 1]} : vector<2x384xf32> to vector<2x128xf32>
    %190 = vector.extract_strided_slice %188 {offsets = [0, 0], sizes = [2, 128], strides = [1, 1]} : vector<2x384xf32> to vector<2x128xf32>
    %191 = arith.addf %189, %190 : vector<2x128xf32>
    %192 = arith.negf %191 : vector<2x128xf32>
    %193 = math.exp %192 : vector<2x128xf32>
    %cst_48 = arith.constant 1.000000e+00 : f32
    %194 = vector.broadcast %cst_48 : f32 to vector<2x128xf32>
    %195 = arith.addf %194, %193 : vector<2x128xf32>
    %196 = arith.divf %194, %195 : vector<2x128xf32>
    %197 = vector.extract_strided_slice %186 {offsets = [0, 128], sizes = [2, 128], strides = [1, 1]} : vector<2x384xf32> to vector<2x128xf32>
    %198 = vector.extract_strided_slice %188 {offsets = [0, 128], sizes = [2, 128], strides = [1, 1]} : vector<2x384xf32> to vector<2x128xf32>
    %199 = arith.addf %197, %198 : vector<2x128xf32>
    %200 = arith.negf %199 : vector<2x128xf32>
    %201 = math.exp %200 : vector<2x128xf32>
    %cst_49 = arith.constant 1.000000e+00 : f32
    %202 = vector.broadcast %cst_49 : f32 to vector<2x128xf32>
    %203 = arith.addf %202, %201 : vector<2x128xf32>
    %204 = arith.divf %202, %203 : vector<2x128xf32>
    %205 = vector.extract_strided_slice %186 {offsets = [0, 256], sizes = [2, 128], strides = [1, 1]} : vector<2x384xf32> to vector<2x128xf32>
    %206 = vector.extract_strided_slice %188 {offsets = [0, 256], sizes = [2, 128], strides = [1, 1]} : vector<2x384xf32> to vector<2x128xf32>
    %207 = arith.addf %206, %27 : vector<2x128xf32>
    %208 = arith.mulf %196, %207 : vector<2x128xf32>
    %209 = arith.addf %205, %208 : vector<2x128xf32>
    %210 = math.tanh %209 : vector<2x128xf32>
    %cst_50 = arith.constant 1.000000e+00 : f32
    %211 = vector.broadcast %cst_50 : f32 to vector<2x128xf32>
    %212 = arith.subf %211, %204 : vector<2x128xf32>
    %213 = arith.mulf %212, %210 : vector<2x128xf32>
    %214 = arith.mulf %204, %153 : vector<2x128xf32>
    %215 = arith.addf %213, %214 : vector<2x128xf32>
    %216 = vector.extract_strided_slice %15 {offsets = [6, 0], sizes = [2, 384], strides = [1, 1]} : vector<16x384xf32> to vector<2x384xf32>
    %217 = arith.truncf %183 : vector<2x128xf32> to vector<2x128xbf16>
    %cst_51 = arith.constant dense<0.000000e+00> : vector<2x384xf32>
    %218 = tpu.matmul %217, %16, %cst_51 {dimension_numbers = #tpu.dot_dimension_numbers<[1], [0], [0], [1], [0, 0, 1, 1], [], []>} : vector<2x128xbf16>, vector<128x384xbf16>, vector<2x384xf32> -> vector<2x384xf32>
    %219 = vector.extract_strided_slice %216 {offsets = [0, 0], sizes = [2, 128], strides = [1, 1]} : vector<2x384xf32> to vector<2x128xf32>
    %220 = vector.extract_strided_slice %218 {offsets = [0, 0], sizes = [2, 128], strides = [1, 1]} : vector<2x384xf32> to vector<2x128xf32>
    %221 = arith.addf %219, %220 : vector<2x128xf32>
    %222 = arith.negf %221 : vector<2x128xf32>
    %223 = math.exp %222 : vector<2x128xf32>
    %cst_52 = arith.constant 1.000000e+00 : f32
    %224 = vector.broadcast %cst_52 : f32 to vector<2x128xf32>
    %225 = arith.addf %224, %223 : vector<2x128xf32>
    %226 = arith.divf %224, %225 : vector<2x128xf32>
    %227 = vector.extract_strided_slice %216 {offsets = [0, 128], sizes = [2, 128], strides = [1, 1]} : vector<2x384xf32> to vector<2x128xf32>
    %228 = vector.extract_strided_slice %218 {offsets = [0, 128], sizes = [2, 128], strides = [1, 1]} : vector<2x384xf32> to vector<2x128xf32>
    %229 = arith.addf %227, %228 : vector<2x128xf32>
    %230 = arith.negf %229 : vector<2x128xf32>
    %231 = math.exp %230 : vector<2x128xf32>
    %cst_53 = arith.constant 1.000000e+00 : f32
    %232 = vector.broadcast %cst_53 : f32 to vector<2x128xf32>
    %233 = arith.addf %232, %231 : vector<2x128xf32>
    %234 = arith.divf %232, %233 : vector<2x128xf32>
    %235 = vector.extract_strided_slice %216 {offsets = [0, 256], sizes = [2, 128], strides = [1, 1]} : vector<2x384xf32> to vector<2x128xf32>
    %236 = vector.extract_strided_slice %218 {offsets = [0, 256], sizes = [2, 128], strides = [1, 1]} : vector<2x384xf32> to vector<2x128xf32>
    %237 = arith.addf %236, %24 : vector<2x128xf32>
    %238 = arith.mulf %226, %237 : vector<2x128xf32>
    %239 = arith.addf %235, %238 : vector<2x128xf32>
    %240 = math.tanh %239 : vector<2x128xf32>
    %cst_54 = arith.constant 1.000000e+00 : f32
    %241 = vector.broadcast %cst_54 : f32 to vector<2x128xf32>
    %242 = arith.subf %241, %234 : vector<2x128xf32>
    %243 = arith.mulf %242, %240 : vector<2x128xf32>
    %244 = arith.mulf %234, %183 : vector<2x128xf32>
    %245 = arith.addf %243, %244 : vector<2x128xf32>
    %246 = arith.truncf %245 : vector<2x128xf32> to vector<2x128xbf16>
    %cst_55 = arith.constant dense<0.000000e+00> : vector<2x384xf32>
    %247 = tpu.matmul %246, %17, %cst_55 {dimension_numbers = #tpu.dot_dimension_numbers<[1], [0], [0], [1], [0, 0, 1, 1], [], []>} : vector<2x128xbf16>, vector<128x384xbf16>, vector<2x384xf32> -> vector<2x384xf32>
    %248 = arith.addf %247, %21 : vector<2x384xf32>
    %249 = arith.truncf %215 : vector<2x128xf32> to vector<2x128xbf16>
    %cst_56 = arith.constant dense<0.000000e+00> : vector<2x384xf32>
    %250 = tpu.matmul %249, %18, %cst_56 {dimension_numbers = #tpu.dot_dimension_numbers<[1], [0], [0], [1], [0, 0, 1, 1], [], []>} : vector<2x128xbf16>, vector<128x384xbf16>, vector<2x384xf32> -> vector<2x384xf32>
    %251 = vector.extract_strided_slice %248 {offsets = [0, 0], sizes = [2, 128], strides = [1, 1]} : vector<2x384xf32> to vector<2x128xf32>
    %252 = vector.extract_strided_slice %250 {offsets = [0, 0], sizes = [2, 128], strides = [1, 1]} : vector<2x384xf32> to vector<2x128xf32>
    %253 = arith.addf %251, %252 : vector<2x128xf32>
    %254 = arith.negf %253 : vector<2x128xf32>
    %255 = math.exp %254 : vector<2x128xf32>
    %cst_57 = arith.constant 1.000000e+00 : f32
    %256 = vector.broadcast %cst_57 : f32 to vector<2x128xf32>
    %257 = arith.addf %256, %255 : vector<2x128xf32>
    %258 = arith.divf %256, %257 : vector<2x128xf32>
    %259 = vector.extract_strided_slice %248 {offsets = [0, 128], sizes = [2, 128], strides = [1, 1]} : vector<2x384xf32> to vector<2x128xf32>
    %260 = vector.extract_strided_slice %250 {offsets = [0, 128], sizes = [2, 128], strides = [1, 1]} : vector<2x384xf32> to vector<2x128xf32>
    %261 = arith.addf %259, %260 : vector<2x128xf32>
    %262 = arith.negf %261 : vector<2x128xf32>
    %263 = math.exp %262 : vector<2x128xf32>
    %cst_58 = arith.constant 1.000000e+00 : f32
    %264 = vector.broadcast %cst_58 : f32 to vector<2x128xf32>
    %265 = arith.addf %264, %263 : vector<2x128xf32>
    %266 = arith.divf %264, %265 : vector<2x128xf32>
    %267 = vector.extract_strided_slice %248 {offsets = [0, 256], sizes = [2, 128], strides = [1, 1]} : vector<2x384xf32> to vector<2x128xf32>
    %268 = vector.extract_strided_slice %250 {offsets = [0, 256], sizes = [2, 128], strides = [1, 1]} : vector<2x384xf32> to vector<2x128xf32>
    %269 = arith.addf %268, %27 : vector<2x128xf32>
    %270 = arith.mulf %258, %269 : vector<2x128xf32>
    %271 = arith.addf %267, %270 : vector<2x128xf32>
    %272 = math.tanh %271 : vector<2x128xf32>
    %cst_59 = arith.constant 1.000000e+00 : f32
    %273 = vector.broadcast %cst_59 : f32 to vector<2x128xf32>
    %274 = arith.subf %273, %266 : vector<2x128xf32>
    %275 = arith.mulf %274, %272 : vector<2x128xf32>
    %276 = arith.mulf %266, %215 : vector<2x128xf32>
    %277 = arith.addf %275, %276 : vector<2x128xf32>
    %278 = vector.extract_strided_slice %15 {offsets = [8, 0], sizes = [2, 384], strides = [1, 1]} : vector<16x384xf32> to vector<2x384xf32>
    %279 = arith.truncf %245 : vector<2x128xf32> to vector<2x128xbf16>
    %cst_60 = arith.constant dense<0.000000e+00> : vector<2x384xf32>
    %280 = tpu.matmul %279, %16, %cst_60 {dimension_numbers = #tpu.dot_dimension_numbers<[1], [0], [0], [1], [0, 0, 1, 1], [], []>} : vector<2x128xbf16>, vector<128x384xbf16>, vector<2x384xf32> -> vector<2x384xf32>
    %281 = vector.extract_strided_slice %278 {offsets = [0, 0], sizes = [2, 128], strides = [1, 1]} : vector<2x384xf32> to vector<2x128xf32>
    %282 = vector.extract_strided_slice %280 {offsets = [0, 0], sizes = [2, 128], strides = [1, 1]} : vector<2x384xf32> to vector<2x128xf32>
    %283 = arith.addf %281, %282 : vector<2x128xf32>
    %284 = arith.negf %283 : vector<2x128xf32>
    %285 = math.exp %284 : vector<2x128xf32>
    %cst_61 = arith.constant 1.000000e+00 : f32
    %286 = vector.broadcast %cst_61 : f32 to vector<2x128xf32>
    %287 = arith.addf %286, %285 : vector<2x128xf32>
    %288 = arith.divf %286, %287 : vector<2x128xf32>
    %289 = vector.extract_strided_slice %278 {offsets = [0, 128], sizes = [2, 128], strides = [1, 1]} : vector<2x384xf32> to vector<2x128xf32>
    %290 = vector.extract_strided_slice %280 {offsets = [0, 128], sizes = [2, 128], strides = [1, 1]} : vector<2x384xf32> to vector<2x128xf32>
    %291 = arith.addf %289, %290 : vector<2x128xf32>
    %292 = arith.negf %291 : vector<2x128xf32>
    %293 = math.exp %292 : vector<2x128xf32>
    %cst_62 = arith.constant 1.000000e+00 : f32
    %294 = vector.broadcast %cst_62 : f32 to vector<2x128xf32>
    %295 = arith.addf %294, %293 : vector<2x128xf32>
    %296 = arith.divf %294, %295 : vector<2x128xf32>
    %297 = vector.extract_strided_slice %278 {offsets = [0, 256], sizes = [2, 128], strides = [1, 1]} : vector<2x384xf32> to vector<2x128xf32>
    %298 = vector.extract_strided_slice %280 {offsets = [0, 256], sizes = [2, 128], strides = [1, 1]} : vector<2x384xf32> to vector<2x128xf32>
    %299 = arith.addf %298, %24 : vector<2x128xf32>
    %300 = arith.mulf %288, %299 : vector<2x128xf32>
    %301 = arith.addf %297, %300 : vector<2x128xf32>
    %302 = math.tanh %301 : vector<2x128xf32>
    %cst_63 = arith.constant 1.000000e+00 : f32
    %303 = vector.broadcast %cst_63 : f32 to vector<2x128xf32>
    %304 = arith.subf %303, %296 : vector<2x128xf32>
    %305 = arith.mulf %304, %302 : vector<2x128xf32>
    %306 = arith.mulf %296, %245 : vector<2x128xf32>
    %307 = arith.addf %305, %306 : vector<2x128xf32>
    %308 = arith.truncf %307 : vector<2x128xf32> to vector<2x128xbf16>
    %cst_64 = arith.constant dense<0.000000e+00> : vector<2x384xf32>
    %309 = tpu.matmul %308, %17, %cst_64 {dimension_numbers = #tpu.dot_dimension_numbers<[1], [0], [0], [1], [0, 0, 1, 1], [], []>} : vector<2x128xbf16>, vector<128x384xbf16>, vector<2x384xf32> -> vector<2x384xf32>
    %310 = arith.addf %309, %21 : vector<2x384xf32>
    %311 = arith.truncf %277 : vector<2x128xf32> to vector<2x128xbf16>
    %cst_65 = arith.constant dense<0.000000e+00> : vector<2x384xf32>
    %312 = tpu.matmul %311, %18, %cst_65 {dimension_numbers = #tpu.dot_dimension_numbers<[1], [0], [0], [1], [0, 0, 1, 1], [], []>} : vector<2x128xbf16>, vector<128x384xbf16>, vector<2x384xf32> -> vector<2x384xf32>
    %313 = vector.extract_strided_slice %310 {offsets = [0, 0], sizes = [2, 128], strides = [1, 1]} : vector<2x384xf32> to vector<2x128xf32>
    %314 = vector.extract_strided_slice %312 {offsets = [0, 0], sizes = [2, 128], strides = [1, 1]} : vector<2x384xf32> to vector<2x128xf32>
    %315 = arith.addf %313, %314 : vector<2x128xf32>
    %316 = arith.negf %315 : vector<2x128xf32>
    %317 = math.exp %316 : vector<2x128xf32>
    %cst_66 = arith.constant 1.000000e+00 : f32
    %318 = vector.broadcast %cst_66 : f32 to vector<2x128xf32>
    %319 = arith.addf %318, %317 : vector<2x128xf32>
    %320 = arith.divf %318, %319 : vector<2x128xf32>
    %321 = vector.extract_strided_slice %310 {offsets = [0, 128], sizes = [2, 128], strides = [1, 1]} : vector<2x384xf32> to vector<2x128xf32>
    %322 = vector.extract_strided_slice %312 {offsets = [0, 128], sizes = [2, 128], strides = [1, 1]} : vector<2x384xf32> to vector<2x128xf32>
    %323 = arith.addf %321, %322 : vector<2x128xf32>
    %324 = arith.negf %323 : vector<2x128xf32>
    %325 = math.exp %324 : vector<2x128xf32>
    %cst_67 = arith.constant 1.000000e+00 : f32
    %326 = vector.broadcast %cst_67 : f32 to vector<2x128xf32>
    %327 = arith.addf %326, %325 : vector<2x128xf32>
    %328 = arith.divf %326, %327 : vector<2x128xf32>
    %329 = vector.extract_strided_slice %310 {offsets = [0, 256], sizes = [2, 128], strides = [1, 1]} : vector<2x384xf32> to vector<2x128xf32>
    %330 = vector.extract_strided_slice %312 {offsets = [0, 256], sizes = [2, 128], strides = [1, 1]} : vector<2x384xf32> to vector<2x128xf32>
    %331 = arith.addf %330, %27 : vector<2x128xf32>
    %332 = arith.mulf %320, %331 : vector<2x128xf32>
    %333 = arith.addf %329, %332 : vector<2x128xf32>
    %334 = math.tanh %333 : vector<2x128xf32>
    %cst_68 = arith.constant 1.000000e+00 : f32
    %335 = vector.broadcast %cst_68 : f32 to vector<2x128xf32>
    %336 = arith.subf %335, %328 : vector<2x128xf32>
    %337 = arith.mulf %336, %334 : vector<2x128xf32>
    %338 = arith.mulf %328, %277 : vector<2x128xf32>
    %339 = arith.addf %337, %338 : vector<2x128xf32>
    %340 = vector.extract_strided_slice %15 {offsets = [10, 0], sizes = [2, 384], strides = [1, 1]} : vector<16x384xf32> to vector<2x384xf32>
    %341 = arith.truncf %307 : vector<2x128xf32> to vector<2x128xbf16>
    %cst_69 = arith.constant dense<0.000000e+00> : vector<2x384xf32>
    %342 = tpu.matmul %341, %16, %cst_69 {dimension_numbers = #tpu.dot_dimension_numbers<[1], [0], [0], [1], [0, 0, 1, 1], [], []>} : vector<2x128xbf16>, vector<128x384xbf16>, vector<2x384xf32> -> vector<2x384xf32>
    %343 = vector.extract_strided_slice %340 {offsets = [0, 0], sizes = [2, 128], strides = [1, 1]} : vector<2x384xf32> to vector<2x128xf32>
    %344 = vector.extract_strided_slice %342 {offsets = [0, 0], sizes = [2, 128], strides = [1, 1]} : vector<2x384xf32> to vector<2x128xf32>
    %345 = arith.addf %343, %344 : vector<2x128xf32>
    %346 = arith.negf %345 : vector<2x128xf32>
    %347 = math.exp %346 : vector<2x128xf32>
    %cst_70 = arith.constant 1.000000e+00 : f32
    %348 = vector.broadcast %cst_70 : f32 to vector<2x128xf32>
    %349 = arith.addf %348, %347 : vector<2x128xf32>
    %350 = arith.divf %348, %349 : vector<2x128xf32>
    %351 = vector.extract_strided_slice %340 {offsets = [0, 128], sizes = [2, 128], strides = [1, 1]} : vector<2x384xf32> to vector<2x128xf32>
    %352 = vector.extract_strided_slice %342 {offsets = [0, 128], sizes = [2, 128], strides = [1, 1]} : vector<2x384xf32> to vector<2x128xf32>
    %353 = arith.addf %351, %352 : vector<2x128xf32>
    %354 = arith.negf %353 : vector<2x128xf32>
    %355 = math.exp %354 : vector<2x128xf32>
    %cst_71 = arith.constant 1.000000e+00 : f32
    %356 = vector.broadcast %cst_71 : f32 to vector<2x128xf32>
    %357 = arith.addf %356, %355 : vector<2x128xf32>
    %358 = arith.divf %356, %357 : vector<2x128xf32>
    %359 = vector.extract_strided_slice %340 {offsets = [0, 256], sizes = [2, 128], strides = [1, 1]} : vector<2x384xf32> to vector<2x128xf32>
    %360 = vector.extract_strided_slice %342 {offsets = [0, 256], sizes = [2, 128], strides = [1, 1]} : vector<2x384xf32> to vector<2x128xf32>
    %361 = arith.addf %360, %24 : vector<2x128xf32>
    %362 = arith.mulf %350, %361 : vector<2x128xf32>
    %363 = arith.addf %359, %362 : vector<2x128xf32>
    %364 = math.tanh %363 : vector<2x128xf32>
    %cst_72 = arith.constant 1.000000e+00 : f32
    %365 = vector.broadcast %cst_72 : f32 to vector<2x128xf32>
    %366 = arith.subf %365, %358 : vector<2x128xf32>
    %367 = arith.mulf %366, %364 : vector<2x128xf32>
    %368 = arith.mulf %358, %307 : vector<2x128xf32>
    %369 = arith.addf %367, %368 : vector<2x128xf32>
    %370 = arith.truncf %369 : vector<2x128xf32> to vector<2x128xbf16>
    %cst_73 = arith.constant dense<0.000000e+00> : vector<2x384xf32>
    %371 = tpu.matmul %370, %17, %cst_73 {dimension_numbers = #tpu.dot_dimension_numbers<[1], [0], [0], [1], [0, 0, 1, 1], [], []>} : vector<2x128xbf16>, vector<128x384xbf16>, vector<2x384xf32> -> vector<2x384xf32>
    %372 = arith.addf %371, %21 : vector<2x384xf32>
    %373 = arith.truncf %339 : vector<2x128xf32> to vector<2x128xbf16>
    %cst_74 = arith.constant dense<0.000000e+00> : vector<2x384xf32>
    %374 = tpu.matmul %373, %18, %cst_74 {dimension_numbers = #tpu.dot_dimension_numbers<[1], [0], [0], [1], [0, 0, 1, 1], [], []>} : vector<2x128xbf16>, vector<128x384xbf16>, vector<2x384xf32> -> vector<2x384xf32>
    %375 = vector.extract_strided_slice %372 {offsets = [0, 0], sizes = [2, 128], strides = [1, 1]} : vector<2x384xf32> to vector<2x128xf32>
    %376 = vector.extract_strided_slice %374 {offsets = [0, 0], sizes = [2, 128], strides = [1, 1]} : vector<2x384xf32> to vector<2x128xf32>
    %377 = arith.addf %375, %376 : vector<2x128xf32>
    %378 = arith.negf %377 : vector<2x128xf32>
    %379 = math.exp %378 : vector<2x128xf32>
    %cst_75 = arith.constant 1.000000e+00 : f32
    %380 = vector.broadcast %cst_75 : f32 to vector<2x128xf32>
    %381 = arith.addf %380, %379 : vector<2x128xf32>
    %382 = arith.divf %380, %381 : vector<2x128xf32>
    %383 = vector.extract_strided_slice %372 {offsets = [0, 128], sizes = [2, 128], strides = [1, 1]} : vector<2x384xf32> to vector<2x128xf32>
    %384 = vector.extract_strided_slice %374 {offsets = [0, 128], sizes = [2, 128], strides = [1, 1]} : vector<2x384xf32> to vector<2x128xf32>
    %385 = arith.addf %383, %384 : vector<2x128xf32>
    %386 = arith.negf %385 : vector<2x128xf32>
    %387 = math.exp %386 : vector<2x128xf32>
    %cst_76 = arith.constant 1.000000e+00 : f32
    %388 = vector.broadcast %cst_76 : f32 to vector<2x128xf32>
    %389 = arith.addf %388, %387 : vector<2x128xf32>
    %390 = arith.divf %388, %389 : vector<2x128xf32>
    %391 = vector.extract_strided_slice %372 {offsets = [0, 256], sizes = [2, 128], strides = [1, 1]} : vector<2x384xf32> to vector<2x128xf32>
    %392 = vector.extract_strided_slice %374 {offsets = [0, 256], sizes = [2, 128], strides = [1, 1]} : vector<2x384xf32> to vector<2x128xf32>
    %393 = arith.addf %392, %27 : vector<2x128xf32>
    %394 = arith.mulf %382, %393 : vector<2x128xf32>
    %395 = arith.addf %391, %394 : vector<2x128xf32>
    %396 = math.tanh %395 : vector<2x128xf32>
    %cst_77 = arith.constant 1.000000e+00 : f32
    %397 = vector.broadcast %cst_77 : f32 to vector<2x128xf32>
    %398 = arith.subf %397, %390 : vector<2x128xf32>
    %399 = arith.mulf %398, %396 : vector<2x128xf32>
    %400 = arith.mulf %390, %339 : vector<2x128xf32>
    %401 = arith.addf %399, %400 : vector<2x128xf32>
    %402 = vector.extract_strided_slice %15 {offsets = [12, 0], sizes = [2, 384], strides = [1, 1]} : vector<16x384xf32> to vector<2x384xf32>
    %403 = arith.truncf %369 : vector<2x128xf32> to vector<2x128xbf16>
    %cst_78 = arith.constant dense<0.000000e+00> : vector<2x384xf32>
    %404 = tpu.matmul %403, %16, %cst_78 {dimension_numbers = #tpu.dot_dimension_numbers<[1], [0], [0], [1], [0, 0, 1, 1], [], []>} : vector<2x128xbf16>, vector<128x384xbf16>, vector<2x384xf32> -> vector<2x384xf32>
    %405 = vector.extract_strided_slice %402 {offsets = [0, 0], sizes = [2, 128], strides = [1, 1]} : vector<2x384xf32> to vector<2x128xf32>
    %406 = vector.extract_strided_slice %404 {offsets = [0, 0], sizes = [2, 128], strides = [1, 1]} : vector<2x384xf32> to vector<2x128xf32>
    %407 = arith.addf %405, %406 : vector<2x128xf32>
    %408 = arith.negf %407 : vector<2x128xf32>
    %409 = math.exp %408 : vector<2x128xf32>
    %cst_79 = arith.constant 1.000000e+00 : f32
    %410 = vector.broadcast %cst_79 : f32 to vector<2x128xf32>
    %411 = arith.addf %410, %409 : vector<2x128xf32>
    %412 = arith.divf %410, %411 : vector<2x128xf32>
    %413 = vector.extract_strided_slice %402 {offsets = [0, 128], sizes = [2, 128], strides = [1, 1]} : vector<2x384xf32> to vector<2x128xf32>
    %414 = vector.extract_strided_slice %404 {offsets = [0, 128], sizes = [2, 128], strides = [1, 1]} : vector<2x384xf32> to vector<2x128xf32>
    %415 = arith.addf %413, %414 : vector<2x128xf32>
    %416 = arith.negf %415 : vector<2x128xf32>
    %417 = math.exp %416 : vector<2x128xf32>
    %cst_80 = arith.constant 1.000000e+00 : f32
    %418 = vector.broadcast %cst_80 : f32 to vector<2x128xf32>
    %419 = arith.addf %418, %417 : vector<2x128xf32>
    %420 = arith.divf %418, %419 : vector<2x128xf32>
    %421 = vector.extract_strided_slice %402 {offsets = [0, 256], sizes = [2, 128], strides = [1, 1]} : vector<2x384xf32> to vector<2x128xf32>
    %422 = vector.extract_strided_slice %404 {offsets = [0, 256], sizes = [2, 128], strides = [1, 1]} : vector<2x384xf32> to vector<2x128xf32>
    %423 = arith.addf %422, %24 : vector<2x128xf32>
    %424 = arith.mulf %412, %423 : vector<2x128xf32>
    %425 = arith.addf %421, %424 : vector<2x128xf32>
    %426 = math.tanh %425 : vector<2x128xf32>
    %cst_81 = arith.constant 1.000000e+00 : f32
    %427 = vector.broadcast %cst_81 : f32 to vector<2x128xf32>
    %428 = arith.subf %427, %420 : vector<2x128xf32>
    %429 = arith.mulf %428, %426 : vector<2x128xf32>
    %430 = arith.mulf %420, %369 : vector<2x128xf32>
    %431 = arith.addf %429, %430 : vector<2x128xf32>
    %432 = arith.truncf %431 : vector<2x128xf32> to vector<2x128xbf16>
    %cst_82 = arith.constant dense<0.000000e+00> : vector<2x384xf32>
    %433 = tpu.matmul %432, %17, %cst_82 {dimension_numbers = #tpu.dot_dimension_numbers<[1], [0], [0], [1], [0, 0, 1, 1], [], []>} : vector<2x128xbf16>, vector<128x384xbf16>, vector<2x384xf32> -> vector<2x384xf32>
    %434 = arith.addf %433, %21 : vector<2x384xf32>
    %435 = arith.truncf %401 : vector<2x128xf32> to vector<2x128xbf16>
    %cst_83 = arith.constant dense<0.000000e+00> : vector<2x384xf32>
    %436 = tpu.matmul %435, %18, %cst_83 {dimension_numbers = #tpu.dot_dimension_numbers<[1], [0], [0], [1], [0, 0, 1, 1], [], []>} : vector<2x128xbf16>, vector<128x384xbf16>, vector<2x384xf32> -> vector<2x384xf32>
    %437 = vector.extract_strided_slice %434 {offsets = [0, 0], sizes = [2, 128], strides = [1, 1]} : vector<2x384xf32> to vector<2x128xf32>
    %438 = vector.extract_strided_slice %436 {offsets = [0, 0], sizes = [2, 128], strides = [1, 1]} : vector<2x384xf32> to vector<2x128xf32>
    %439 = arith.addf %437, %438 : vector<2x128xf32>
    %440 = arith.negf %439 : vector<2x128xf32>
    %441 = math.exp %440 : vector<2x128xf32>
    %cst_84 = arith.constant 1.000000e+00 : f32
    %442 = vector.broadcast %cst_84 : f32 to vector<2x128xf32>
    %443 = arith.addf %442, %441 : vector<2x128xf32>
    %444 = arith.divf %442, %443 : vector<2x128xf32>
    %445 = vector.extract_strided_slice %434 {offsets = [0, 128], sizes = [2, 128], strides = [1, 1]} : vector<2x384xf32> to vector<2x128xf32>
    %446 = vector.extract_strided_slice %436 {offsets = [0, 128], sizes = [2, 128], strides = [1, 1]} : vector<2x384xf32> to vector<2x128xf32>
    %447 = arith.addf %445, %446 : vector<2x128xf32>
    %448 = arith.negf %447 : vector<2x128xf32>
    %449 = math.exp %448 : vector<2x128xf32>
    %cst_85 = arith.constant 1.000000e+00 : f32
    %450 = vector.broadcast %cst_85 : f32 to vector<2x128xf32>
    %451 = arith.addf %450, %449 : vector<2x128xf32>
    %452 = arith.divf %450, %451 : vector<2x128xf32>
    %453 = vector.extract_strided_slice %434 {offsets = [0, 256], sizes = [2, 128], strides = [1, 1]} : vector<2x384xf32> to vector<2x128xf32>
    %454 = vector.extract_strided_slice %436 {offsets = [0, 256], sizes = [2, 128], strides = [1, 1]} : vector<2x384xf32> to vector<2x128xf32>
    %455 = arith.addf %454, %27 : vector<2x128xf32>
    %456 = arith.mulf %444, %455 : vector<2x128xf32>
    %457 = arith.addf %453, %456 : vector<2x128xf32>
    %458 = math.tanh %457 : vector<2x128xf32>
    %cst_86 = arith.constant 1.000000e+00 : f32
    %459 = vector.broadcast %cst_86 : f32 to vector<2x128xf32>
    %460 = arith.subf %459, %452 : vector<2x128xf32>
    %461 = arith.mulf %460, %458 : vector<2x128xf32>
    %462 = arith.mulf %452, %401 : vector<2x128xf32>
    %463 = arith.addf %461, %462 : vector<2x128xf32>
    %464 = vector.extract_strided_slice %15 {offsets = [14, 0], sizes = [2, 384], strides = [1, 1]} : vector<16x384xf32> to vector<2x384xf32>
    %465 = arith.truncf %431 : vector<2x128xf32> to vector<2x128xbf16>
    %cst_87 = arith.constant dense<0.000000e+00> : vector<2x384xf32>
    %466 = tpu.matmul %465, %16, %cst_87 {dimension_numbers = #tpu.dot_dimension_numbers<[1], [0], [0], [1], [0, 0, 1, 1], [], []>} : vector<2x128xbf16>, vector<128x384xbf16>, vector<2x384xf32> -> vector<2x384xf32>
    %467 = vector.extract_strided_slice %464 {offsets = [0, 0], sizes = [2, 128], strides = [1, 1]} : vector<2x384xf32> to vector<2x128xf32>
    %468 = vector.extract_strided_slice %466 {offsets = [0, 0], sizes = [2, 128], strides = [1, 1]} : vector<2x384xf32> to vector<2x128xf32>
    %469 = arith.addf %467, %468 : vector<2x128xf32>
    %470 = arith.negf %469 : vector<2x128xf32>
    %471 = math.exp %470 : vector<2x128xf32>
    %cst_88 = arith.constant 1.000000e+00 : f32
    %472 = vector.broadcast %cst_88 : f32 to vector<2x128xf32>
    %473 = arith.addf %472, %471 : vector<2x128xf32>
    %474 = arith.divf %472, %473 : vector<2x128xf32>
    %475 = vector.extract_strided_slice %464 {offsets = [0, 128], sizes = [2, 128], strides = [1, 1]} : vector<2x384xf32> to vector<2x128xf32>
    %476 = vector.extract_strided_slice %466 {offsets = [0, 128], sizes = [2, 128], strides = [1, 1]} : vector<2x384xf32> to vector<2x128xf32>
    %477 = arith.addf %475, %476 : vector<2x128xf32>
    %478 = arith.negf %477 : vector<2x128xf32>
    %479 = math.exp %478 : vector<2x128xf32>
    %cst_89 = arith.constant 1.000000e+00 : f32
    %480 = vector.broadcast %cst_89 : f32 to vector<2x128xf32>
    %481 = arith.addf %480, %479 : vector<2x128xf32>
    %482 = arith.divf %480, %481 : vector<2x128xf32>
    %483 = vector.extract_strided_slice %464 {offsets = [0, 256], sizes = [2, 128], strides = [1, 1]} : vector<2x384xf32> to vector<2x128xf32>
    %484 = vector.extract_strided_slice %466 {offsets = [0, 256], sizes = [2, 128], strides = [1, 1]} : vector<2x384xf32> to vector<2x128xf32>
    %485 = arith.addf %484, %24 : vector<2x128xf32>
    %486 = arith.mulf %474, %485 : vector<2x128xf32>
    %487 = arith.addf %483, %486 : vector<2x128xf32>
    %488 = math.tanh %487 : vector<2x128xf32>
    %cst_90 = arith.constant 1.000000e+00 : f32
    %489 = vector.broadcast %cst_90 : f32 to vector<2x128xf32>
    %490 = arith.subf %489, %482 : vector<2x128xf32>
    %491 = arith.mulf %490, %488 : vector<2x128xf32>
    %492 = arith.mulf %482, %431 : vector<2x128xf32>
    %493 = arith.addf %491, %492 : vector<2x128xf32>
    %494 = arith.truncf %493 : vector<2x128xf32> to vector<2x128xbf16>
    %cst_91 = arith.constant dense<0.000000e+00> : vector<2x384xf32>
    %495 = tpu.matmul %494, %17, %cst_91 {dimension_numbers = #tpu.dot_dimension_numbers<[1], [0], [0], [1], [0, 0, 1, 1], [], []>} : vector<2x128xbf16>, vector<128x384xbf16>, vector<2x384xf32> -> vector<2x384xf32>
    %496 = arith.addf %495, %21 : vector<2x384xf32>
    %497 = arith.truncf %463 : vector<2x128xf32> to vector<2x128xbf16>
    %cst_92 = arith.constant dense<0.000000e+00> : vector<2x384xf32>
    %498 = tpu.matmul %497, %18, %cst_92 {dimension_numbers = #tpu.dot_dimension_numbers<[1], [0], [0], [1], [0, 0, 1, 1], [], []>} : vector<2x128xbf16>, vector<128x384xbf16>, vector<2x384xf32> -> vector<2x384xf32>
    %499 = vector.extract_strided_slice %496 {offsets = [0, 0], sizes = [2, 128], strides = [1, 1]} : vector<2x384xf32> to vector<2x128xf32>
    %500 = vector.extract_strided_slice %498 {offsets = [0, 0], sizes = [2, 128], strides = [1, 1]} : vector<2x384xf32> to vector<2x128xf32>
    %501 = arith.addf %499, %500 : vector<2x128xf32>
    %502 = arith.negf %501 : vector<2x128xf32>
    %503 = math.exp %502 : vector<2x128xf32>
    %cst_93 = arith.constant 1.000000e+00 : f32
    %504 = vector.broadcast %cst_93 : f32 to vector<2x128xf32>
    %505 = arith.addf %504, %503 : vector<2x128xf32>
    %506 = arith.divf %504, %505 : vector<2x128xf32>
    %507 = vector.extract_strided_slice %496 {offsets = [0, 128], sizes = [2, 128], strides = [1, 1]} : vector<2x384xf32> to vector<2x128xf32>
    %508 = vector.extract_strided_slice %498 {offsets = [0, 128], sizes = [2, 128], strides = [1, 1]} : vector<2x384xf32> to vector<2x128xf32>
    %509 = arith.addf %507, %508 : vector<2x128xf32>
    %510 = arith.negf %509 : vector<2x128xf32>
    %511 = math.exp %510 : vector<2x128xf32>
    %cst_94 = arith.constant 1.000000e+00 : f32
    %512 = vector.broadcast %cst_94 : f32 to vector<2x128xf32>
    %513 = arith.addf %512, %511 : vector<2x128xf32>
    %514 = arith.divf %512, %513 : vector<2x128xf32>
    %515 = vector.extract_strided_slice %496 {offsets = [0, 256], sizes = [2, 128], strides = [1, 1]} : vector<2x384xf32> to vector<2x128xf32>
    %516 = vector.extract_strided_slice %498 {offsets = [0, 256], sizes = [2, 128], strides = [1, 1]} : vector<2x384xf32> to vector<2x128xf32>
    %517 = arith.addf %516, %27 : vector<2x128xf32>
    %518 = arith.mulf %506, %517 : vector<2x128xf32>
    %519 = arith.addf %515, %518 : vector<2x128xf32>
    %520 = math.tanh %519 : vector<2x128xf32>
    %cst_95 = arith.constant 1.000000e+00 : f32
    %521 = vector.broadcast %cst_95 : f32 to vector<2x128xf32>
    %522 = arith.subf %521, %514 : vector<2x128xf32>
    %523 = arith.mulf %522, %520 : vector<2x128xf32>
    %524 = arith.mulf %514, %463 : vector<2x128xf32>
    %525 = arith.addf %523, %524 : vector<2x128xf32>
    %526 = vector.extract_strided_slice %493 {offsets = [0, 0], sizes = [2, 32], strides = [1, 1]} : vector<2x128xf32> to vector<2x32xf32>
    %c0_96 = arith.constant 0 : index
    %c0_97 = arith.constant 0 : index
    %c0_98 = arith.constant 0 : index
    %527 = vector.load %arg10[%c0_96, %c0_97, %c0_98] : memref<2x2x32xf32, #tpu.memory_space<vmem>>, vector<1x2x32xf32>
    %528 = vector.shape_cast %527 : vector<1x2x32xf32> to vector<2x32xf32>
    %529 = vector.shape_cast %526 : vector<2x32xf32> to vector<1x2x32xf32>
    tpu.vector_store %arg10[%c0_96, %c0_97, %c0_98], %529 {strides = array<i32>} : memref<2x2x32xf32, #tpu.memory_space<vmem>>, vector<1x2x32xf32>,
    %530 = vector.extract_strided_slice %525 {offsets = [0, 0], sizes = [2, 32], strides = [1, 1]} : vector<2x128xf32> to vector<2x32xf32>
    %c1 = arith.constant 1 : index
    %c0_99 = arith.constant 0 : index
    %c0_100 = arith.constant 0 : index
    %531 = vector.load %arg10[%c1, %c0_99, %c0_100] : memref<2x2x32xf32, #tpu.memory_space<vmem>>, vector<1x2x32xf32>
    %532 = vector.shape_cast %531 : vector<1x2x32xf32> to vector<2x32xf32>
    %533 = vector.shape_cast %530 : vector<2x32xf32> to vector<1x2x32xf32>
    tpu.vector_store %arg10[%c1, %c0_99, %c0_100], %533 {strides = array<i32>} : memref<2x2x32xf32, #tpu.memory_space<vmem>>, vector<1x2x32xf32>,
    return
  }
}

</mosaic_0001>

<llo_original>
// kernel: encoder_forward.1
$region0: #{encoder_forward.1}
  #allocation0 [shape = 'u32[]', space=smem, size = 0x4, offset = 0x4, fixed_abs, tag = 'smem constant byte address 0x4 - core index']
  #allocation1 [shape = 'u32[144,128]{1,0:T(1,128)}', space=vmem, size = 0x12000, scoped, tag = 'internal scratch']
  %s0 = inlined_call_operand.vmem [shape: s32[16,1], index: 0, kind: input, shape index: {}]
  %s1 = inlined_call_operand.vmem [shape: bf16[50,32], index: 1, kind: input, shape index: {}]
  %s2 = inlined_call_operand.vmem [shape: bf16[32,384], index: 2, kind: input, shape index: {}]
  %s3 = inlined_call_operand.hbm [shape: bf16[128,384], index: 3, kind: input, shape index: {}]
  %s4 = inlined_call_operand.vmem [shape: f32[1,384], index: 4, kind: input, shape index: {}]
  %s5 = inlined_call_operand.vmem [shape: f32[1,128], index: 5, kind: input, shape index: {}]
  %s6 = inlined_call_operand.hbm [shape: bf16[128,384], index: 6, kind: input, shape index: {}]
  %s7 = inlined_call_operand.hbm [shape: bf16[128,384], index: 7, kind: input, shape index: {}]
  %s8 = inlined_call_operand.vmem [shape: f32[1,384], index: 8, kind: input, shape index: {}]
  %s9 = inlined_call_operand.vmem [shape: f32[1,128], index: 9, kind: input, shape index: {}]
  %s10 = inlined_call_operand.hbm [shape: f32[2,2,32], index: 10, kind: output, shape index: {}]
  %s11 = sld [smem:[#allocation0]]
  $region62: #{encoder_forward.1} parent=0
    _
  %s13 = ssub.s32 1, %s11
  %s14 = scalar_select 0, %s13, %s11
  $region1: #{encoder_forward.1} parent=0
    #allocation2 [shape = 'u8[98304]{0}', space=vmem, size = 0x18000, scoped, tag = 'input window, operand 3, single buffered']
    #allocation3 [shape = 's32[1]{0}', space=sflag, size = 0x4, scoped, tag = 'scoped memory for encoder_forward.1']
    #allocation4 [shape = 's32[1]{0}', space=sflag, size = 0x4, scoped, tag = 'scoped memory for encoder_forward.1']
    #allocation5 [shape = 'u8[98304]{0}', space=vmem, size = 0x18000, scoped, tag = 'input window, operand 6, single buffered']
    #allocation6 [shape = 's32[1]{0}', space=sflag, size = 0x4, scoped, tag = 'scoped memory for encoder_forward.1']
    #allocation7 [shape = 'u8[98304]{0}', space=vmem, size = 0x18000, scoped, tag = 'input window, operand 7, single buffered']
    #allocation8 [shape = 'u8[2048]{0}', space=vmem, size = 0x800, scoped, tag = 'output window, operand 0, single buffered']
    %15 = vsyncpa [#allocation3], 0
    %16 = vsyncpa [#allocation6], 0
    %17 = vsyncpa [#allocation4], 0
    // Predicated region
    $region2: #{encoder_forward.1} parent=1 // pred_check
      _
    $region3: #{encoder_forward.1} parent=1 // pred_check_branch
      %19 = sbr.rel (0) target = $region5
    $region4: #{encoder_forward.1} parent=1 // pred_region
      _
    $region5: #{encoder_forward.1} parent=1 // pred_fallthru
      _
    // Predicated region
    $region6: #{encoder_forward.1} parent=1 // pred_check
      _
    $region7: #{encoder_forward.1} parent=1 // pred_check_branch
      %21 = sbr.rel (0) target = $region9
    $region8: #{encoder_forward.1} parent=1 // pred_region
      _
    $region9: #{encoder_forward.1} parent=1 // pred_fallthru
      _
    // Predicated region
    $region10: #{encoder_forward.1} parent=1 // pred_check
      _
    $region11: #{encoder_forward.1} parent=1 // pred_check_branch
      %23 = sbr.rel (0) target = $region13
    $region12: #{encoder_forward.1} parent=1 // pred_region
      _
    $region13: #{encoder_forward.1} parent=1 // pred_fallthru
      _
    // Predicated region
    $region14: #{encoder_forward.1} parent=1 // pred_check
      _
    $region15: #{encoder_forward.1} parent=1 // pred_check_branch
      %25 = sbr.rel (0) target = $region17
    $region16: #{encoder_forward.1} parent=1 // pred_region
      %s27 = ssub.s32 3072, 3072
      %28 = vsyncadd [#allocation3], %s27
      %s29 = sshll.u32 [#allocation2], 4
      %s30 = int_to_ptr.vmem [resolvable:$true] %s29
      %35 = dma.hbm_to_vmem [thread:$0]  %s3, 3072, %s30, [#allocation3], 192, 192, 12
    $region17: #{encoder_forward.1} parent=1 // pred_fallthru
      _
    // Predicated region
    $region18: #{encoder_forward.1} parent=1 // pred_check
      _
    $region19: #{encoder_forward.1} parent=1 // pred_check_branch
      %37 = sbr.rel (0) target = $region21
    $region20: #{encoder_forward.1} parent=1 // pred_region
      _
    $region21: #{encoder_forward.1} parent=1 // pred_fallthru
      _
    // Predicated region
    $region22: #{encoder_forward.1} parent=1 // pred_check
      _
    $region23: #{encoder_forward.1} parent=1 // pred_check_branch
      %39 = sbr.rel (0) target = $region25
    $region24: #{encoder_forward.1} parent=1 // pred_region
      _
    $region25: #{encoder_forward.1} parent=1 // pred_fallthru
      _
    // Predicated region
    $region26: #{encoder_forward.1} parent=1 // pred_check
      _
    $region27: #{encoder_forward.1} parent=1 // pred_check_branch
      %41 = sbr.rel (0) target = $region29
    $region28: #{encoder_forward.1} parent=1 // pred_region
      %s43 = ssub.s32 3072, 3072
      %44 = vsyncadd [#allocation6], %s43
      %s45 = sshll.u32 [#allocation5], 4
      %s46 = int_to_ptr.vmem [resolvable:$true] %s45
      %51 = dma.hbm_to_vmem [thread:$0]  %s6, 3072, %s46, [#allocation6], 192, 192, 12
    $region29: #{encoder_forward.1} parent=1 // pred_fallthru
      _
    // Predicated region
    $region30: #{encoder_forward.1} parent=1 // pred_check
      _
    $region31: #{encoder_forward.1} parent=1 // pred_check_branch
      %53 = sbr.rel (0) target = $region33
    $region32: #{encoder_forward.1} parent=1 // pred_region
      %s55 = ssub.s32 3072, 3072
      %56 = vsyncadd [#allocation6], %s55
      %s57 = sshll.u32 [#allocation7], 4
      %s58 = int_to_ptr.vmem [resolvable:$true] %s57
      %63 = dma.hbm_to_vmem [thread:$0]  %s7, 3072, %s58, [#allocation6], 192, 192, 12
    $region33: #{encoder_forward.1} parent=1 // pred_fallthru
      _
    // Predicated region
    $region34: #{encoder_forward.1} parent=1 // pred_check
      _
    $region35: #{encoder_forward.1} parent=1 // pred_check_branch
      %65 = sbr.rel (0) target = $region37
    $region36: #{encoder_forward.1} parent=1 // pred_region
      _
    $region37: #{encoder_forward.1} parent=1 // pred_fallthru
      _
    // Predicated region
    $region38: #{encoder_forward.1} parent=1 // pred_check
      _
    $region39: #{encoder_forward.1} parent=1 // pred_check_branch
      %67 = sbr.rel (0) target = $region41
    $region40: #{encoder_forward.1} parent=1 // pred_region
      _
    $region41: #{encoder_forward.1} parent=1 // pred_fallthru
      _
    // Predicated region
    $region42: #{encoder_forward.1} parent=1 // pred_check
      _
    $region43: #{encoder_forward.1} parent=1 // pred_check_branch
      %69 = sbr.rel (0) target = $region45
    $region44: #{encoder_forward.1} parent=1 // pred_region
      %70 = dma.done [#allocation3], 3072
    $region45: #{encoder_forward.1} parent=1 // pred_fallthru
      _
    // Predicated region
    $region46: #{encoder_forward.1} parent=1 // pred_check
      _
    $region47: #{encoder_forward.1} parent=1 // pred_check_branch
      %72 = sbr.rel (0) target = $region49
    $region48: #{encoder_forward.1} parent=1 // pred_region
      %73 = dma.done [#allocation6], 3072
    $region49: #{encoder_forward.1} parent=1 // pred_fallthru
      _
    // Predicated region
    $region50: #{encoder_forward.1} parent=1 // pred_check
      _
    $region51: #{encoder_forward.1} parent=1 // pred_check_branch
      %75 = sbr.rel (0) target = $region53
    $region52: #{encoder_forward.1} parent=1 // pred_region
      %76 = dma.done [#allocation6], 3072
    $region53: #{encoder_forward.1} parent=1 // pred_fallthru
      _
    %v78 = vld [vmem:[%s0] sm:$0xff]
    %v79 = vld [vmem:[%s0 + $0x8] sm:$0xff]
    %v80 = vlaneseq
    %v81 = vand.u32 %v80, 127
    %82 = vset.pattern.permute.xlu0 0
    %83 = vperm.xlu0 %82, %v78
    %v84 = vpop.permute.xlu0 %83
    %85 = vset.pattern.permute.xlu0 0
    %86 = vperm.xlu0 %85, %v79
    %v87 = vpop.permute.xlu0 %86
    %vm88 = vcmp.eq.s32.totalorder %v84, %v81
    %vm89 = vcmp.eq.s32.totalorder %v87, %v81
    %v90 = vsel %vm88, 1.0, 0.0
    %v91 = vsel %vm89, 1.0, 0.0
    %v92 = vpack.c.bf16 %v91, %v90
    %v93 = vld [vmem:[%s1] sm:$0xf]
    %v94 = vld [vmem:[%s1 + $0x4] sm:$0xf]
    %v95 = vld [vmem:[%s1 + $0x8] sm:$0xf]
    %v96 = vld [vmem:[%s1 + $0xc] sm:$0xf]
    %v97 = vld [vmem:[%s1 + $0x10] sm:$0xf]
    %v98 = vld [vmem:[%s1 + $0x14] sm:$0xf]
    %v99 = vld [vmem:[%s1 + $0x18] sm:$0x1]
    %v107 = vunpack.c.l.b16 %v93
    %v108 = vunpack.c.l.b16 %v94
    %v109 = vunpack.c.l.b16 %v95
    %v110 = vunpack.c.l.b16 %v96
    %v111 = vunpack.c.l.b16 %v97
    %v112 = vunpack.c.l.b16 %v98
    %v113 = vunpack.c.l.b16 %v99
    %v114 = vpack.c.b16 %v108, %v107
    %v115 = vpack.c.b16 %v110, %v109
    %v116 = vpack.c.b16 %v112, %v111
    %v117 = vpack.c.b16 %v113, %v113
    %vm121 = vcmask 408576
    %v123 = vsel %vm121, %v92, 0
    %vm125 = vcmask 1040384
    %v127 = vsel %vm125, %v117, 0
    %129 = vmatprep.subr.bf16.mxu0 0
    %130 = vmatpush1.bf16.msra.mxu0 %v114
    %131 = vmatprep.subr.bf16.mxu0 0
    %132 = vmatpush1.bf16.msra.mxu0 %v115
    %133 = vmatprep.subr.bf16.mxu0 0
    %134 = vmatpush1.bf16.msra.mxu0 %v116
    %135 = vmatprep.subr.bf16.mxu0 0
    %136 = vmatpush1.bf16.msra.mxu0 %v127
    %137 = vmatprep.subr.bf16.mxu0 0
    %138 = vmatpush1.bf16.msra.mxu0 0
    %139 = vmatprep.subr.bf16.mxu0 0
    %140 = vmatpush1.bf16.msra.mxu0 0
    %141 = vmatprep.subr.bf16.mxu0 0
    %142 = vmatpush1.bf16.msra.mxu0 0
    %143 = vmatprep.subr.bf16.mxu0 0
    %144 = vmatpush1.bf16.msra.mxu0 0
    %145 = vmatprep.subr.bf16.mxu0 0
    %146 = vmatpush1.bf16.msra.mxu0 0
    %147 = vmatprep.subr.bf16.mxu0 0
    %148 = vmatpush1.bf16.msra.mxu0 0
    %149 = vmatprep.subr.bf16.mxu0 0
    %150 = vmatpush1.bf16.msra.mxu0 0
    %151 = vmatprep.subr.bf16.mxu0 0
    %152 = vmatpush1.bf16.msra.mxu0 0
    %153 = vmatprep.subr.bf16.mxu0 0
    %154 = vmatpush1.bf16.msra.mxu0 0
    %155 = vmatprep.subr.bf16.mxu0 0
    %156 = vmatpush1.bf16.msra.mxu0 0
    %157 = vmatprep.subr.bf16.mxu0 0
    %158 = vmatpush1.bf16.msra.mxu0 0
    %159 = vmatprep.subr.bf16.mxu0 0
    %160 = vmatpush1.bf16.msra.mxu0 0
    %161 = vmatprep.mubr.bf16.mxu0 0
    %162 = vmatmul.mubr.bf16.gmra.mrb[0].mxu0 %v123
    %v163 = vpop.f32.mrb[0].mxu0
    %v164 = vadd.f32 0.0, %v163
    %v165 = vpop.f32.mrb[0].mxu0
    %v166 = vpop.f32.mrb[0].mxu0
    %v167 = vadd.f32 0.0, %v166
    %v168 = vpop.f32.mrb[0].mxu0
    %169 = vdwg.mxu0
    %v170 = vpack.c.bf16 %v167, %v164
    %v171 = vld [vmem:[%s2] sm:$0xff]
    %v172 = vld [vmem:[%s2 + $0x8] sm:$0xf]
    %v173 = vld [vmem:[%s2 + $0xc] sm:$0xff]
    %v174 = vld [vmem:[%s2 + $0x14] sm:$0xf]
    %v175 = vld [vmem:[%s2 + $0x18] sm:$0xff]
    %v176 = vld [vmem:[%s2 + $0x20] sm:$0xf]
    %v177 = vld [vmem:[%s2 + $0x24] sm:$0xff]
    %v178 = vld [vmem:[%s2 + $0x2c] sm:$0xf]
    %v179 = vld [vmem:[%s4] sm:$0x7]
    %v181 = vlaneseq
    %v182 = vshrl.u32 %v181, 7
    %v183 = vsub.s32 0, %v182
    %v184 = vrot.slane %v179, %v183
    %v185 = vlaneseq
    %v186 = vshrl.u32 %v185, 7
    %v187 = vsub.s32 1, %v186
    %v188 = vrot.slane %v179, %v187
    %v189 = vlaneseq
    %v190 = vshrl.u32 %v189, 7
    %v191 = vsub.s32 2, %v190
    %v192 = vrot.slane %v179, %v191
    %v204 = vunpack.c.l.b16 %v171
    %v205 = vunpack.c.h.b16 %v171
    %v206 = vunpack.c.l.b16 %v172
    %v207 = vunpack.c.l.b16 %v173
    %v208 = vunpack.c.h.b16 %v173
    %v209 = vunpack.c.l.b16 %v174
    %v210 = vunpack.c.l.b16 %v175
    %v211 = vunpack.c.h.b16 %v175
    %v212 = vunpack.c.l.b16 %v176
    %v213 = vunpack.c.l.b16 %v177
    %v214 = vunpack.c.h.b16 %v177
    %v215 = vunpack.c.l.b16 %v178
    %v216 = vpack.c.b16 %v207, %v204
    %v217 = vpack.c.b16 %v208, %v205
    %v218 = vpack.c.b16 %v209, %v206
    %v219 = vpack.c.b16 %v213, %v210
    %v220 = vpack.c.b16 %v214, %v211
    %v221 = vpack.c.b16 %v215, %v212
    %vm228 = vcmask 261120
    %v230 = vsel %vm228, %v170, 0
    %232 = vmatprep.subr.bf16.mxu0 %v217
    %233 = vmatpush1.bf16.msra.mxu0 %v216
    %234 = vmatprep.subr.bf16.mxu0 %v220
    %235 = vmatpush1.bf16.msra.mxu0 %v219
    %236 = vmatprep.subr.bf16.mxu0 0
    %237 = vmatpush1.bf16.msra.mxu0 0
    %238 = vmatprep.subr.bf16.mxu0 0
    %239 = vmatpush1.bf16.msra.mxu0 0
    %240 = vmatprep.subr.bf16.mxu0 0
    %241 = vmatpush1.bf16.msra.mxu0 0
    %242 = vmatprep.subr.bf16.mxu0 0
    %243 = vmatpush1.bf16.msra.mxu0 0
    %244 = vmatprep.subr.bf16.mxu0 0
    %245 = vmatpush1.bf16.msra.mxu0 0
    %246 = vmatprep.subr.bf16.mxu0 0
    %247 = vmatpush1.bf16.msra.mxu0 0
    %248 = vmatprep.subr.bf16.mxu0 0
    %249 = vmatpush1.bf16.msra.mxu0 0
    %250 = vmatprep.subr.bf16.mxu0 0
    %251 = vmatpush1.bf16.msra.mxu0 0
    %252 = vmatprep.subr.bf16.mxu0 0
    %253 = vmatpush1.bf16.msra.mxu0 0
    %254 = vmatprep.subr.bf16.mxu0 0
    %255 = vmatpush1.bf16.msra.mxu0 0
    %256 = vmatprep.subr.bf16.mxu0 0
    %257 = vmatpush1.bf16.msra.mxu0 0
    %258 = vmatprep.subr.bf16.mxu0 0
    %259 = vmatpush1.bf16.msra.mxu0 0
    %260 = vmatprep.subr.bf16.mxu0 0
    %261 = vmatpush1.bf16.msra.mxu0 0
    %262 = vmatprep.subr.bf16.mxu0 0
    %263 = vmatpush1.bf16.msra.mxu0 0
    %264 = vmatprep.mubr.bf16.mxu0 0
    %265 = vmatmul.mubr.bf16.gmra.mrb[0].mxu0 %v230
    %v266 = vpop.f32.mrb[0].mxu0
    %v267 = vadd.f32 %v184, %v266
    %v268 = vpop.f32.mrb[0].mxu0
    %v269 = vadd.f32 %v188, %v268
    %v270 = vpop.f32.mrb[0].mxu0
    %v271 = vadd.f32 %v184, %v270
    %v272 = vpop.f32.mrb[0].mxu0
    %v273 = vadd.f32 %v188, %v272
    %274 = vdwg.mxu0
    %275 = vmatprep.subr.bf16.mxu0 0
    %276 = vmatpush1.bf16.msra.mxu0 %v218
    %277 = vmatprep.subr.bf16.mxu0 0
    %278 = vmatpush1.bf16.msra.mxu0 %v221
    %279 = vmatprep.subr.bf16.mxu0 0
    %280 = vmatpush1.bf16.msra.mxu0 0
    %281 = vmatprep.subr.bf16.mxu0 0
    %282 = vmatpush1.bf16.msra.mxu0 0
    %283 = vmatprep.subr.bf16.mxu0 0
    %284 = vmatpush1.bf16.msra.mxu0 0
    %285 = vmatprep.subr.bf16.mxu0 0
    %286 = vmatpush1.bf16.msra.mxu0 0
    %287 = vmatprep.subr.bf16.mxu0 0
    %288 = vmatpush1.bf16.msra.mxu0 0
    %289 = vmatprep.subr.bf16.mxu0 0
    %290 = vmatpush1.bf16.msra.mxu0 0
    %291 = vmatprep.subr.bf16.mxu0 0
    %292 = vmatpush1.bf16.msra.mxu0 0
    %293 = vmatprep.subr.bf16.mxu0 0
    %294 = vmatpush1.bf16.msra.mxu0 0
    %295 = vmatprep.subr.bf16.mxu0 0
    %296 = vmatpush1.bf16.msra.mxu0 0
    %297 = vmatprep.subr.bf16.mxu0 0
    %298 = vmatpush1.bf16.msra.mxu0 0
    %299 = vmatprep.subr.bf16.mxu0 0
    %300 = vmatpush1.bf16.msra.mxu0 0
    %301 = vmatprep.subr.bf16.mxu0 0
    %302 = vmatpush1.bf16.msra.mxu0 0
    %303 = vmatprep.subr.bf16.mxu0 0
    %304 = vmatpush1.bf16.msra.mxu0 0
    %305 = vmatprep.subr.bf16.mxu0 0
    %306 = vmatpush1.bf16.msra.mxu0 0
    %307 = vmatprep.mubr.bf16.mxu0 0
    %308 = vmatmul.mubr.bf16.gmra.mrb[0].mxu0 %v230
    %v309 = vpop.f32.mrb[0].mxu0
    %v310 = vadd.f32 %v192, %v309
    %v311 = vpop.f32.mrb[0].mxu0
    %v312 = vpop.f32.mrb[0].mxu0
    %v313 = vadd.f32 %v192, %v312
    %v314 = vpop.f32.mrb[0].mxu0
    %315 = vdwg.mxu0
    %v316 = vld [vmem:[#allocation2] sm:$0xff]
    %v317 = vld [vmem:[#allocation2 + $0x8] sm:$0xf]
    %v318 = vld [vmem:[#allocation2 + $0xc] sm:$0xff]
    %v319 = vld [vmem:[#allocation2 + $0x14] sm:$0xf]
    %v320 = vld [vmem:[#allocation2 + $0x18] sm:$0xff]
    %v321 = vld [vmem:[#allocation2 + $0x20] sm:$0xf]
    %v322 = vld [vmem:[#allocation2 + $0x24] sm:$0xff]
    %v323 = vld [vmem:[#allocation2 + $0x2c] sm:$0xf]
    %v324 = vld [vmem:[#allocation2 + $0x30] sm:$0xff]
    %v325 = vld [vmem:[#allocation2 + $0x38] sm:$0xf]
    %v326 = vld [vmem:[#allocation2 + $0x3c] sm:$0xff]
    %v327 = vld [vmem:[#allocation2 + $0x44] sm:$0xf]
    %v328 = vld [vmem:[#allocation2 + $0x48] sm:$0xff]
    %v329 = vld [vmem:[#allocation2 + $0x50] sm:$0xf]
    %v330 = vld [vmem:[#allocation2 + $0x54] sm:$0xff]
    %v331 = vld [vmem:[#allocation2 + $0x5c] sm:$0xf]
    %v332 = vld [vmem:[#allocation2 + $0x60] sm:$0xff]
    %v333 = vld [vmem:[#allocation2 + $0x68] sm:$0xf]
    %v334 = vld [vmem:[#allocation2 + $0x6c] sm:$0xff]
    %v335 = vld [vmem:[#allocation2 + $0x74] sm:$0xf]
    %v336 = vld [vmem:[#allocation2 + $0x78] sm:$0xff]
    %v337 = vld [vmem:[#allocation2 + $0x80] sm:$0xf]
    %v338 = vld [vmem:[#allocation2 + $0x84] sm:$0xff]
    %v339 = vld [vmem:[#allocation2 + $0x8c] sm:$0xf]
    %v340 = vld [vmem:[#allocation2 + $0x90] sm:$0xff]
    %v341 = vld [vmem:[#allocation2 + $0x98] sm:$0xf]
    %v342 = vld [vmem:[#allocation2 + $0x9c] sm:$0xff]
    %v343 = vld [vmem:[#allocation2 + $0xa4] sm:$0xf]
    %v344 = vld [vmem:[#allocation2 + $0xa8] sm:$0xff]
    %v345 = vld [vmem:[#allocation2 + $0xb0] sm:$0xf]
    %v346 = vld [vmem:[#allocation2 + $0xb4] sm:$0xff]
    %v347 = vld [vmem:[#allocation2 + $0xbc] sm:$0xf]
    %v348 = vld [vmem:[#allocation5] sm:$0xff]
    %v349 = vld [vmem:[#allocation5 + $0x8] sm:$0xf]
    %v350 = vld [vmem:[#allocation5 + $0xc] sm:$0xff]
    %v351 = vld [vmem:[#allocation5 + $0x14] sm:$0xf]
    %v352 = vld [vmem:[#allocation5 + $0x18] sm:$0xff]
    %v353 = vld [vmem:[#allocation5 + $0x20] sm:$0xf]
    %v354 = vld [vmem:[#allocation5 + $0x24] sm:$0xff]
    %v355 = vld [vmem:[#allocation5 + $0x2c] sm:$0xf]
    %v356 = vld [vmem:[#allocation5 + $0x30] sm:$0xff]
    %v357 = vld [vmem:[#allocation5 + $0x38] sm:$0xf]
    %v358 = vld [vmem:[#allocation5 + $0x3c] sm:$0xff]
    %v359 = vld [vmem:[#allocation5 + $0x44] sm:$0xf]
    %v360 = vld [vmem:[#allocation5 + $0x48] sm:$0xff]
    %v361 = vld [vmem:[#allocation5 + $0x50] sm:$0xf]
    %v362 = vld [vmem:[#allocation5 + $0x54] sm:$0xff]
    %v363 = vld [vmem:[#allocation5 + $0x5c] sm:$0xf]
    %v364 = vld [vmem:[#allocation5 + $0x60] sm:$0xff]
    %v365 = vld [vmem:[#allocation5 + $0x68] sm:$0xf]
    %v366 = vld [vmem:[#allocation5 + $0x6c] sm:$0xff]
    %v367 = vld [vmem:[#allocation5 + $0x74] sm:$0xf]
    %v368 = vld [vmem:[#allocation5 + $0x78] sm:$0xff]
    %v369 = vld [vmem:[#allocation5 + $0x80] sm:$0xf]
    %v370 = vld [vmem:[#allocation5 + $0x84] sm:$0xff]
    %v371 = vld [vmem:[#allocation5 + $0x8c] sm:$0xf]
    %v372 = vld [vmem:[#allocation5 + $0x90] sm:$0xff]
    %v373 = vld [vmem:[#allocation5 + $0x98] sm:$0xf]
    %v374 = vld [vmem:[#allocation5 + $0x9c] sm:$0xff]
    %v375 = vld [vmem:[#allocation5 + $0xa4] sm:$0xf]
    %v376 = vld [vmem:[#allocation5 + $0xa8] sm:$0xff]
    %v377 = vld [vmem:[#allocation5 + $0xb0] sm:$0xf]
    %v378 = vld [vmem:[#allocation5 + $0xb4] sm:$0xff]
    %v379 = vld [vmem:[#allocation5 + $0xbc] sm:$0xf]
    %v380 = vld [vmem:[#allocation7] sm:$0xff]
    %v381 = vld [vmem:[#allocation7 + $0x8] sm:$0xf]
    %v382 = vld [vmem:[#allocation7 + $0xc] sm:$0xff]
    %v383 = vld [vmem:[#allocation7 + $0x14] sm:$0xf]
    %v384 = vld [vmem:[#allocation7 + $0x18] sm:$0xff]
    %v385 = vld [vmem:[#allocation7 + $0x20] sm:$0xf]
    %v386 = vld [vmem:[#allocation7 + $0x24] sm:$0xff]
    %v387 = vld [vmem:[#allocation7 + $0x2c] sm:$0xf]
    %v388 = vld [vmem:[#allocation7 + $0x30] sm:$0xff]
    %v389 = vld [vmem:[#allocation7 + $0x38] sm:$0xf]
    %v390 = vld [vmem:[#allocation7 + $0x3c] sm:$0xff]
    %v391 = vld [vmem:[#allocation7 + $0x44] sm:$0xf]
    %v392 = vld [vmem:[#allocation7 + $0x48] sm:$0xff]
    %v393 = vld [vmem:[#allocation7 + $0x50] sm:$0xf]
    %v394 = vld [vmem:[#allocation7 + $0x54] sm:$0xff]
    %v395 = vld [vmem:[#allocation7 + $0x5c] sm:$0xf]
    %v396 = vld [vmem:[#allocation7 + $0x60] sm:$0xff]
    %v397 = vld [vmem:[#allocation7 + $0x68] sm:$0xf]
    %v398 = vld [vmem:[#allocation7 + $0x6c] sm:$0xff]
    %v399 = vld [vmem:[#allocation7 + $0x74] sm:$0xf]
    %v400 = vld [vmem:[#allocation7 + $0x78] sm:$0xff]
    %v401 = vld [vmem:[#allocation7 + $0x80] sm:$0xf]
    %v402 = vld [vmem:[#allocation7 + $0x84] sm:$0xff]
    %v403 = vld [vmem:[#allocation7 + $0x8c] sm:$0xf]
    %v404 = vld [vmem:[#allocation7 + $0x90] sm:$0xff]
    %v405 = vld [vmem:[#allocation7 + $0x98] sm:$0xf]
    %v406 = vld [vmem:[#allocation7 + $0x9c] sm:$0xff]
    %v407 = vld [vmem:[#allocation7 + $0xa4] sm:$0xf]
    %v408 = vld [vmem:[#allocation7 + $0xa8] sm:$0xff]
    %v409 = vld [vmem:[#allocation7 + $0xb0] sm:$0xf]
    %v410 = vld [vmem:[#allocation7 + $0xb4] sm:$0xff]
    %v411 = vld [vmem:[#allocation7 + $0xbc] sm:$0xf]
    %v412 = vld [vmem:[%s8] sm:$0x7]
    %v414 = vlaneseq
    %v415 = vshrl.u32 %v414, 7
    %v416 = vsub.s32 0, %v415
    %v417 = vrot.slane %v412, %v416
    %v418 = vlaneseq
    %v419 = vshrl.u32 %v418, 7
    %v420 = vsub.s32 1, %v419
    %v421 = vrot.slane %v412, %v420
    %v422 = vlaneseq
    %v423 = vshrl.u32 %v422, 7
    %v424 = vsub.s32 2, %v423
    %v425 = vrot.slane %v412, %v424
    %v429 = vld [vmem:[%s5] sm:$0x1]
    %v431 = vlaneseq
    %v432 = vshrl.u32 %v431, 7
    %v433 = vsub.s32 0, %v432
    %v434 = vrot.slane %v429, %v433
    %v436 = vld [vmem:[%s9] sm:$0x1]
    %v438 = vlaneseq
    %v439 = vshrl.u32 %v438, 7
    %v440 = vsub.s32 0, %v439
    %v441 = vrot.slane %v436, %v440
    %v475 = vunpack.c.l.b16 %v316
    %v476 = vunpack.c.h.b16 %v316
    %v477 = vunpack.c.l.b16 %v317
    %v478 = vunpack.c.l.b16 %v318
    %v479 = vunpack.c.h.b16 %v318
    %v480 = vunpack.c.l.b16 %v319
    %v481 = vunpack.c.l.b16 %v320
    %v482 = vunpack.c.h.b16 %v320
    %v483 = vunpack.c.l.b16 %v321
    %v484 = vunpack.c.l.b16 %v322
    %v485 = vunpack.c.h.b16 %v322
    %v486 = vunpack.c.l.b16 %v323
    %v487 = vunpack.c.l.b16 %v324
    %v488 = vunpack.c.h.b16 %v324
    %v489 = vunpack.c.l.b16 %v325
    %v490 = vunpack.c.l.b16 %v326
    %v491 = vunpack.c.h.b16 %v326
    %v492 = vunpack.c.l.b16 %v327
    %v493 = vunpack.c.l.b16 %v328
    %v494 = vunpack.c.h.b16 %v328
    %v495 = vunpack.c.l.b16 %v329
    %v496 = vunpack.c.l.b16 %v330
    %v497 = vunpack.c.h.b16 %v330
    %v498 = vunpack.c.l.b16 %v331
    %v499 = vunpack.c.l.b16 %v332
    %v500 = vunpack.c.h.b16 %v332
    %v501 = vunpack.c.l.b16 %v333
    %v502 = vunpack.c.l.b16 %v334
    %v503 = vunpack.c.h.b16 %v334
    %v504 = vunpack.c.l.b16 %v335
    %v505 = vunpack.c.l.b16 %v336
    %v506 = vunpack.c.h.b16 %v336
    %v507 = vunpack.c.l.b16 %v337
    %v508 = vunpack.c.l.b16 %v338
    %v509 = vunpack.c.h.b16 %v338
    %v510 = vunpack.c.l.b16 %v339
    %v511 = vunpack.c.l.b16 %v340
    %v512 = vunpack.c.h.b16 %v340
    %v513 = vunpack.c.l.b16 %v341
    %v514 = vunpack.c.l.b16 %v342
    %v515 = vunpack.c.h.b16 %v342
    %v516 = vunpack.c.l.b16 %v343
    %v517 = vunpack.c.l.b16 %v344
    %v518 = vunpack.c.h.b16 %v344
    %v519 = vunpack.c.l.b16 %v345
    %v520 = vunpack.c.l.b16 %v346
    %v521 = vunpack.c.h.b16 %v346
    %v522 = vunpack.c.l.b16 %v347
    %v523 = vpack.c.b16 %v478, %v475
    %v524 = vpack.c.b16 %v479, %v476
    %v525 = vpack.c.b16 %v480, %v477
    %v526 = vpack.c.b16 %v484, %v481
    %v527 = vpack.c.b16 %v485, %v482
    %v528 = vpack.c.b16 %v486, %v483
    %v529 = vpack.c.b16 %v490, %v487
    %v530 = vpack.c.b16 %v491, %v488
    %v531 = vpack.c.b16 %v492, %v489
    %v532 = vpack.c.b16 %v496, %v493
    %v533 = vpack.c.b16 %v497, %v494
    %v534 = vpack.c.b16 %v498, %v495
    %v535 = vpack.c.b16 %v502, %v499
    %v536 = vpack.c.b16 %v503, %v500
    %v537 = vpack.c.b16 %v504, %v501
    %v538 = vpack.c.b16 %v508, %v505
    %v539 = vpack.c.b16 %v509, %v506
    %v540 = vpack.c.b16 %v510, %v507
    %v541 = vpack.c.b16 %v514, %v511
    %v542 = vpack.c.b16 %v515, %v512
    %v543 = vpack.c.b16 %v516, %v513
    %v544 = vpack.c.b16 %v520, %v517
    %v545 = vpack.c.b16 %v521, %v518
    %v546 = vpack.c.b16 %v522, %v519
    %571 = vmatprep.subr.bf16.mxu0 %v524
    %572 = vmatpush1.bf16.msra.mxu0 %v523
    %573 = vmatprep.subr.bf16.mxu0 %v527
    %574 = vmatpush1.bf16.msra.mxu0 %v526
    %575 = vmatprep.subr.bf16.mxu0 %v530
    %576 = vmatpush1.bf16.msra.mxu0 %v529
    %577 = vmatprep.subr.bf16.mxu0 %v533
    %578 = vmatpush1.bf16.msra.mxu0 %v532
    %579 = vmatprep.subr.bf16.mxu0 %v536
    %580 = vmatpush1.bf16.msra.mxu0 %v535
    %581 = vmatprep.subr.bf16.mxu0 %v539
    %582 = vmatpush1.bf16.msra.mxu0 %v538
    %583 = vmatprep.subr.bf16.mxu0 %v542
    %584 = vmatpush1.bf16.msra.mxu0 %v541
    %585 = vmatprep.subr.bf16.mxu0 %v545
    %586 = vmatpush1.bf16.msra.mxu0 %v544
    %587 = vmatprep.subr.bf16.mxu0 0
    %588 = vmatpush1.bf16.msra.mxu0 0
    %589 = vmatprep.subr.bf16.mxu0 0
    %590 = vmatpush1.bf16.msra.mxu0 0
    %591 = vmatprep.subr.bf16.mxu0 0
    %592 = vmatpush1.bf16.msra.mxu0 0
    %593 = vmatprep.subr.bf16.mxu0 0
    %594 = vmatpush1.bf16.msra.mxu0 0
    %595 = vmatprep.subr.bf16.mxu0 0
    %596 = vmatpush1.bf16.msra.mxu0 0
    %597 = vmatprep.subr.bf16.mxu0 0
    %598 = vmatpush1.bf16.msra.mxu0 0
    %599 = vmatprep.subr.bf16.mxu0 0
    %600 = vmatpush1.bf16.msra.mxu0 0
    %601 = vmatprep.subr.bf16.mxu0 0
    %602 = vmatpush1.bf16.msra.mxu0 0
    %603 = vmatprep.mubr.bf16.mxu0 0
    %604 = vmatmul.mubr.bf16.gmra.mrb[0].mxu0 0
    %v605 = vpop.f32.mrb[0].mxu0
    %v606 = vadd.f32 0.0, %v605
    %v607 = vpop.f32.mrb[0].mxu0
    %v608 = vadd.f32 0.0, %v607
    %v609 = vpop.f32.mrb[0].mxu0
    %v610 = vpop.f32.mrb[0].mxu0
    %611 = vdwg.mxu0
    %612 = vmatprep.subr.bf16.mxu0 0
    %613 = vmatpush1.bf16.msra.mxu0 %v525
    %614 = vmatprep.subr.bf16.mxu0 0
    %615 = vmatpush1.bf16.msra.mxu0 %v528
    %616 = vmatprep.subr.bf16.mxu0 0
    %617 = vmatpush1.bf16.msra.mxu0 %v531
    %618 = vmatprep.subr.bf16.mxu0 0
    %619 = vmatpush1.bf16.msra.mxu0 %v534
    %620 = vmatprep.subr.bf16.mxu0 0
    %621 = vmatpush1.bf16.msra.mxu0 %v537
    %622 = vmatprep.subr.bf16.mxu0 0
    %623 = vmatpush1.bf16.msra.mxu0 %v540
    %624 = vmatprep.subr.bf16.mxu0 0
    %625 = vmatpush1.bf16.msra.mxu0 %v543
    %626 = vmatprep.subr.bf16.mxu0 0
    %627 = vmatpush1.bf16.msra.mxu0 %v546
    %628 = vmatprep.subr.bf16.mxu0 0
    %629 = vmatpush1.bf16.msra.mxu0 0
    %630 = vmatprep.subr.bf16.mxu0 0
    %631 = vmatpush1.bf16.msra.mxu0 0
    %632 = vmatprep.subr.bf16.mxu0 0
    %633 = vmatpush1.bf16.msra.mxu0 0
    %634 = vmatprep.subr.bf16.mxu0 0
    %635 = vmatpush1.bf16.msra.mxu0 0
    %636 = vmatprep.subr.bf16.mxu0 0
    %637 = vmatpush1.bf16.msra.mxu0 0
    %638 = vmatprep.subr.bf16.mxu0 0
    %639 = vmatpush1.bf16.msra.mxu0 0
    %640 = vmatprep.subr.bf16.mxu0 0
    %641 = vmatpush1.bf16.msra.mxu0 0
    %642 = vmatprep.subr.bf16.mxu0 0
    %643 = vmatpush1.bf16.msra.mxu0 0
    %644 = vmatprep.mubr.bf16.mxu0 0
    %645 = vmatmul.mubr.bf16.gmra.mrb[0].mxu0 0
    %v646 = vpop.f32.mrb[0].mxu0
    %v647 = vadd.f32 0.0, %v646
    %v648 = vpop.f32.mrb[0].mxu0
    %v649 = vpop.f32.mrb[0].mxu0
    %v650 = vpop.f32.mrb[0].mxu0
    %651 = vdwg.mxu0
    %v652 = vadd.f32 %v267, %v606
    %v653 = vxor.u32 %v652, 2147483648
    %v654 = vmul.f32 %v653, 1.442695
    %v655 = vpow.pop %v654
    %v656 = vadd.f32 %v655, 1.0
    %v657 = vrcp.pop %v656
    %v658 = vmul.f32 1.0, %v657
    %v659 = vadd.f32 %v269, %v608
    %v660 = vxor.u32 %v659, 2147483648
    %v661 = vmul.f32 %v660, 1.442695
    %v662 = vpow.pop %v661
    %v663 = vadd.f32 %v662, 1.0
    %v664 = vrcp.pop %v663
    %v665 = vmul.f32 1.0, %v664
    %v666 = vadd.f32 %v647, %v434
    %v667 = vmul.f32 %v658, %v666
    %v668 = vadd.f32 %v310, %v667
    %v669 = vtanh.pop %v668
    %v670 = vsub.f32 1.0, %v665
    %v671 = vmul.f32 %v670, %v669
    %v672 = vmul.f32 %v665, 0.0
    %v673 = vadd.f32 %v671, %v672
    %v674 = vpack.c.bf16 %v673, %v673
    %v707 = vunpack.c.l.b16 %v348
    %v708 = vunpack.c.h.b16 %v348
    %v709 = vunpack.c.l.b16 %v349
    %v710 = vunpack.c.l.b16 %v350
    %v711 = vunpack.c.h.b16 %v350
    %v712 = vunpack.c.l.b16 %v351
    %v713 = vunpack.c.l.b16 %v352
    %v714 = vunpack.c.h.b16 %v352
    %v715 = vunpack.c.l.b16 %v353
    %v716 = vunpack.c.l.b16 %v354
    %v717 = vunpack.c.h.b16 %v354
    %v718 = vunpack.c.l.b16 %v355
    %v719 = vunpack.c.l.b16 %v356
    %v720 = vunpack.c.h.b16 %v356
    %v721 = vunpack.c.l.b16 %v357
    %v722 = vunpack.c.l.b16 %v358
    %v723 = vunpack.c.h.b16 %v358
    %v724 = vunpack.c.l.b16 %v359
    %v725 = vunpack.c.l.b16 %v360
    %v726 = vunpack.c.h.b16 %v360
    %v727 = vunpack.c.l.b16 %v361
    %v728 = vunpack.c.l.b16 %v362
    %v729 = vunpack.c.h.b16 %v362
    %v730 = vunpack.c.l.b16 %v363
    %v731 = vunpack.c.l.b16 %v364
    %v732 = vunpack.c.h.b16 %v364
    %v733 = vunpack.c.l.b16 %v365
    %v734 = vunpack.c.l.b16 %v366
    %v735 = vunpack.c.h.b16 %v366
    %v736 = vunpack.c.l.b16 %v367
    %v737 = vunpack.c.l.b16 %v368
    %v738 = vunpack.c.h.b16 %v368
    %v739 = vunpack.c.l.b16 %v369
    %v740 = vunpack.c.l.b16 %v370
    %v741 = vunpack.c.h.b16 %v370
    %v742 = vunpack.c.l.b16 %v371
    %v743 = vunpack.c.l.b16 %v372
    %v744 = vunpack.c.h.b16 %v372
    %v745 = vunpack.c.l.b16 %v373
    %v746 = vunpack.c.l.b16 %v374
    %v747 = vunpack.c.h.b16 %v374
    %v748 = vunpack.c.l.b16 %v375
    %v749 = vunpack.c.l.b16 %v376
    %v750 = vunpack.c.h.b16 %v376
    %v751 = vunpack.c.l.b16 %v377
    %v752 = vunpack.c.l.b16 %v378
    %v753 = vunpack.c.h.b16 %v378
    %v754 = vunpack.c.l.b16 %v379
    %v755 = vpack.c.b16 %v710, %v707
    %v756 = vpack.c.b16 %v711, %v708
    %v757 = vpack.c.b16 %v712, %v709
    %v758 = vpack.c.b16 %v716, %v713
    %v759 = vpack.c.b16 %v717, %v714
    %v760 = vpack.c.b16 %v718, %v715
    %v761 = vpack.c.b16 %v722, %v719
    %v762 = vpack.c.b16 %v723, %v720
    %v763 = vpack.c.b16 %v724, %v721
    %v764 = vpack.c.b16 %v728, %v725
    %v765 = vpack.c.b16 %v729, %v726
    %v766 = vpack.c.b16 %v730, %v727
    %v767 = vpack.c.b16 %v734, %v731
    %v768 = vpack.c.b16 %v735, %v732
    %v769 = vpack.c.b16 %v736, %v733
    %v770 = vpack.c.b16 %v740, %v737
    %v771 = vpack.c.b16 %v741, %v738
    %v772 = vpack.c.b16 %v742, %v739
    %v773 = vpack.c.b16 %v746, %v743
    %v774 = vpack.c.b16 %v747, %v744
    %v775 = vpack.c.b16 %v748, %v745
    %v776 = vpack.c.b16 %v752, %v749
    %v777 = vpack.c.b16 %v753, %v750
    %v778 = vpack.c.b16 %v754, %v751
    %803 = vmatprep.subr.bf16.mxu0 %v756
    %804 = vmatpush1.bf16.msra.mxu0 %v755
    %805 = vmatprep.subr.bf16.mxu0 %v759
    %806 = vmatpush1.bf16.msra.mxu0 %v758
    %807 = vmatprep.subr.bf16.mxu0 %v762
    %808 = vmatpush1.bf16.msra.mxu0 %v761
    %809 = vmatprep.subr.bf16.mxu0 %v765
    %810 = vmatpush1.bf16.msra.mxu0 %v764
    %811 = vmatprep.subr.bf16.mxu0 %v768
    %812 = vmatpush1.bf16.msra.mxu0 %v767
    %813 = vmatprep.subr.bf16.mxu0 %v771
    %814 = vmatpush1.bf16.msra.mxu0 %v770
    %815 = vmatprep.subr.bf16.mxu0 %v774
    %816 = vmatpush1.bf16.msra.mxu0 %v773
    %817 = vmatprep.subr.bf16.mxu0 %v777
    %818 = vmatpush1.bf16.msra.mxu0 %v776
    %819 = vmatprep.subr.bf16.mxu0 0
    %820 = vmatpush1.bf16.msra.mxu0 0
    %821 = vmatprep.subr.bf16.mxu0 0
    %822 = vmatpush1.bf16.msra.mxu0 0
    %823 = vmatprep.subr.bf16.mxu0 0
    %824 = vmatpush1.bf16.msra.mxu0 0
    %825 = vmatprep.subr.bf16.mxu0 0
    %826 = vmatpush1.bf16.msra.mxu0 0
    %827 = vmatprep.subr.bf16.mxu0 0
    %828 = vmatpush1.bf16.msra.mxu0 0
    %829 = vmatprep.subr.bf16.mxu0 0
    %830 = vmatpush1.bf16.msra.mxu0 0
    %831 = vmatprep.subr.bf16.mxu0 0
    %832 = vmatpush1.bf16.msra.mxu0 0
    %833 = vmatprep.subr.bf16.mxu0 0
    %834 = vmatpush1.bf16.msra.mxu0 0
    %835 = vmatprep.mubr.bf16.mxu0 0
    %836 = vmatmul.mubr.bf16.gmra.mrb[0].mxu0 %v674
    %v837 = vpop.f32.mrb[0].mxu0
    %v838 = vadd.f32 %v417, %v837
    %v839 = vpop.f32.mrb[0].mxu0
    %v840 = vadd.f32 %v421, %v839
    %v841 = vpop.f32.mrb[0].mxu0
    %v842 = vpop.f32.mrb[0].mxu0
    %843 = vdwg.mxu0
    %844 = vmatprep.subr.bf16.mxu0 0
    %845 = vmatpush1.bf16.msra.mxu0 %v757
    %846 = vmatprep.subr.bf16.mxu0 0
    %847 = vmatpush1.bf16.msra.mxu0 %v760
    %848 = vmatprep.subr.bf16.mxu0 0
    %849 = vmatpush1.bf16.msra.mxu0 %v763
    %850 = vmatprep.subr.bf16.mxu0 0
    %851 = vmatpush1.bf16.msra.mxu0 %v766
    %852 = vmatprep.subr.bf16.mxu0 0
    %853 = vmatpush1.bf16.msra.mxu0 %v769
    %854 = vmatprep.subr.bf16.mxu0 0
    %855 = vmatpush1.bf16.msra.mxu0 %v772
    %856 = vmatprep.subr.bf16.mxu0 0
    %857 = vmatpush1.bf16.msra.mxu0 %v775
    %858 = vmatprep.subr.bf16.mxu0 0
    %859 = vmatpush1.bf16.msra.mxu0 %v778
    %860 = vmatprep.subr.bf16.mxu0 0
    %861 = vmatpush1.bf16.msra.mxu0 0
    %862 = vmatprep.subr.bf16.mxu0 0
    %863 = vmatpush1.bf16.msra.mxu0 0
    %864 = vmatprep.subr.bf16.mxu0 0
    %865 = vmatpush1.bf16.msra.mxu0 0
    %866 = vmatprep.subr.bf16.mxu0 0
    %867 = vmatpush1.bf16.msra.mxu0 0
    %868 = vmatprep.subr.bf16.mxu0 0
    %869 = vmatpush1.bf16.msra.mxu0 0
    %870 = vmatprep.subr.bf16.mxu0 0
    %871 = vmatpush1.bf16.msra.mxu0 0
    %872 = vmatprep.subr.bf16.mxu0 0
    %873 = vmatpush1.bf16.msra.mxu0 0
    %874 = vmatprep.subr.bf16.mxu0 0
    %875 = vmatpush1.bf16.msra.mxu0 0
    %876 = vmatprep.mubr.bf16.mxu0 0
    %877 = vmatmul.mubr.bf16.gmra.mrb[0].mxu0 %v674
    %v878 = vpop.f32.mrb[0].mxu0
    %v879 = vadd.f32 %v425, %v878
    %v880 = vpop.f32.mrb[0].mxu0
    %v881 = vpop.f32.mrb[0].mxu0
    %v882 = vpop.f32.mrb[0].mxu0
    %883 = vdwg.mxu0
    %v916 = vunpack.c.l.b16 %v380
    %v917 = vunpack.c.h.b16 %v380
    %v918 = vunpack.c.l.b16 %v381
    %v919 = vunpack.c.l.b16 %v382
    %v920 = vunpack.c.h.b16 %v382
    %v921 = vunpack.c.l.b16 %v383
    %v922 = vunpack.c.l.b16 %v384
    %v923 = vunpack.c.h.b16 %v384
    %v924 = vunpack.c.l.b16 %v385
    %v925 = vunpack.c.l.b16 %v386
    %v926 = vunpack.c.h.b16 %v386
    %v927 = vunpack.c.l.b16 %v387
    %v928 = vunpack.c.l.b16 %v388
    %v929 = vunpack.c.h.b16 %v388
    %v930 = vunpack.c.l.b16 %v389
    %v931 = vunpack.c.l.b16 %v390
    %v932 = vunpack.c.h.b16 %v390
    %v933 = vunpack.c.l.b16 %v391
    %v934 = vunpack.c.l.b16 %v392
    %v935 = vunpack.c.h.b16 %v392
    %v936 = vunpack.c.l.b16 %v393
    %v937 = vunpack.c.l.b16 %v394
    %v938 = vunpack.c.h.b16 %v394
    %v939 = vunpack.c.l.b16 %v395
    %v940 = vunpack.c.l.b16 %v396
    %v941 = vunpack.c.h.b16 %v396
    %v942 = vunpack.c.l.b16 %v397
    %v943 = vunpack.c.l.b16 %v398
    %v944 = vunpack.c.h.b16 %v398
    %v945 = vunpack.c.l.b16 %v399
    %v946 = vunpack.c.l.b16 %v400
    %v947 = vunpack.c.h.b16 %v400
    %v948 = vunpack.c.l.b16 %v401
    %v949 = vunpack.c.l.b16 %v402
    %v950 = vunpack.c.h.b16 %v402
    %v951 = vunpack.c.l.b16 %v403
    %v952 = vunpack.c.l.b16 %v404
    %v953 = vunpack.c.h.b16 %v404
    %v954 = vunpack.c.l.b16 %v405
    %v955 = vunpack.c.l.b16 %v406
    %v956 = vunpack.c.h.b16 %v406
    %v957 = vunpack.c.l.b16 %v407
    %v958 = vunpack.c.l.b16 %v408
    %v959 = vunpack.c.h.b16 %v408
    %v960 = vunpack.c.l.b16 %v409
    %v961 = vunpack.c.l.b16 %v410
    %v962 = vunpack.c.h.b16 %v410
    %v963 = vunpack.c.l.b16 %v411
    %v964 = vpack.c.b16 %v919, %v916
    %v965 = vpack.c.b16 %v920, %v917
    %v966 = vpack.c.b16 %v921, %v918
    %v967 = vpack.c.b16 %v925, %v922
    %v968 = vpack.c.b16 %v926, %v923
    %v969 = vpack.c.b16 %v927, %v924
    %v970 = vpack.c.b16 %v931, %v928
    %v971 = vpack.c.b16 %v932, %v929
    %v972 = vpack.c.b16 %v933, %v930
    %v973 = vpack.c.b16 %v937, %v934
    %v974 = vpack.c.b16 %v938, %v935
    %v975 = vpack.c.b16 %v939, %v936
    %v976 = vpack.c.b16 %v943, %v940
    %v977 = vpack.c.b16 %v944, %v941
    %v978 = vpack.c.b16 %v945, %v942
    %v979 = vpack.c.b16 %v949, %v946
    %v980 = vpack.c.b16 %v950, %v947
    %v981 = vpack.c.b16 %v951, %v948
    %v982 = vpack.c.b16 %v955, %v952
    %v983 = vpack.c.b16 %v956, %v953
    %v984 = vpack.c.b16 %v957, %v954
    %v985 = vpack.c.b16 %v961, %v958
    %v986 = vpack.c.b16 %v962, %v959
    %v987 = vpack.c.b16 %v963, %v960
    %1012 = vmatprep.subr.bf16.mxu0 %v965
    %1013 = vmatpush1.bf16.msra.mxu0 %v964
    %1014 = vmatprep.subr.bf16.mxu0 %v968
    %1015 = vmatpush1.bf16.msra.mxu0 %v967
    %1016 = vmatprep.subr.bf16.mxu0 %v971
    %1017 = vmatpush1.bf16.msra.mxu0 %v970
    %1018 = vmatprep.subr.bf16.mxu0 %v974
    %1019 = vmatpush1.bf16.msra.mxu0 %v973
    %1020 = vmatprep.subr.bf16.mxu0 %v977
    %1021 = vmatpush1.bf16.msra.mxu0 %v976
    %1022 = vmatprep.subr.bf16.mxu0 %v980
    %1023 = vmatpush1.bf16.msra.mxu0 %v979
    %1024 = vmatprep.subr.bf16.mxu0 %v983
    %1025 = vmatpush1.bf16.msra.mxu0 %v982
    %1026 = vmatprep.subr.bf16.mxu0 %v986
    %1027 = vmatpush1.bf16.msra.mxu0 %v985
    %1028 = vmatprep.subr.bf16.mxu0 0
    %1029 = vmatpush1.bf16.msra.mxu0 0
    %1030 = vmatprep.subr.bf16.mxu0 0
    %1031 = vmatpush1.bf16.msra.mxu0 0
    %1032 = vmatprep.subr.bf16.mxu0 0
    %1033 = vmatpush1.bf16.msra.mxu0 0
    %1034 = vmatprep.subr.bf16.mxu0 0
    %1035 = vmatpush1.bf16.msra.mxu0 0
    %1036 = vmatprep.subr.bf16.mxu0 0
    %1037 = vmatpush1.bf16.msra.mxu0 0
    %1038 = vmatprep.subr.bf16.mxu0 0
    %1039 = vmatpush1.bf16.msra.mxu0 0
    %1040 = vmatprep.subr.bf16.mxu0 0
    %1041 = vmatpush1.bf16.msra.mxu0 0
    %1042 = vmatprep.subr.bf16.mxu0 0
    %1043 = vmatpush1.bf16.msra.mxu0 0
    %1044 = vmatprep.mubr.bf16.mxu0 0
    %1045 = vmatmul.mubr.bf16.gmra.mrb[0].mxu0 0
    %v1046 = vpop.f32.mrb[0].mxu0
    %v1047 = vadd.f32 0.0, %v1046
    %v1048 = vpop.f32.mrb[0].mxu0
    %v1049 = vadd.f32 0.0, %v1048
    %v1050 = vpop.f32.mrb[0].mxu0
    %v1051 = vpop.f32.mrb[0].mxu0
    %1052 = vdwg.mxu0
    %1053 = vmatprep.subr.bf16.mxu0 0
    %1054 = vmatpush1.bf16.msra.mxu0 %v966
    %1055 = vmatprep.subr.bf16.mxu0 0
    %1056 = vmatpush1.bf16.msra.mxu0 %v969
    %1057 = vmatprep.subr.bf16.mxu0 0
    %1058 = vmatpush1.bf16.msra.mxu0 %v972
    %1059 = vmatprep.subr.bf16.mxu0 0
    %1060 = vmatpush1.bf16.msra.mxu0 %v975
    %1061 = vmatprep.subr.bf16.mxu0 0
    %1062 = vmatpush1.bf16.msra.mxu0 %v978
    %1063 = vmatprep.subr.bf16.mxu0 0
    %1064 = vmatpush1.bf16.msra.mxu0 %v981
    %1065 = vmatprep.subr.bf16.mxu0 0
    %1066 = vmatpush1.bf16.msra.mxu0 %v984
    %1067 = vmatprep.subr.bf16.mxu0 0
    %1068 = vmatpush1.bf16.msra.mxu0 %v987
    %1069 = vmatprep.subr.bf16.mxu0 0
    %1070 = vmatpush1.bf16.msra.mxu0 0
    %1071 = vmatprep.subr.bf16.mxu0 0
    %1072 = vmatpush1.bf16.msra.mxu0 0
    %1073 = vmatprep.subr.bf16.mxu0 0
    %1074 = vmatpush1.bf16.msra.mxu0 0
    %1075 = vmatprep.subr.bf16.mxu0 0
    %1076 = vmatpush1.bf16.msra.mxu0 0
    %1077 = vmatprep.subr.bf16.mxu0 0
    %1078 = vmatpush1.bf16.msra.mxu0 0
    %1079 = vmatprep.subr.bf16.mxu0 0
    %1080 = vmatpush1.bf16.msra.mxu0 0
    %1081 = vmatprep.subr.bf16.mxu0 0
    %1082 = vmatpush1.bf16.msra.mxu0 0
    %1083 = vmatprep.subr.bf16.mxu0 0
    %1084 = vmatpush1.bf16.msra.mxu0 0
    %1085 = vmatprep.mubr.bf16.mxu0 0
    %1086 = vmatmul.mubr.bf16.gmra.mrb[0].mxu0 0
    %v1087 = vpop.f32.mrb[0].mxu0
    %v1088 = vadd.f32 0.0, %v1087
    %v1089 = vpop.f32.mrb[0].mxu0
    %v1090 = vpop.f32.mrb[0].mxu0
    %v1091 = vpop.f32.mrb[0].mxu0
    %1092 = vdwg.mxu0
    %v1093 = vadd.f32 %v838, %v1047
    %v1094 = vxor.u32 %v1093, 2147483648
    %v1095 = vmul.f32 %v1094, 1.442695
    %v1096 = vpow.pop %v1095
    %v1097 = vadd.f32 %v1096, 1.0
    %v1098 = vrcp.pop %v1097
    %v1099 = vmul.f32 1.0, %v1098
    %v1100 = vadd.f32 %v840, %v1049
    %v1101 = vxor.u32 %v1100, 2147483648
    %v1102 = vmul.f32 %v1101, 1.442695
    %v1103 = vpow.pop %v1102
    %v1104 = vadd.f32 %v1103, 1.0
    %v1105 = vrcp.pop %v1104
    %v1106 = vmul.f32 1.0, %v1105
    %v1107 = vadd.f32 %v1088, %v441
    %v1108 = vmul.f32 %v1099, %v1107
    %v1109 = vadd.f32 %v879, %v1108
    %v1110 = vtanh.pop %v1109
    %v1111 = vsub.f32 1.0, %v1106
    %v1112 = vmul.f32 %v1111, %v1110
    %v1113 = vmul.f32 %v1106, 0.0
    %v1114 = vadd.f32 %v1112, %v1113
    %1115 = vmatprep.subr.bf16.mxu0 %v524
    %1116 = vmatpush1.bf16.msra.mxu0 %v523
    %1117 = vmatprep.subr.bf16.mxu0 %v527
    %1118 = vmatpush1.bf16.msra.mxu0 %v526
    %1119 = vmatprep.subr.bf16.mxu0 %v530
    %1120 = vmatpush1.bf16.msra.mxu0 %v529
    %1121 = vmatprep.subr.bf16.mxu0 %v533
    %1122 = vmatpush1.bf16.msra.mxu0 %v532
    %1123 = vmatprep.subr.bf16.mxu0 %v536
    %1124 = vmatpush1.bf16.msra.mxu0 %v535
    %1125 = vmatprep.subr.bf16.mxu0 %v539
    %1126 = vmatpush1.bf16.msra.mxu0 %v538
    %1127 = vmatprep.subr.bf16.mxu0 %v542
    %1128 = vmatpush1.bf16.msra.mxu0 %v541
    %1129 = vmatprep.subr.bf16.mxu0 %v545
    %1130 = vmatpush1.bf16.msra.mxu0 %v544
    %1131 = vmatprep.subr.bf16.mxu0 0
    %1132 = vmatpush1.bf16.msra.mxu0 0
    %1133 = vmatprep.subr.bf16.mxu0 0
    %1134 = vmatpush1.bf16.msra.mxu0 0
    %1135 = vmatprep.subr.bf16.mxu0 0
    %1136 = vmatpush1.bf16.msra.mxu0 0
    %1137 = vmatprep.subr.bf16.mxu0 0
    %1138 = vmatpush1.bf16.msra.mxu0 0
    %1139 = vmatprep.subr.bf16.mxu0 0
    %1140 = vmatpush1.bf16.msra.mxu0 0
    %1141 = vmatprep.subr.bf16.mxu0 0
    %1142 = vmatpush1.bf16.msra.mxu0 0
    %1143 = vmatprep.subr.bf16.mxu0 0
    %1144 = vmatpush1.bf16.msra.mxu0 0
    %1145 = vmatprep.subr.bf16.mxu0 0
    %1146 = vmatpush1.bf16.msra.mxu0 0
    %1147 = vmatprep.mubr.bf16.mxu0 0
    %1148 = vmatmul.mubr.bf16.gmra.mrb[0].mxu0 %v674
    %v1149 = vpop.f32.mrb[0].mxu0
    %v1150 = vadd.f32 0.0, %v1149
    %v1151 = vpop.f32.mrb[0].mxu0
    %v1152 = vadd.f32 0.0, %v1151
    %v1153 = vpop.f32.mrb[0].mxu0
    %v1154 = vpop.f32.mrb[0].mxu0
    %1155 = vdwg.mxu0
    %1156 = vmatprep.subr.bf16.mxu0 0
    %1157 = vmatpush1.bf16.msra.mxu0 %v525
    %1158 = vmatprep.subr.bf16.mxu0 0
    %1159 = vmatpush1.bf16.msra.mxu0 %v528
    %1160 = vmatprep.subr.bf16.mxu0 0
    %1161 = vmatpush1.bf16.msra.mxu0 %v531
    %1162 = vmatprep.subr.bf16.mxu0 0
    %1163 = vmatpush1.bf16.msra.mxu0 %v534
    %1164 = vmatprep.subr.bf16.mxu0 0
    %1165 = vmatpush1.bf16.msra.mxu0 %v537
    %1166 = vmatprep.subr.bf16.mxu0 0
    %1167 = vmatpush1.bf16.msra.mxu0 %v540
    %1168 = vmatprep.subr.bf16.mxu0 0
    %1169 = vmatpush1.bf16.msra.mxu0 %v543
    %1170 = vmatprep.subr.bf16.mxu0 0
    %1171 = vmatpush1.bf16.msra.mxu0 %v546
    %1172 = vmatprep.subr.bf16.mxu0 0
    %1173 = vmatpush1.bf16.msra.mxu0 0
    %1174 = vmatprep.subr.bf16.mxu0 0
    %1175 = vmatpush1.bf16.msra.mxu0 0
    %1176 = vmatprep.subr.bf16.mxu0 0
    %1177 = vmatpush1.bf16.msra.mxu0 0
    %1178 = vmatprep.subr.bf16.mxu0 0
    %1179 = vmatpush1.bf16.msra.mxu0 0
    %1180 = vmatprep.subr.bf16.mxu0 0
    %1181 = vmatpush1.bf16.msra.mxu0 0
    %1182 = vmatprep.subr.bf16.mxu0 0
    %1183 = vmatpush1.bf16.msra.mxu0 0
    %1184 = vmatprep.subr.bf16.mxu0 0
    %1185 = vmatpush1.bf16.msra.mxu0 0
    %1186 = vmatprep.subr.bf16.mxu0 0
    %1187 = vmatpush1.bf16.msra.mxu0 0
    %1188 = vmatprep.mubr.bf16.mxu0 0
    %1189 = vmatmul.mubr.bf16.gmra.mrb[0].mxu0 %v674
    %v1190 = vpop.f32.mrb[0].mxu0
    %v1191 = vadd.f32 0.0, %v1190
    %v1192 = vpop.f32.mrb[0].mxu0
    %v1193 = vpop.f32.mrb[0].mxu0
    %v1194 = vpop.f32.mrb[0].mxu0
    %1195 = vdwg.mxu0
    %v1197 = vrot.slane %v1150, 6
    %v1199 = vadd.f32 %v267, %v1197
    %v1200 = vxor.u32 %v1199, 2147483648
    %v1201 = vmul.f32 %v1200, 1.442695
    %v1202 = vpow.pop %v1201
    %v1203 = vadd.f32 %v1202, 1.0
    %v1204 = vrcp.pop %v1203
    %v1205 = vmul.f32 1.0, %v1204
    %v1207 = vrot.slane %v1152, 6
    %v1209 = vadd.f32 %v269, %v1207
    %v1210 = vxor.u32 %v1209, 2147483648
    %v1211 = vmul.f32 %v1210, 1.442695
    %v1212 = vpow.pop %v1211
    %v1213 = vadd.f32 %v1212, 1.0
    %v1214 = vrcp.pop %v1213
    %v1215 = vmul.f32 1.0, %v1214
    %v1216 = vadd.f32 %v1191, %v434
    %v1218 = vrot.slane %v1216, 6
    %v1220 = vmul.f32 %v1205, %v1218
    %v1221 = vadd.f32 %v310, %v1220
    %v1222 = vtanh.pop %v1221
    %v1223 = vsub.f32 1.0, %v1215
    %v1224 = vmul.f32 %v1223, %v1222
    %v1226 = vrot.slane %v673, 6
    %v1228 = vmul.f32 %v1215, %v1226
    %v1229 = vadd.f32 %v1224, %v1228
    %v1230 = vpack.c.bf16 %v1229, %v1229
    %v1232 = vrot.slane %v1230, 1
    %1234 = vmatprep.subr.bf16.mxu0 %v756
    %1235 = vmatpush1.bf16.msra.mxu0 %v755
    %1236 = vmatprep.subr.bf16.mxu0 %v759
    %1237 = vmatpush1.bf16.msra.mxu0 %v758
    %1238 = vmatprep.subr.bf16.mxu0 %v762
    %1239 = vmatpush1.bf16.msra.mxu0 %v761
    %1240 = vmatprep.subr.bf16.mxu0 %v765
    %1241 = vmatpush1.bf16.msra.mxu0 %v764
    %1242 = vmatprep.subr.bf16.mxu0 %v768
    %1243 = vmatpush1.bf16.msra.mxu0 %v767
    %1244 = vmatprep.subr.bf16.mxu0 %v771
    %1245 = vmatpush1.bf16.msra.mxu0 %v770
    %1246 = vmatprep.subr.bf16.mxu0 %v774
    %1247 = vmatpush1.bf16.msra.mxu0 %v773
    %1248 = vmatprep.subr.bf16.mxu0 %v777
    %1249 = vmatpush1.bf16.msra.mxu0 %v776
    %1250 = vmatprep.subr.bf16.mxu0 0
    %1251 = vmatpush1.bf16.msra.mxu0 0
    %1252 = vmatprep.subr.bf16.mxu0 0
    %1253 = vmatpush1.bf16.msra.mxu0 0
    %1254 = vmatprep.subr.bf16.mxu0 0
    %1255 = vmatpush1.bf16.msra.mxu0 0
    %1256 = vmatprep.subr.bf16.mxu0 0
    %1257 = vmatpush1.bf16.msra.mxu0 0
    %1258 = vmatprep.subr.bf16.mxu0 0
    %1259 = vmatpush1.bf16.msra.mxu0 0
    %1260 = vmatprep.subr.bf16.mxu0 0
    %1261 = vmatpush1.bf16.msra.mxu0 0
    %1262 = vmatprep.subr.bf16.mxu0 0
    %1263 = vmatpush1.bf16.msra.mxu0 0
    %1264 = vmatprep.subr.bf16.mxu0 0
    %1265 = vmatpush1.bf16.msra.mxu0 0
    %1266 = vmatprep.mubr.bf16.mxu0 0
    %1267 = vmatmul.mubr.bf16.gmra.mrb[0].mxu0 %v1232
    %v1268 = vpop.f32.mrb[0].mxu0
    %v1269 = vadd.f32 %v417, %v1268
    %v1270 = vpop.f32.mrb[0].mxu0
    %v1271 = vadd.f32 %v421, %v1270
    %v1272 = vpop.f32.mrb[0].mxu0
    %v1273 = vpop.f32.mrb[0].mxu0
    %1274 = vdwg.mxu0
    %1275 = vmatprep.subr.bf16.mxu0 0
    %1276 = vmatpush1.bf16.msra.mxu0 %v757
    %1277 = vmatprep.subr.bf16.mxu0 0
    %1278 = vmatpush1.bf16.msra.mxu0 %v760
    %1279 = vmatprep.subr.bf16.mxu0 0
    %1280 = vmatpush1.bf16.msra.mxu0 %v763
    %1281 = vmatprep.subr.bf16.mxu0 0
    %1282 = vmatpush1.bf16.msra.mxu0 %v766
    %1283 = vmatprep.subr.bf16.mxu0 0
    %1284 = vmatpush1.bf16.msra.mxu0 %v769
    %1285 = vmatprep.subr.bf16.mxu0 0
    %1286 = vmatpush1.bf16.msra.mxu0 %v772
    %1287 = vmatprep.subr.bf16.mxu0 0
    %1288 = vmatpush1.bf16.msra.mxu0 %v775
    %1289 = vmatprep.subr.bf16.mxu0 0
    %1290 = vmatpush1.bf16.msra.mxu0 %v778
    %1291 = vmatprep.subr.bf16.mxu0 0
    %1292 = vmatpush1.bf16.msra.mxu0 0
    %1293 = vmatprep.subr.bf16.mxu0 0
    %1294 = vmatpush1.bf16.msra.mxu0 0
    %1295 = vmatprep.subr.bf16.mxu0 0
    %1296 = vmatpush1.bf16.msra.mxu0 0
    %1297 = vmatprep.subr.bf16.mxu0 0
    %1298 = vmatpush1.bf16.msra.mxu0 0
    %1299 = vmatprep.subr.bf16.mxu0 0
    %1300 = vmatpush1.bf16.msra.mxu0 0
    %1301 = vmatprep.subr.bf16.mxu0 0
    %1302 = vmatpush1.bf16.msra.mxu0 0
    %1303 = vmatprep.subr.bf16.mxu0 0
    %1304 = vmatpush1.bf16.msra.mxu0 0
    %1305 = vmatprep.subr.bf16.mxu0 0
    %1306 = vmatpush1.bf16.msra.mxu0 0
    %1307 = vmatprep.mubr.bf16.mxu0 0
    %1308 = vmatmul.mubr.bf16.gmra.mrb[0].mxu0 %v1232
    %v1309 = vpop.f32.mrb[0].mxu0
    %v1310 = vadd.f32 %v425, %v1309
    %v1311 = vpop.f32.mrb[0].mxu0
    %v1312 = vpop.f32.mrb[0].mxu0
    %v1313 = vpop.f32.mrb[0].mxu0
    %1314 = vdwg.mxu0
    %v1315 = vpack.c.bf16 %v1114, %v1114
    %1316 = vmatprep.subr.bf16.mxu0 %v965
    %1317 = vmatpush1.bf16.msra.mxu0 %v964
    %1318 = vmatprep.subr.bf16.mxu0 %v968
    %1319 = vmatpush1.bf16.msra.mxu0 %v967
    %1320 = vmatprep.subr.bf16.mxu0 %v971
    %1321 = vmatpush1.bf16.msra.mxu0 %v970
    %1322 = vmatprep.subr.bf16.mxu0 %v974
    %1323 = vmatpush1.bf16.msra.mxu0 %v973
    %1324 = vmatprep.subr.bf16.mxu0 %v977
    %1325 = vmatpush1.bf16.msra.mxu0 %v976
    %1326 = vmatprep.subr.bf16.mxu0 %v980
    %1327 = vmatpush1.bf16.msra.mxu0 %v979
    %1328 = vmatprep.subr.bf16.mxu0 %v983
    %1329 = vmatpush1.bf16.msra.mxu0 %v982
    %1330 = vmatprep.subr.bf16.mxu0 %v986
    %1331 = vmatpush1.bf16.msra.mxu0 %v985
    %1332 = vmatprep.subr.bf16.mxu0 0
    %1333 = vmatpush1.bf16.msra.mxu0 0
    %1334 = vmatprep.subr.bf16.mxu0 0
    %1335 = vmatpush1.bf16.msra.mxu0 0
    %1336 = vmatprep.subr.bf16.mxu0 0
    %1337 = vmatpush1.bf16.msra.mxu0 0
    %1338 = vmatprep.subr.bf16.mxu0 0
    %1339 = vmatpush1.bf16.msra.mxu0 0
    %1340 = vmatprep.subr.bf16.mxu0 0
    %1341 = vmatpush1.bf16.msra.mxu0 0
    %1342 = vmatprep.subr.bf16.mxu0 0
    %1343 = vmatpush1.bf16.msra.mxu0 0
    %1344 = vmatprep.subr.bf16.mxu0 0
    %1345 = vmatpush1.bf16.msra.mxu0 0
    %1346 = vmatprep.subr.bf16.mxu0 0
    %1347 = vmatpush1.bf16.msra.mxu0 0
    %1348 = vmatprep.mubr.bf16.mxu0 0
    %1349 = vmatmul.mubr.bf16.gmra.mrb[0].mxu0 %v1315
    %v1350 = vpop.f32.mrb[0].mxu0
    %v1351 = vadd.f32 0.0, %v1350
    %v1352 = vpop.f32.mrb[0].mxu0
    %v1353 = vadd.f32 0.0, %v1352
    %v1354 = vpop.f32.mrb[0].mxu0
    %v1355 = vpop.f32.mrb[0].mxu0
    %1356 = vdwg.mxu0
    %1357 = vmatprep.subr.bf16.mxu0 0
    %1358 = vmatpush1.bf16.msra.mxu0 %v966
    %1359 = vmatprep.subr.bf16.mxu0 0
    %1360 = vmatpush1.bf16.msra.mxu0 %v969
    %1361 = vmatprep.subr.bf16.mxu0 0
    %1362 = vmatpush1.bf16.msra.mxu0 %v972
    %1363 = vmatprep.subr.bf16.mxu0 0
    %1364 = vmatpush1.bf16.msra.mxu0 %v975
    %1365 = vmatprep.subr.bf16.mxu0 0
    %1366 = vmatpush1.bf16.msra.mxu0 %v978
    %1367 = vmatprep.subr.bf16.mxu0 0
    %1368 = vmatpush1.bf16.msra.mxu0 %v981
    %1369 = vmatprep.subr.bf16.mxu0 0
    %1370 = vmatpush1.bf16.msra.mxu0 %v984
    %1371 = vmatprep.subr.bf16.mxu0 0
    %1372 = vmatpush1.bf16.msra.mxu0 %v987
    %1373 = vmatprep.subr.bf16.mxu0 0
    %1374 = vmatpush1.bf16.msra.mxu0 0
    %1375 = vmatprep.subr.bf16.mxu0 0
    %1376 = vmatpush1.bf16.msra.mxu0 0
    %1377 = vmatprep.subr.bf16.mxu0 0
    %1378 = vmatpush1.bf16.msra.mxu0 0
    %1379 = vmatprep.subr.bf16.mxu0 0
    %1380 = vmatpush1.bf16.msra.mxu0 0
    %1381 = vmatprep.subr.bf16.mxu0 0
    %1382 = vmatpush1.bf16.msra.mxu0 0
    %1383 = vmatprep.subr.bf16.mxu0 0
    %1384 = vmatpush1.bf16.msra.mxu0 0
    %1385 = vmatprep.subr.bf16.mxu0 0
    %1386 = vmatpush1.bf16.msra.mxu0 0
    %1387 = vmatprep.subr.bf16.mxu0 0
    %1388 = vmatpush1.bf16.msra.mxu0 0
    %1389 = vmatprep.mubr.bf16.mxu0 0
    %1390 = vmatmul.mubr.bf16.gmra.mrb[0].mxu0 %v1315
    %v1391 = vpop.f32.mrb[0].mxu0
    %v1392 = vadd.f32 0.0, %v1391
    %v1393 = vpop.f32.mrb[0].mxu0
    %v1394 = vpop.f32.mrb[0].mxu0
    %v1395 = vpop.f32.mrb[0].mxu0
    %1396 = vdwg.mxu0
    %v1397 = vadd.f32 %v1269, %v1351
    %v1398 = vxor.u32 %v1397, 2147483648
    %v1399 = vmul.f32 %v1398, 1.442695
    %v1400 = vpow.pop %v1399
    %v1401 = vadd.f32 %v1400, 1.0
    %v1402 = vrcp.pop %v1401
    %v1403 = vmul.f32 1.0, %v1402
    %v1404 = vadd.f32 %v1271, %v1353
    %v1405 = vxor.u32 %v1404, 2147483648
    %v1406 = vmul.f32 %v1405, 1.442695
    %v1407 = vpow.pop %v1406
    %v1408 = vadd.f32 %v1407, 1.0
    %v1409 = vrcp.pop %v1408
    %v1410 = vmul.f32 1.0, %v1409
    %v1411 = vadd.f32 %v1392, %v441
    %v1412 = vmul.f32 %v1403, %v1411
    %v1413 = vadd.f32 %v1310, %v1412
    %v1414 = vtanh.pop %v1413
    %v1415 = vsub.f32 1.0, %v1410
    %v1416 = vmul.f32 %v1415, %v1414
    %v1417 = vmul.f32 %v1410, %v1114
    %v1418 = vadd.f32 %v1416, %v1417
    %1419 = vmatprep.subr.bf16.mxu0 %v524
    %1420 = vmatpush1.bf16.msra.mxu0 %v523
    %1421 = vmatprep.subr.bf16.mxu0 %v527
    %1422 = vmatpush1.bf16.msra.mxu0 %v526
    %1423 = vmatprep.subr.bf16.mxu0 %v530
    %1424 = vmatpush1.bf16.msra.mxu0 %v529
    %1425 = vmatprep.subr.bf16.mxu0 %v533
    %1426 = vmatpush1.bf16.msra.mxu0 %v532
    %1427 = vmatprep.subr.bf16.mxu0 %v536
    %1428 = vmatpush1.bf16.msra.mxu0 %v535
    %1429 = vmatprep.subr.bf16.mxu0 %v539
    %1430 = vmatpush1.bf16.msra.mxu0 %v538
    %1431 = vmatprep.subr.bf16.mxu0 %v542
    %1432 = vmatpush1.bf16.msra.mxu0 %v541
    %1433 = vmatprep.subr.bf16.mxu0 %v545
    %1434 = vmatpush1.bf16.msra.mxu0 %v544
    %1435 = vmatprep.subr.bf16.mxu0 0
    %1436 = vmatpush1.bf16.msra.mxu0 0
    %1437 = vmatprep.subr.bf16.mxu0 0
    %1438 = vmatpush1.bf16.msra.mxu0 0
    %1439 = vmatprep.subr.bf16.mxu0 0
    %1440 = vmatpush1.bf16.msra.mxu0 0
    %1441 = vmatprep.subr.bf16.mxu0 0
    %1442 = vmatpush1.bf16.msra.mxu0 0
    %1443 = vmatprep.subr.bf16.mxu0 0
    %1444 = vmatpush1.bf16.msra.mxu0 0
    %1445 = vmatprep.subr.bf16.mxu0 0
    %1446 = vmatpush1.bf16.msra.mxu0 0
    %1447 = vmatprep.subr.bf16.mxu0 0
    %1448 = vmatpush1.bf16.msra.mxu0 0
    %1449 = vmatprep.subr.bf16.mxu0 0
    %1450 = vmatpush1.bf16.msra.mxu0 0
    %1451 = vmatprep.mubr.bf16.mxu0 0
    %1452 = vmatmul.mubr.bf16.gmra.mrb[0].mxu0 %v1232
    %v1453 = vpop.f32.mrb[0].mxu0
    %v1454 = vadd.f32 0.0, %v1453
    %v1455 = vpop.f32.mrb[0].mxu0
    %v1456 = vadd.f32 0.0, %v1455
    %v1457 = vpop.f32.mrb[0].mxu0
    %v1458 = vpop.f32.mrb[0].mxu0
    %1459 = vdwg.mxu0
    %1460 = vmatprep.subr.bf16.mxu0 0
    %1461 = vmatpush1.bf16.msra.mxu0 %v525
    %1462 = vmatprep.subr.bf16.mxu0 0
    %1463 = vmatpush1.bf16.msra.mxu0 %v528
    %1464 = vmatprep.subr.bf16.mxu0 0
    %1465 = vmatpush1.bf16.msra.mxu0 %v531
    %1466 = vmatprep.subr.bf16.mxu0 0
    %1467 = vmatpush1.bf16.msra.mxu0 %v534
    %1468 = vmatprep.subr.bf16.mxu0 0
    %1469 = vmatpush1.bf16.msra.mxu0 %v537
    %1470 = vmatprep.subr.bf16.mxu0 0
    %1471 = vmatpush1.bf16.msra.mxu0 %v540
    %1472 = vmatprep.subr.bf16.mxu0 0
    %1473 = vmatpush1.bf16.msra.mxu0 %v543
    %1474 = vmatprep.subr.bf16.mxu0 0
    %1475 = vmatpush1.bf16.msra.mxu0 %v546
    %1476 = vmatprep.subr.bf16.mxu0 0
    %1477 = vmatpush1.bf16.msra.mxu0 0
    %1478 = vmatprep.subr.bf16.mxu0 0
    %1479 = vmatpush1.bf16.msra.mxu0 0
    %1480 = vmatprep.subr.bf16.mxu0 0
    %1481 = vmatpush1.bf16.msra.mxu0 0
    %1482 = vmatprep.subr.bf16.mxu0 0
    %1483 = vmatpush1.bf16.msra.mxu0 0
    %1484 = vmatprep.subr.bf16.mxu0 0
    %1485 = vmatpush1.bf16.msra.mxu0 0
    %1486 = vmatprep.subr.bf16.mxu0 0
    %1487 = vmatpush1.bf16.msra.mxu0 0
    %1488 = vmatprep.subr.bf16.mxu0 0
    %1489 = vmatpush1.bf16.msra.mxu0 0
    %1490 = vmatprep.subr.bf16.mxu0 0
    %1491 = vmatpush1.bf16.msra.mxu0 0
    %1492 = vmatprep.mubr.bf16.mxu0 0
    %1493 = vmatmul.mubr.bf16.gmra.mrb[0].mxu0 %v1232
    %v1494 = vpop.f32.mrb[0].mxu0
    %v1495 = vadd.f32 0.0, %v1494
    %v1496 = vpop.f32.mrb[0].mxu0
    %v1497 = vpop.f32.mrb[0].mxu0
    %v1498 = vpop.f32.mrb[0].mxu0
    %1499 = vdwg.mxu0
    %v1501 = vrot.slane %v1454, 4
    %v1503 = vadd.f32 %v267, %v1501
    %v1504 = vxor.u32 %v1503, 2147483648
    %v1505 = vmul.f32 %v1504, 1.442695
    %v1506 = vpow.pop %v1505
    %v1507 = vadd.f32 %v1506, 1.0
    %v1508 = vrcp.pop %v1507
    %v1509 = vmul.f32 1.0, %v1508
    %v1511 = vrot.slane %v1456, 4
    %v1513 = vadd.f32 %v269, %v1511
    %v1514 = vxor.u32 %v1513, 2147483648
    %v1515 = vmul.f32 %v1514, 1.442695
    %v1516 = vpow.pop %v1515
    %v1517 = vadd.f32 %v1516, 1.0
    %v1518 = vrcp.pop %v1517
    %v1519 = vmul.f32 1.0, %v1518
    %v1520 = vadd.f32 %v1495, %v434
    %v1522 = vrot.slane %v1520, 4
    %v1524 = vmul.f32 %v1509, %v1522
    %v1525 = vadd.f32 %v310, %v1524
    %v1526 = vtanh.pop %v1525
    %v1527 = vsub.f32 1.0, %v1519
    %v1528 = vmul.f32 %v1527, %v1526
    %v1530 = vrot.slane %v1229, 6
    %v1532 = vmul.f32 %v1519, %v1530
    %v1533 = vadd.f32 %v1528, %v1532
    %v1534 = vpack.c.bf16 %v1533, %v1533
    %v1536 = vrot.slane %v1534, 2
    %1538 = vmatprep.subr.bf16.mxu0 %v756
    %1539 = vmatpush1.bf16.msra.mxu0 %v755
    %1540 = vmatprep.subr.bf16.mxu0 %v759
    %1541 = vmatpush1.bf16.msra.mxu0 %v758
    %1542 = vmatprep.subr.bf16.mxu0 %v762
    %1543 = vmatpush1.bf16.msra.mxu0 %v761
    %1544 = vmatprep.subr.bf16.mxu0 %v765
    %1545 = vmatpush1.bf16.msra.mxu0 %v764
    %1546 = vmatprep.subr.bf16.mxu0 %v768
    %1547 = vmatpush1.bf16.msra.mxu0 %v767
    %1548 = vmatprep.subr.bf16.mxu0 %v771
    %1549 = vmatpush1.bf16.msra.mxu0 %v770
    %1550 = vmatprep.subr.bf16.mxu0 %v774
    %1551 = vmatpush1.bf16.msra.mxu0 %v773
    %1552 = vmatprep.subr.bf16.mxu0 %v777
    %1553 = vmatpush1.bf16.msra.mxu0 %v776
    %1554 = vmatprep.subr.bf16.mxu0 0
    %1555 = vmatpush1.bf16.msra.mxu0 0
    %1556 = vmatprep.subr.bf16.mxu0 0
    %1557 = vmatpush1.bf16.msra.mxu0 0
    %1558 = vmatprep.subr.bf16.mxu0 0
    %1559 = vmatpush1.bf16.msra.mxu0 0
    %1560 = vmatprep.subr.bf16.mxu0 0
    %1561 = vmatpush1.bf16.msra.mxu0 0
    %1562 = vmatprep.subr.bf16.mxu0 0
    %1563 = vmatpush1.bf16.msra.mxu0 0
    %1564 = vmatprep.subr.bf16.mxu0 0
    %1565 = vmatpush1.bf16.msra.mxu0 0
    %1566 = vmatprep.subr.bf16.mxu0 0
    %1567 = vmatpush1.bf16.msra.mxu0 0
    %1568 = vmatprep.subr.bf16.mxu0 0
    %1569 = vmatpush1.bf16.msra.mxu0 0
    %1570 = vmatprep.mubr.bf16.mxu0 0
    %1571 = vmatmul.mubr.bf16.gmra.mrb[0].mxu0 %v1536
    %v1572 = vpop.f32.mrb[0].mxu0
    %v1573 = vadd.f32 %v417, %v1572
    %v1574 = vpop.f32.mrb[0].mxu0
    %v1575 = vadd.f32 %v421, %v1574
    %v1576 = vpop.f32.mrb[0].mxu0
    %v1577 = vpop.f32.mrb[0].mxu0
    %1578 = vdwg.mxu0
    %1579 = vmatprep.subr.bf16.mxu0 0
    %1580 = vmatpush1.bf16.msra.mxu0 %v757
    %1581 = vmatprep.subr.bf16.mxu0 0
    %1582 = vmatpush1.bf16.msra.mxu0 %v760
    %1583 = vmatprep.subr.bf16.mxu0 0
    %1584 = vmatpush1.bf16.msra.mxu0 %v763
    %1585 = vmatprep.subr.bf16.mxu0 0
    %1586 = vmatpush1.bf16.msra.mxu0 %v766
    %1587 = vmatprep.subr.bf16.mxu0 0
    %1588 = vmatpush1.bf16.msra.mxu0 %v769
    %1589 = vmatprep.subr.bf16.mxu0 0
    %1590 = vmatpush1.bf16.msra.mxu0 %v772
    %1591 = vmatprep.subr.bf16.mxu0 0
    %1592 = vmatpush1.bf16.msra.mxu0 %v775
    %1593 = vmatprep.subr.bf16.mxu0 0
    %1594 = vmatpush1.bf16.msra.mxu0 %v778
    %1595 = vmatprep.subr.bf16.mxu0 0
    %1596 = vmatpush1.bf16.msra.mxu0 0
    %1597 = vmatprep.subr.bf16.mxu0 0
    %1598 = vmatpush1.bf16.msra.mxu0 0
    %1599 = vmatprep.subr.bf16.mxu0 0
    %1600 = vmatpush1.bf16.msra.mxu0 0
    %1601 = vmatprep.subr.bf16.mxu0 0
    %1602 = vmatpush1.bf16.msra.mxu0 0
    %1603 = vmatprep.subr.bf16.mxu0 0
    %1604 = vmatpush1.bf16.msra.mxu0 0
    %1605 = vmatprep.subr.bf16.mxu0 0
    %1606 = vmatpush1.bf16.msra.mxu0 0
    %1607 = vmatprep.subr.bf16.mxu0 0
    %1608 = vmatpush1.bf16.msra.mxu0 0
    %1609 = vmatprep.subr.bf16.mxu0 0
    %1610 = vmatpush1.bf16.msra.mxu0 0
    %1611 = vmatprep.mubr.bf16.mxu0 0
    %1612 = vmatmul.mubr.bf16.gmra.mrb[0].mxu0 %v1536
    %v1613 = vpop.f32.mrb[0].mxu0
    %v1614 = vadd.f32 %v425, %v1613
    %v1615 = vpop.f32.mrb[0].mxu0
    %v1616 = vpop.f32.mrb[0].mxu0
    %v1617 = vpop.f32.mrb[0].mxu0
    %1618 = vdwg.mxu0
    %v1619 = vpack.c.bf16 %v1418, %v1418
    %1620 = vmatprep.subr.bf16.mxu0 %v965
    %1621 = vmatpush1.bf16.msra.mxu0 %v964
    %1622 = vmatprep.subr.bf16.mxu0 %v968
    %1623 = vmatpush1.bf16.msra.mxu0 %v967
    %1624 = vmatprep.subr.bf16.mxu0 %v971
    %1625 = vmatpush1.bf16.msra.mxu0 %v970
    %1626 = vmatprep.subr.bf16.mxu0 %v974
    %1627 = vmatpush1.bf16.msra.mxu0 %v973
    %1628 = vmatprep.subr.bf16.mxu0 %v977
    %1629 = vmatpush1.bf16.msra.mxu0 %v976
    %1630 = vmatprep.subr.bf16.mxu0 %v980
    %1631 = vmatpush1.bf16.msra.mxu0 %v979
    %1632 = vmatprep.subr.bf16.mxu0 %v983
    %1633 = vmatpush1.bf16.msra.mxu0 %v982
    %1634 = vmatprep.subr.bf16.mxu0 %v986
    %1635 = vmatpush1.bf16.msra.mxu0 %v985
    %1636 = vmatprep.subr.bf16.mxu0 0
    %1637 = vmatpush1.bf16.msra.mxu0 0
    %1638 = vmatprep.subr.bf16.mxu0 0
    %1639 = vmatpush1.bf16.msra.mxu0 0
    %1640 = vmatprep.subr.bf16.mxu0 0
    %1641 = vmatpush1.bf16.msra.mxu0 0
    %1642 = vmatprep.subr.bf16.mxu0 0
    %1643 = vmatpush1.bf16.msra.mxu0 0
    %1644 = vmatprep.subr.bf16.mxu0 0
    %1645 = vmatpush1.bf16.msra.mxu0 0
    %1646 = vmatprep.subr.bf16.mxu0 0
    %1647 = vmatpush1.bf16.msra.mxu0 0
    %1648 = vmatprep.subr.bf16.mxu0 0
    %1649 = vmatpush1.bf16.msra.mxu0 0
    %1650 = vmatprep.subr.bf16.mxu0 0
    %1651 = vmatpush1.bf16.msra.mxu0 0
    %1652 = vmatprep.mubr.bf16.mxu0 0
    %1653 = vmatmul.mubr.bf16.gmra.mrb[0].mxu0 %v1619
    %v1654 = vpop.f32.mrb[0].mxu0
    %v1655 = vadd.f32 0.0, %v1654
    %v1656 = vpop.f32.mrb[0].mxu0
    %v1657 = vadd.f32 0.0, %v1656
    %v1658 = vpop.f32.mrb[0].mxu0
    %v1659 = vpop.f32.mrb[0].mxu0
    %1660 = vdwg.mxu0
    %1661 = vmatprep.subr.bf16.mxu0 0
    %1662 = vmatpush1.bf16.msra.mxu0 %v966
    %1663 = vmatprep.subr.bf16.mxu0 0
    %1664 = vmatpush1.bf16.msra.mxu0 %v969
    %1665 = vmatprep.subr.bf16.mxu0 0
    %1666 = vmatpush1.bf16.msra.mxu0 %v972
    %1667 = vmatprep.subr.bf16.mxu0 0
    %1668 = vmatpush1.bf16.msra.mxu0 %v975
    %1669 = vmatprep.subr.bf16.mxu0 0
    %1670 = vmatpush1.bf16.msra.mxu0 %v978
    %1671 = vmatprep.subr.bf16.mxu0 0
    %1672 = vmatpush1.bf16.msra.mxu0 %v981
    %1673 = vmatprep.subr.bf16.mxu0 0
    %1674 = vmatpush1.bf16.msra.mxu0 %v984
    %1675 = vmatprep.subr.bf16.mxu0 0
    %1676 = vmatpush1.bf16.msra.mxu0 %v987
    %1677 = vmatprep.subr.bf16.mxu0 0
    %1678 = vmatpush1.bf16.msra.mxu0 0
    %1679 = vmatprep.subr.bf16.mxu0 0
    %1680 = vmatpush1.bf16.msra.mxu0 0
    %1681 = vmatprep.subr.bf16.mxu0 0
    %1682 = vmatpush1.bf16.msra.mxu0 0
    %1683 = vmatprep.subr.bf16.mxu0 0
    %1684 = vmatpush1.bf16.msra.mxu0 0
    %1685 = vmatprep.subr.bf16.mxu0 0
    %1686 = vmatpush1.bf16.msra.mxu0 0
    %1687 = vmatprep.subr.bf16.mxu0 0
    %1688 = vmatpush1.bf16.msra.mxu0 0
    %1689 = vmatprep.subr.bf16.mxu0 0
    %1690 = vmatpush1.bf16.msra.mxu0 0
    %1691 = vmatprep.subr.bf16.mxu0 0
    %1692 = vmatpush1.bf16.msra.mxu0 0
    %1693 = vmatprep.mubr.bf16.mxu0 0
    %1694 = vmatmul.mubr.bf16.gmra.mrb[0].mxu0 %v1619
    %v1695 = vpop.f32.mrb[0].mxu0
    %v1696 = vadd.f32 0.0, %v1695
    %v1697 = vpop.f32.mrb[0].mxu0
    %v1698 = vpop.f32.mrb[0].mxu0
    %v1699 = vpop.f32.mrb[0].mxu0
    %1700 = vdwg.mxu0
    %v1701 = vadd.f32 %v1573, %v1655
    %v1702 = vxor.u32 %v1701, 2147483648
    %v1703 = vmul.f32 %v1702, 1.442695
    %v1704 = vpow.pop %v1703
    %v1705 = vadd.f32 %v1704, 1.0
    %v1706 = vrcp.pop %v1705
    %v1707 = vmul.f32 1.0, %v1706
    %v1708 = vadd.f32 %v1575, %v1657
    %v1709 = vxor.u32 %v1708, 2147483648
    %v1710 = vmul.f32 %v1709, 1.442695
    %v1711 = vpow.pop %v1710
    %v1712 = vadd.f32 %v1711, 1.0
    %v1713 = vrcp.pop %v1712
    %v1714 = vmul.f32 1.0, %v1713
    %v1715 = vadd.f32 %v1696, %v441
    %v1716 = vmul.f32 %v1707, %v1715
    %v1717 = vadd.f32 %v1614, %v1716
    %v1718 = vtanh.pop %v1717
    %v1719 = vsub.f32 1.0, %v1714
    %v1720 = vmul.f32 %v1719, %v1718
    %v1721 = vmul.f32 %v1714, %v1418
    %v1722 = vadd.f32 %v1720, %v1721
    %1723 = vmatprep.subr.bf16.mxu0 %v524
    %1724 = vmatpush1.bf16.msra.mxu0 %v523
    %1725 = vmatprep.subr.bf16.mxu0 %v527
    %1726 = vmatpush1.bf16.msra.mxu0 %v526
    %1727 = vmatprep.subr.bf16.mxu0 %v530
    %1728 = vmatpush1.bf16.msra.mxu0 %v529
    %1729 = vmatprep.subr.bf16.mxu0 %v533
    %1730 = vmatpush1.bf16.msra.mxu0 %v532
    %1731 = vmatprep.subr.bf16.mxu0 %v536
    %1732 = vmatpush1.bf16.msra.mxu0 %v535
    %1733 = vmatprep.subr.bf16.mxu0 %v539
    %1734 = vmatpush1.bf16.msra.mxu0 %v538
    %1735 = vmatprep.subr.bf16.mxu0 %v542
    %1736 = vmatpush1.bf16.msra.mxu0 %v541
    %1737 = vmatprep.subr.bf16.mxu0 %v545
    %1738 = vmatpush1.bf16.msra.mxu0 %v544
    %1739 = vmatprep.subr.bf16.mxu0 0
    %1740 = vmatpush1.bf16.msra.mxu0 0
    %1741 = vmatprep.subr.bf16.mxu0 0
    %1742 = vmatpush1.bf16.msra.mxu0 0
    %1743 = vmatprep.subr.bf16.mxu0 0
    %1744 = vmatpush1.bf16.msra.mxu0 0
    %1745 = vmatprep.subr.bf16.mxu0 0
    %1746 = vmatpush1.bf16.msra.mxu0 0
    %1747 = vmatprep.subr.bf16.mxu0 0
    %1748 = vmatpush1.bf16.msra.mxu0 0
    %1749 = vmatprep.subr.bf16.mxu0 0
    %1750 = vmatpush1.bf16.msra.mxu0 0
    %1751 = vmatprep.subr.bf16.mxu0 0
    %1752 = vmatpush1.bf16.msra.mxu0 0
    %1753 = vmatprep.subr.bf16.mxu0 0
    %1754 = vmatpush1.bf16.msra.mxu0 0
    %1755 = vmatprep.mubr.bf16.mxu0 0
    %1756 = vmatmul.mubr.bf16.gmra.mrb[0].mxu0 %v1536
    %v1757 = vpop.f32.mrb[0].mxu0
    %v1758 = vadd.f32 0.0, %v1757
    %v1759 = vpop.f32.mrb[0].mxu0
    %v1760 = vadd.f32 0.0, %v1759
    %v1761 = vpop.f32.mrb[0].mxu0
    %v1762 = vpop.f32.mrb[0].mxu0
    %1763 = vdwg.mxu0
    %1764 = vmatprep.subr.bf16.mxu0 0
    %1765 = vmatpush1.bf16.msra.mxu0 %v525
    %1766 = vmatprep.subr.bf16.mxu0 0
    %1767 = vmatpush1.bf16.msra.mxu0 %v528
    %1768 = vmatprep.subr.bf16.mxu0 0
    %1769 = vmatpush1.bf16.msra.mxu0 %v531
    %1770 = vmatprep.subr.bf16.mxu0 0
    %1771 = vmatpush1.bf16.msra.mxu0 %v534
    %1772 = vmatprep.subr.bf16.mxu0 0
    %1773 = vmatpush1.bf16.msra.mxu0 %v537
    %1774 = vmatprep.subr.bf16.mxu0 0
    %1775 = vmatpush1.bf16.msra.mxu0 %v540
    %1776 = vmatprep.subr.bf16.mxu0 0
    %1777 = vmatpush1.bf16.msra.mxu0 %v543
    %1778 = vmatprep.subr.bf16.mxu0 0
    %1779 = vmatpush1.bf16.msra.mxu0 %v546
    %1780 = vmatprep.subr.bf16.mxu0 0
    %1781 = vmatpush1.bf16.msra.mxu0 0
    %1782 = vmatprep.subr.bf16.mxu0 0
    %1783 = vmatpush1.bf16.msra.mxu0 0
    %1784 = vmatprep.subr.bf16.mxu0 0
    %1785 = vmatpush1.bf16.msra.mxu0 0
    %1786 = vmatprep.subr.bf16.mxu0 0
    %1787 = vmatpush1.bf16.msra.mxu0 0
    %1788 = vmatprep.subr.bf16.mxu0 0
    %1789 = vmatpush1.bf16.msra.mxu0 0
    %1790 = vmatprep.subr.bf16.mxu0 0
    %1791 = vmatpush1.bf16.msra.mxu0 0
    %1792 = vmatprep.subr.bf16.mxu0 0
    %1793 = vmatpush1.bf16.msra.mxu0 0
    %1794 = vmatprep.subr.bf16.mxu0 0
    %1795 = vmatpush1.bf16.msra.mxu0 0
    %1796 = vmatprep.mubr.bf16.mxu0 0
    %1797 = vmatmul.mubr.bf16.gmra.mrb[0].mxu0 %v1536
    %v1798 = vpop.f32.mrb[0].mxu0
    %v1799 = vadd.f32 0.0, %v1798
    %v1800 = vpop.f32.mrb[0].mxu0
    %v1801 = vpop.f32.mrb[0].mxu0
    %v1802 = vpop.f32.mrb[0].mxu0
    %1803 = vdwg.mxu0
    %v1805 = vrot.slane %v1758, 2
    %v1807 = vadd.f32 %v267, %v1805
    %v1808 = vxor.u32 %v1807, 2147483648
    %v1809 = vmul.f32 %v1808, 1.442695
    %v1810 = vpow.pop %v1809
    %v1811 = vadd.f32 %v1810, 1.0
    %v1812 = vrcp.pop %v1811
    %v1813 = vmul.f32 1.0, %v1812
    %v1815 = vrot.slane %v1760, 2
    %v1817 = vadd.f32 %v269, %v1815
    %v1818 = vxor.u32 %v1817, 2147483648
    %v1819 = vmul.f32 %v1818, 1.442695
    %v1820 = vpow.pop %v1819
    %v1821 = vadd.f32 %v1820, 1.0
    %v1822 = vrcp.pop %v1821
    %v1823 = vmul.f32 1.0, %v1822
    %v1824 = vadd.f32 %v1799, %v434
    %v1826 = vrot.slane %v1824, 2
    %v1828 = vmul.f32 %v1813, %v1826
    %v1829 = vadd.f32 %v310, %v1828
    %v1830 = vtanh.pop %v1829
    %v1831 = vsub.f32 1.0, %v1823
    %v1832 = vmul.f32 %v1831, %v1830
    %v1834 = vrot.slane %v1533, 6
    %v1836 = vmul.f32 %v1823, %v1834
    %v1837 = vadd.f32 %v1832, %v1836
    %v1838 = vpack.c.bf16 %v1837, %v1837
    %v1840 = vrot.slane %v1838, 3
    %1842 = vmatprep.subr.bf16.mxu0 %v756
    %1843 = vmatpush1.bf16.msra.mxu0 %v755
    %1844 = vmatprep.subr.bf16.mxu0 %v759
    %1845 = vmatpush1.bf16.msra.mxu0 %v758
    %1846 = vmatprep.subr.bf16.mxu0 %v762
    %1847 = vmatpush1.bf16.msra.mxu0 %v761
    %1848 = vmatprep.subr.bf16.mxu0 %v765
    %1849 = vmatpush1.bf16.msra.mxu0 %v764
    %1850 = vmatprep.subr.bf16.mxu0 %v768
    %1851 = vmatpush1.bf16.msra.mxu0 %v767
    %1852 = vmatprep.subr.bf16.mxu0 %v771
    %1853 = vmatpush1.bf16.msra.mxu0 %v770
    %1854 = vmatprep.subr.bf16.mxu0 %v774
    %1855 = vmatpush1.bf16.msra.mxu0 %v773
    %1856 = vmatprep.subr.bf16.mxu0 %v777
    %1857 = vmatpush1.bf16.msra.mxu0 %v776
    %1858 = vmatprep.subr.bf16.mxu0 0
    %1859 = vmatpush1.bf16.msra.mxu0 0
    %1860 = vmatprep.subr.bf16.mxu0 0
    %1861 = vmatpush1.bf16.msra.mxu0 0
    %1862 = vmatprep.subr.bf16.mxu0 0
    %1863 = vmatpush1.bf16.msra.mxu0 0
    %1864 = vmatprep.subr.bf16.mxu0 0
    %1865 = vmatpush1.bf16.msra.mxu0 0
    %1866 = vmatprep.subr.bf16.mxu0 0
    %1867 = vmatpush1.bf16.msra.mxu0 0
    %1868 = vmatprep.subr.bf16.mxu0 0
    %1869 = vmatpush1.bf16.msra.mxu0 0
    %1870 = vmatprep.subr.bf16.mxu0 0
    %1871 = vmatpush1.bf16.msra.mxu0 0
    %1872 = vmatprep.subr.bf16.mxu0 0
    %1873 = vmatpush1.bf16.msra.mxu0 0
    %1874 = vmatprep.mubr.bf16.mxu0 0
    %1875 = vmatmul.mubr.bf16.gmra.mrb[0].mxu0 %v1840
    %v1876 = vpop.f32.mrb[0].mxu0
    %v1877 = vadd.f32 %v417, %v1876
    %v1878 = vpop.f32.mrb[0].mxu0
    %v1879 = vadd.f32 %v421, %v1878
    %v1880 = vpop.f32.mrb[0].mxu0
    %v1881 = vpop.f32.mrb[0].mxu0
    %1882 = vdwg.mxu0
    %1883 = vmatprep.subr.bf16.mxu0 0
    %1884 = vmatpush1.bf16.msra.mxu0 %v757
    %1885 = vmatprep.subr.bf16.mxu0 0
    %1886 = vmatpush1.bf16.msra.mxu0 %v760
    %1887 = vmatprep.subr.bf16.mxu0 0
    %1888 = vmatpush1.bf16.msra.mxu0 %v763
    %1889 = vmatprep.subr.bf16.mxu0 0
    %1890 = vmatpush1.bf16.msra.mxu0 %v766
    %1891 = vmatprep.subr.bf16.mxu0 0
    %1892 = vmatpush1.bf16.msra.mxu0 %v769
    %1893 = vmatprep.subr.bf16.mxu0 0
    %1894 = vmatpush1.bf16.msra.mxu0 %v772
    %1895 = vmatprep.subr.bf16.mxu0 0
    %1896 = vmatpush1.bf16.msra.mxu0 %v775
    %1897 = vmatprep.subr.bf16.mxu0 0
    %1898 = vmatpush1.bf16.msra.mxu0 %v778
    %1899 = vmatprep.subr.bf16.mxu0 0
    %1900 = vmatpush1.bf16.msra.mxu0 0
    %1901 = vmatprep.subr.bf16.mxu0 0
    %1902 = vmatpush1.bf16.msra.mxu0 0
    %1903 = vmatprep.subr.bf16.mxu0 0
    %1904 = vmatpush1.bf16.msra.mxu0 0
    %1905 = vmatprep.subr.bf16.mxu0 0
    %1906 = vmatpush1.bf16.msra.mxu0 0
    %1907 = vmatprep.subr.bf16.mxu0 0
    %1908 = vmatpush1.bf16.msra.mxu0 0
    %1909 = vmatprep.subr.bf16.mxu0 0
    %1910 = vmatpush1.bf16.msra.mxu0 0
    %1911 = vmatprep.subr.bf16.mxu0 0
    %1912 = vmatpush1.bf16.msra.mxu0 0
    %1913 = vmatprep.subr.bf16.mxu0 0
    %1914 = vmatpush1.bf16.msra.mxu0 0
    %1915 = vmatprep.mubr.bf16.mxu0 0
    %1916 = vmatmul.mubr.bf16.gmra.mrb[0].mxu0 %v1840
    %v1917 = vpop.f32.mrb[0].mxu0
    %v1918 = vadd.f32 %v425, %v1917
    %v1919 = vpop.f32.mrb[0].mxu0
    %v1920 = vpop.f32.mrb[0].mxu0
    %v1921 = vpop.f32.mrb[0].mxu0
    %1922 = vdwg.mxu0
    %v1923 = vpack.c.bf16 %v1722, %v1722
    %1924 = vmatprep.subr.bf16.mxu0 %v965
    %1925 = vmatpush1.bf16.msra.mxu0 %v964
    %1926 = vmatprep.subr.bf16.mxu0 %v968
    %1927 = vmatpush1.bf16.msra.mxu0 %v967
    %1928 = vmatprep.subr.bf16.mxu0 %v971
    %1929 = vmatpush1.bf16.msra.mxu0 %v970
    %1930 = vmatprep.subr.bf16.mxu0 %v974
    %1931 = vmatpush1.bf16.msra.mxu0 %v973
    %1932 = vmatprep.subr.bf16.mxu0 %v977
    %1933 = vmatpush1.bf16.msra.mxu0 %v976
    %1934 = vmatprep.subr.bf16.mxu0 %v980
    %1935 = vmatpush1.bf16.msra.mxu0 %v979
    %1936 = vmatprep.subr.bf16.mxu0 %v983
    %1937 = vmatpush1.bf16.msra.mxu0 %v982
    %1938 = vmatprep.subr.bf16.mxu0 %v986
    %1939 = vmatpush1.bf16.msra.mxu0 %v985
    %1940 = vmatprep.subr.bf16.mxu0 0
    %1941 = vmatpush1.bf16.msra.mxu0 0
    %1942 = vmatprep.subr.bf16.mxu0 0
    %1943 = vmatpush1.bf16.msra.mxu0 0
    %1944 = vmatprep.subr.bf16.mxu0 0
    %1945 = vmatpush1.bf16.msra.mxu0 0
    %1946 = vmatprep.subr.bf16.mxu0 0
    %1947 = vmatpush1.bf16.msra.mxu0 0
    %1948 = vmatprep.subr.bf16.mxu0 0
    %1949 = vmatpush1.bf16.msra.mxu0 0
    %1950 = vmatprep.subr.bf16.mxu0 0
    %1951 = vmatpush1.bf16.msra.mxu0 0
    %1952 = vmatprep.subr.bf16.mxu0 0
    %1953 = vmatpush1.bf16.msra.mxu0 0
    %1954 = vmatprep.subr.bf16.mxu0 0
    %1955 = vmatpush1.bf16.msra.mxu0 0
    %1956 = vmatprep.mubr.bf16.mxu0 0
    %1957 = vmatmul.mubr.bf16.gmra.mrb[0].mxu0 %v1923
    %v1958 = vpop.f32.mrb[0].mxu0
    %v1959 = vadd.f32 0.0, %v1958
    %v1960 = vpop.f32.mrb[0].mxu0
    %v1961 = vadd.f32 0.0, %v1960
    %v1962 = vpop.f32.mrb[0].mxu0
    %v1963 = vpop.f32.mrb[0].mxu0
    %1964 = vdwg.mxu0
    %1965 = vmatprep.subr.bf16.mxu0 0
    %1966 = vmatpush1.bf16.msra.mxu0 %v966
    %1967 = vmatprep.subr.bf16.mxu0 0
    %1968 = vmatpush1.bf16.msra.mxu0 %v969
    %1969 = vmatprep.subr.bf16.mxu0 0
    %1970 = vmatpush1.bf16.msra.mxu0 %v972
    %1971 = vmatprep.subr.bf16.mxu0 0
    %1972 = vmatpush1.bf16.msra.mxu0 %v975
    %1973 = vmatprep.subr.bf16.mxu0 0
    %1974 = vmatpush1.bf16.msra.mxu0 %v978
    %1975 = vmatprep.subr.bf16.mxu0 0
    %1976 = vmatpush1.bf16.msra.mxu0 %v981
    %1977 = vmatprep.subr.bf16.mxu0 0
    %1978 = vmatpush1.bf16.msra.mxu0 %v984
    %1979 = vmatprep.subr.bf16.mxu0 0
    %1980 = vmatpush1.bf16.msra.mxu0 %v987
    %1981 = vmatprep.subr.bf16.mxu0 0
    %1982 = vmatpush1.bf16.msra.mxu0 0
    %1983 = vmatprep.subr.bf16.mxu0 0
    %1984 = vmatpush1.bf16.msra.mxu0 0
    %1985 = vmatprep.subr.bf16.mxu0 0
    %1986 = vmatpush1.bf16.msra.mxu0 0
    %1987 = vmatprep.subr.bf16.mxu0 0
    %1988 = vmatpush1.bf16.msra.mxu0 0
    %1989 = vmatprep.subr.bf16.mxu0 0
    %1990 = vmatpush1.bf16.msra.mxu0 0
    %1991 = vmatprep.subr.bf16.mxu0 0
    %1992 = vmatpush1.bf16.msra.mxu0 0
    %1993 = vmatprep.subr.bf16.mxu0 0
    %1994 = vmatpush1.bf16.msra.mxu0 0
    %1995 = vmatprep.subr.bf16.mxu0 0
    %1996 = vmatpush1.bf16.msra.mxu0 0
    %1997 = vmatprep.mubr.bf16.mxu0 0
    %1998 = vmatmul.mubr.bf16.gmra.mrb[0].mxu0 %v1923
    %v1999 = vpop.f32.mrb[0].mxu0
    %v2000 = vadd.f32 0.0, %v1999
    %v2001 = vpop.f32.mrb[0].mxu0
    %v2002 = vpop.f32.mrb[0].mxu0
    %v2003 = vpop.f32.mrb[0].mxu0
    %2004 = vdwg.mxu0
    %v2005 = vadd.f32 %v1877, %v1959
    %v2006 = vxor.u32 %v2005, 2147483648
    %v2007 = vmul.f32 %v2006, 1.442695
    %v2008 = vpow.pop %v2007
    %v2009 = vadd.f32 %v2008, 1.0
    %v2010 = vrcp.pop %v2009
    %v2011 = vmul.f32 1.0, %v2010
    %v2012 = vadd.f32 %v1879, %v1961
    %v2013 = vxor.u32 %v2012, 2147483648
    %v2014 = vmul.f32 %v2013, 1.442695
    %v2015 = vpow.pop %v2014
    %v2016 = vadd.f32 %v2015, 1.0
    %v2017 = vrcp.pop %v2016
    %v2018 = vmul.f32 1.0, %v2017
    %v2019 = vadd.f32 %v2000, %v441
    %v2020 = vmul.f32 %v2011, %v2019
    %v2021 = vadd.f32 %v1918, %v2020
    %v2022 = vtanh.pop %v2021
    %v2023 = vsub.f32 1.0, %v2018
    %v2024 = vmul.f32 %v2023, %v2022
    %v2025 = vmul.f32 %v2018, %v1722
    %v2026 = vadd.f32 %v2024, %v2025
    %2027 = vmatprep.subr.bf16.mxu0 %v524
    %2028 = vmatpush1.bf16.msra.mxu0 %v523
    %2029 = vmatprep.subr.bf16.mxu0 %v527
    %2030 = vmatpush1.bf16.msra.mxu0 %v526
    %2031 = vmatprep.subr.bf16.mxu0 %v530
    %2032 = vmatpush1.bf16.msra.mxu0 %v529
    %2033 = vmatprep.subr.bf16.mxu0 %v533
    %2034 = vmatpush1.bf16.msra.mxu0 %v532
    %2035 = vmatprep.subr.bf16.mxu0 %v536
    %2036 = vmatpush1.bf16.msra.mxu0 %v535
    %2037 = vmatprep.subr.bf16.mxu0 %v539
    %2038 = vmatpush1.bf16.msra.mxu0 %v538
    %2039 = vmatprep.subr.bf16.mxu0 %v542
    %2040 = vmatpush1.bf16.msra.mxu0 %v541
    %2041 = vmatprep.subr.bf16.mxu0 %v545
    %2042 = vmatpush1.bf16.msra.mxu0 %v544
    %2043 = vmatprep.subr.bf16.mxu0 0
    %2044 = vmatpush1.bf16.msra.mxu0 0
    %2045 = vmatprep.subr.bf16.mxu0 0
    %2046 = vmatpush1.bf16.msra.mxu0 0
    %2047 = vmatprep.subr.bf16.mxu0 0
    %2048 = vmatpush1.bf16.msra.mxu0 0
    %2049 = vmatprep.subr.bf16.mxu0 0
    %2050 = vmatpush1.bf16.msra.mxu0 0
    %2051 = vmatprep.subr.bf16.mxu0 0
    %2052 = vmatpush1.bf16.msra.mxu0 0
    %2053 = vmatprep.subr.bf16.mxu0 0
    %2054 = vmatpush1.bf16.msra.mxu0 0
    %2055 = vmatprep.subr.bf16.mxu0 0
    %2056 = vmatpush1.bf16.msra.mxu0 0
    %2057 = vmatprep.subr.bf16.mxu0 0
    %2058 = vmatpush1.bf16.msra.mxu0 0
    %2059 = vmatprep.mubr.bf16.mxu0 0
    %2060 = vmatmul.mubr.bf16.gmra.mrb[0].mxu0 %v1840
    %v2061 = vpop.f32.mrb[0].mxu0
    %v2062 = vadd.f32 0.0, %v2061
    %v2063 = vpop.f32.mrb[0].mxu0
    %v2064 = vadd.f32 0.0, %v2063
    %v2065 = vpop.f32.mrb[0].mxu0
    %v2066 = vpop.f32.mrb[0].mxu0
    %2067 = vdwg.mxu0
    %2068 = vmatprep.subr.bf16.mxu0 0
    %2069 = vmatpush1.bf16.msra.mxu0 %v525
    %2070 = vmatprep.subr.bf16.mxu0 0
    %2071 = vmatpush1.bf16.msra.mxu0 %v528
    %2072 = vmatprep.subr.bf16.mxu0 0
    %2073 = vmatpush1.bf16.msra.mxu0 %v531
    %2074 = vmatprep.subr.bf16.mxu0 0
    %2075 = vmatpush1.bf16.msra.mxu0 %v534
    %2076 = vmatprep.subr.bf16.mxu0 0
    %2077 = vmatpush1.bf16.msra.mxu0 %v537
    %2078 = vmatprep.subr.bf16.mxu0 0
    %2079 = vmatpush1.bf16.msra.mxu0 %v540
    %2080 = vmatprep.subr.bf16.mxu0 0
    %2081 = vmatpush1.bf16.msra.mxu0 %v543
    %2082 = vmatprep.subr.bf16.mxu0 0
    %2083 = vmatpush1.bf16.msra.mxu0 %v546
    %2084 = vmatprep.subr.bf16.mxu0 0
    %2085 = vmatpush1.bf16.msra.mxu0 0
    %2086 = vmatprep.subr.bf16.mxu0 0
    %2087 = vmatpush1.bf16.msra.mxu0 0
    %2088 = vmatprep.subr.bf16.mxu0 0
    %2089 = vmatpush1.bf16.msra.mxu0 0
    %2090 = vmatprep.subr.bf16.mxu0 0
    %2091 = vmatpush1.bf16.msra.mxu0 0
    %2092 = vmatprep.subr.bf16.mxu0 0
    %2093 = vmatpush1.bf16.msra.mxu0 0
    %2094 = vmatprep.subr.bf16.mxu0 0
    %2095 = vmatpush1.bf16.msra.mxu0 0
    %2096 = vmatprep.subr.bf16.mxu0 0
    %2097 = vmatpush1.bf16.msra.mxu0 0
    %2098 = vmatprep.subr.bf16.mxu0 0
    %2099 = vmatpush1.bf16.msra.mxu0 0
    %2100 = vmatprep.mubr.bf16.mxu0 0
    %2101 = vmatmul.mubr.bf16.gmra.mrb[0].mxu0 %v1840
    %v2102 = vpop.f32.mrb[0].mxu0
    %v2103 = vadd.f32 0.0, %v2102
    %v2104 = vpop.f32.mrb[0].mxu0
    %v2105 = vpop.f32.mrb[0].mxu0
    %v2106 = vpop.f32.mrb[0].mxu0
    %2107 = vdwg.mxu0
    %v2108 = vadd.f32 %v271, %v2062
    %v2109 = vxor.u32 %v2108, 2147483648
    %v2110 = vmul.f32 %v2109, 1.442695
    %v2111 = vpow.pop %v2110
    %v2112 = vadd.f32 %v2111, 1.0
    %v2113 = vrcp.pop %v2112
    %v2114 = vmul.f32 1.0, %v2113
    %v2115 = vadd.f32 %v273, %v2064
    %v2116 = vxor.u32 %v2115, 2147483648
    %v2117 = vmul.f32 %v2116, 1.442695
    %v2118 = vpow.pop %v2117
    %v2119 = vadd.f32 %v2118, 1.0
    %v2120 = vrcp.pop %v2119
    %v2121 = vmul.f32 1.0, %v2120
    %v2122 = vadd.f32 %v2103, %v434
    %v2123 = vmul.f32 %v2114, %v2122
    %v2124 = vadd.f32 %v313, %v2123
    %v2125 = vtanh.pop %v2124
    %v2126 = vsub.f32 1.0, %v2121
    %v2127 = vmul.f32 %v2126, %v2125
    %v2129 = vrot.slane %v1837, 6
    %v2131 = vmul.f32 %v2121, %v2129
    %v2132 = vadd.f32 %v2127, %v2131
    %v2133 = vpack.c.bf16 %v2132, %v2132
    %2134 = vmatprep.subr.bf16.mxu0 %v756
    %2135 = vmatpush1.bf16.msra.mxu0 %v755
    %2136 = vmatprep.subr.bf16.mxu0 %v759
    %2137 = vmatpush1.bf16.msra.mxu0 %v758
    %2138 = vmatprep.subr.bf16.mxu0 %v762
    %2139 = vmatpush1.bf16.msra.mxu0 %v761
    %2140 = vmatprep.subr.bf16.mxu0 %v765
    %2141 = vmatpush1.bf16.msra.mxu0 %v764
    %2142 = vmatprep.subr.bf16.mxu0 %v768
    %2143 = vmatpush1.bf16.msra.mxu0 %v767
    %2144 = vmatprep.subr.bf16.mxu0 %v771
    %2145 = vmatpush1.bf16.msra.mxu0 %v770
    %2146 = vmatprep.subr.bf16.mxu0 %v774
    %2147 = vmatpush1.bf16.msra.mxu0 %v773
    %2148 = vmatprep.subr.bf16.mxu0 %v777
    %2149 = vmatpush1.bf16.msra.mxu0 %v776
    %2150 = vmatprep.subr.bf16.mxu0 0
    %2151 = vmatpush1.bf16.msra.mxu0 0
    %2152 = vmatprep.subr.bf16.mxu0 0
    %2153 = vmatpush1.bf16.msra.mxu0 0
    %2154 = vmatprep.subr.bf16.mxu0 0
    %2155 = vmatpush1.bf16.msra.mxu0 0
    %2156 = vmatprep.subr.bf16.mxu0 0
    %2157 = vmatpush1.bf16.msra.mxu0 0
    %2158 = vmatprep.subr.bf16.mxu0 0
    %2159 = vmatpush1.bf16.msra.mxu0 0
    %2160 = vmatprep.subr.bf16.mxu0 0
    %2161 = vmatpush1.bf16.msra.mxu0 0
    %2162 = vmatprep.subr.bf16.mxu0 0
    %2163 = vmatpush1.bf16.msra.mxu0 0
    %2164 = vmatprep.subr.bf16.mxu0 0
    %2165 = vmatpush1.bf16.msra.mxu0 0
    %2166 = vmatprep.mubr.bf16.mxu0 0
    %2167 = vmatmul.mubr.bf16.gmra.mrb[0].mxu0 %v2133
    %v2168 = vpop.f32.mrb[0].mxu0
    %v2169 = vadd.f32 %v417, %v2168
    %v2170 = vpop.f32.mrb[0].mxu0
    %v2171 = vadd.f32 %v421, %v2170
    %v2172 = vpop.f32.mrb[0].mxu0
    %v2173 = vpop.f32.mrb[0].mxu0
    %2174 = vdwg.mxu0
    %2175 = vmatprep.subr.bf16.mxu0 0
    %2176 = vmatpush1.bf16.msra.mxu0 %v757
    %2177 = vmatprep.subr.bf16.mxu0 0
    %2178 = vmatpush1.bf16.msra.mxu0 %v760
    %2179 = vmatprep.subr.bf16.mxu0 0
    %2180 = vmatpush1.bf16.msra.mxu0 %v763
    %2181 = vmatprep.subr.bf16.mxu0 0
    %2182 = vmatpush1.bf16.msra.mxu0 %v766
    %2183 = vmatprep.subr.bf16.mxu0 0
    %2184 = vmatpush1.bf16.msra.mxu0 %v769
    %2185 = vmatprep.subr.bf16.mxu0 0
    %2186 = vmatpush1.bf16.msra.mxu0 %v772
    %2187 = vmatprep.subr.bf16.mxu0 0
    %2188 = vmatpush1.bf16.msra.mxu0 %v775
    %2189 = vmatprep.subr.bf16.mxu0 0
    %2190 = vmatpush1.bf16.msra.mxu0 %v778
    %2191 = vmatprep.subr.bf16.mxu0 0
    %2192 = vmatpush1.bf16.msra.mxu0 0
    %2193 = vmatprep.subr.bf16.mxu0 0
    %2194 = vmatpush1.bf16.msra.mxu0 0
    %2195 = vmatprep.subr.bf16.mxu0 0
    %2196 = vmatpush1.bf16.msra.mxu0 0
    %2197 = vmatprep.subr.bf16.mxu0 0
    %2198 = vmatpush1.bf16.msra.mxu0 0
    %2199 = vmatprep.subr.bf16.mxu0 0
    %2200 = vmatpush1.bf16.msra.mxu0 0
    %2201 = vmatprep.subr.bf16.mxu0 0
    %2202 = vmatpush1.bf16.msra.mxu0 0
    %2203 = vmatprep.subr.bf16.mxu0 0
    %2204 = vmatpush1.bf16.msra.mxu0 0
    %2205 = vmatprep.subr.bf16.mxu0 0
    %2206 = vmatpush1.bf16.msra.mxu0 0
    %2207 = vmatprep.mubr.bf16.mxu0 0
    %2208 = vmatmul.mubr.bf16.gmra.mrb[0].mxu0 %v2133
    %v2209 = vpop.f32.mrb[0].mxu0
    %v2210 = vadd.f32 %v425, %v2209
    %v2211 = vpop.f32.mrb[0].mxu0
    %v2212 = vpop.f32.mrb[0].mxu0
    %v2213 = vpop.f32.mrb[0].mxu0
    %2214 = vdwg.mxu0
    %v2215 = vpack.c.bf16 %v2026, %v2026
    %2216 = vmatprep.subr.bf16.mxu0 %v965
    %2217 = vmatpush1.bf16.msra.mxu0 %v964
    %2218 = vmatprep.subr.bf16.mxu0 %v968
    %2219 = vmatpush1.bf16.msra.mxu0 %v967
    %2220 = vmatprep.subr.bf16.mxu0 %v971
    %2221 = vmatpush1.bf16.msra.mxu0 %v970
    %2222 = vmatprep.subr.bf16.mxu0 %v974
    %2223 = vmatpush1.bf16.msra.mxu0 %v973
    %2224 = vmatprep.subr.bf16.mxu0 %v977
    %2225 = vmatpush1.bf16.msra.mxu0 %v976
    %2226 = vmatprep.subr.bf16.mxu0 %v980
    %2227 = vmatpush1.bf16.msra.mxu0 %v979
    %2228 = vmatprep.subr.bf16.mxu0 %v983
    %2229 = vmatpush1.bf16.msra.mxu0 %v982
    %2230 = vmatprep.subr.bf16.mxu0 %v986
    %2231 = vmatpush1.bf16.msra.mxu0 %v985
    %2232 = vmatprep.subr.bf16.mxu0 0
    %2233 = vmatpush1.bf16.msra.mxu0 0
    %2234 = vmatprep.subr.bf16.mxu0 0
    %2235 = vmatpush1.bf16.msra.mxu0 0
    %2236 = vmatprep.subr.bf16.mxu0 0
    %2237 = vmatpush1.bf16.msra.mxu0 0
    %2238 = vmatprep.subr.bf16.mxu0 0
    %2239 = vmatpush1.bf16.msra.mxu0 0
    %2240 = vmatprep.subr.bf16.mxu0 0
    %2241 = vmatpush1.bf16.msra.mxu0 0
    %2242 = vmatprep.subr.bf16.mxu0 0
    %2243 = vmatpush1.bf16.msra.mxu0 0
    %2244 = vmatprep.subr.bf16.mxu0 0
    %2245 = vmatpush1.bf16.msra.mxu0 0
    %2246 = vmatprep.subr.bf16.mxu0 0
    %2247 = vmatpush1.bf16.msra.mxu0 0
    %2248 = vmatprep.mubr.bf16.mxu0 0
    %2249 = vmatmul.mubr.bf16.gmra.mrb[0].mxu0 %v2215
    %v2250 = vpop.f32.mrb[0].mxu0
    %v2251 = vadd.f32 0.0, %v2250
    %v2252 = vpop.f32.mrb[0].mxu0
    %v2253 = vadd.f32 0.0, %v2252
    %v2254 = vpop.f32.mrb[0].mxu0
    %v2255 = vpop.f32.mrb[0].mxu0
    %2256 = vdwg.mxu0
    %2257 = vmatprep.subr.bf16.mxu0 0
    %2258 = vmatpush1.bf16.msra.mxu0 %v966
    %2259 = vmatprep.subr.bf16.mxu0 0
    %2260 = vmatpush1.bf16.msra.mxu0 %v969
    %2261 = vmatprep.subr.bf16.mxu0 0
    %2262 = vmatpush1.bf16.msra.mxu0 %v972
    %2263 = vmatprep.subr.bf16.mxu0 0
    %2264 = vmatpush1.bf16.msra.mxu0 %v975
    %2265 = vmatprep.subr.bf16.mxu0 0
    %2266 = vmatpush1.bf16.msra.mxu0 %v978
    %2267 = vmatprep.subr.bf16.mxu0 0
    %2268 = vmatpush1.bf16.msra.mxu0 %v981
    %2269 = vmatprep.subr.bf16.mxu0 0
    %2270 = vmatpush1.bf16.msra.mxu0 %v984
    %2271 = vmatprep.subr.bf16.mxu0 0
    %2272 = vmatpush1.bf16.msra.mxu0 %v987
    %2273 = vmatprep.subr.bf16.mxu0 0
    %2274 = vmatpush1.bf16.msra.mxu0 0
    %2275 = vmatprep.subr.bf16.mxu0 0
    %2276 = vmatpush1.bf16.msra.mxu0 0
    %2277 = vmatprep.subr.bf16.mxu0 0
    %2278 = vmatpush1.bf16.msra.mxu0 0
    %2279 = vmatprep.subr.bf16.mxu0 0
    %2280 = vmatpush1.bf16.msra.mxu0 0
    %2281 = vmatprep.subr.bf16.mxu0 0
    %2282 = vmatpush1.bf16.msra.mxu0 0
    %2283 = vmatprep.subr.bf16.mxu0 0
    %2284 = vmatpush1.bf16.msra.mxu0 0
    %2285 = vmatprep.subr.bf16.mxu0 0
    %2286 = vmatpush1.bf16.msra.mxu0 0
    %2287 = vmatprep.subr.bf16.mxu0 0
    %2288 = vmatpush1.bf16.msra.mxu0 0
    %2289 = vmatprep.mubr.bf16.mxu0 0
    %2290 = vmatmul.mubr.bf16.gmra.mrb[0].mxu0 %v2215
    %v2291 = vpop.f32.mrb[0].mxu0
    %v2292 = vadd.f32 0.0, %v2291
    %v2293 = vpop.f32.mrb[0].mxu0
    %v2294 = vpop.f32.mrb[0].mxu0
    %v2295 = vpop.f32.mrb[0].mxu0
    %2296 = vdwg.mxu0
    %v2297 = vadd.f32 %v2169, %v2251
    %v2298 = vxor.u32 %v2297, 2147483648
    %v2299 = vmul.f32 %v2298, 1.442695
    %v2300 = vpow.pop %v2299
    %v2301 = vadd.f32 %v2300, 1.0
    %v2302 = vrcp.pop %v2301
    %v2303 = vmul.f32 1.0, %v2302
    %v2304 = vadd.f32 %v2171, %v2253
    %v2305 = vxor.u32 %v2304, 2147483648
    %v2306 = vmul.f32 %v2305, 1.442695
    %v2307 = vpow.pop %v2306
    %v2308 = vadd.f32 %v2307, 1.0
    %v2309 = vrcp.pop %v2308
    %v2310 = vmul.f32 1.0, %v2309
    %v2311 = vadd.f32 %v2292, %v441
    %v2312 = vmul.f32 %v2303, %v2311
    %v2313 = vadd.f32 %v2210, %v2312
    %v2314 = vtanh.pop %v2313
    %v2315 = vsub.f32 1.0, %v2310
    %v2316 = vmul.f32 %v2315, %v2314
    %v2317 = vmul.f32 %v2310, %v2026
    %v2318 = vadd.f32 %v2316, %v2317
    %2319 = vmatprep.subr.bf16.mxu0 %v524
    %2320 = vmatpush1.bf16.msra.mxu0 %v523
    %2321 = vmatprep.subr.bf16.mxu0 %v527
    %2322 = vmatpush1.bf16.msra.mxu0 %v526
    %2323 = vmatprep.subr.bf16.mxu0 %v530
    %2324 = vmatpush1.bf16.msra.mxu0 %v529
    %2325 = vmatprep.subr.bf16.mxu0 %v533
    %2326 = vmatpush1.bf16.msra.mxu0 %v532
    %2327 = vmatprep.subr.bf16.mxu0 %v536
    %2328 = vmatpush1.bf16.msra.mxu0 %v535
    %2329 = vmatprep.subr.bf16.mxu0 %v539
    %2330 = vmatpush1.bf16.msra.mxu0 %v538
    %2331 = vmatprep.subr.bf16.mxu0 %v542
    %2332 = vmatpush1.bf16.msra.mxu0 %v541
    %2333 = vmatprep.subr.bf16.mxu0 %v545
    %2334 = vmatpush1.bf16.msra.mxu0 %v544
    %2335 = vmatprep.subr.bf16.mxu0 0
    %2336 = vmatpush1.bf16.msra.mxu0 0
    %2337 = vmatprep.subr.bf16.mxu0 0
    %2338 = vmatpush1.bf16.msra.mxu0 0
    %2339 = vmatprep.subr.bf16.mxu0 0
    %2340 = vmatpush1.bf16.msra.mxu0 0
    %2341 = vmatprep.subr.bf16.mxu0 0
    %2342 = vmatpush1.bf16.msra.mxu0 0
    %2343 = vmatprep.subr.bf16.mxu0 0
    %2344 = vmatpush1.bf16.msra.mxu0 0
    %2345 = vmatprep.subr.bf16.mxu0 0
    %2346 = vmatpush1.bf16.msra.mxu0 0
    %2347 = vmatprep.subr.bf16.mxu0 0
    %2348 = vmatpush1.bf16.msra.mxu0 0
    %2349 = vmatprep.subr.bf16.mxu0 0
    %2350 = vmatpush1.bf16.msra.mxu0 0
    %2351 = vmatprep.mubr.bf16.mxu0 0
    %2352 = vmatmul.mubr.bf16.gmra.mrb[0].mxu0 %v2133
    %v2353 = vpop.f32.mrb[0].mxu0
    %v2354 = vadd.f32 0.0, %v2353
    %v2355 = vpop.f32.mrb[0].mxu0
    %v2356 = vadd.f32 0.0, %v2355
    %v2357 = vpop.f32.mrb[0].mxu0
    %v2358 = vpop.f32.mrb[0].mxu0
    %2359 = vdwg.mxu0
    %2360 = vmatprep.subr.bf16.mxu0 0
    %2361 = vmatpush1.bf16.msra.mxu0 %v525
    %2362 = vmatprep.subr.bf16.mxu0 0
    %2363 = vmatpush1.bf16.msra.mxu0 %v528
    %2364 = vmatprep.subr.bf16.mxu0 0
    %2365 = vmatpush1.bf16.msra.mxu0 %v531
    %2366 = vmatprep.subr.bf16.mxu0 0
    %2367 = vmatpush1.bf16.msra.mxu0 %v534
    %2368 = vmatprep.subr.bf16.mxu0 0
    %2369 = vmatpush1.bf16.msra.mxu0 %v537
    %2370 = vmatprep.subr.bf16.mxu0 0
    %2371 = vmatpush1.bf16.msra.mxu0 %v540
    %2372 = vmatprep.subr.bf16.mxu0 0
    %2373 = vmatpush1.bf16.msra.mxu0 %v543
    %2374 = vmatprep.subr.bf16.mxu0 0
    %2375 = vmatpush1.bf16.msra.mxu0 %v546
    %2376 = vmatprep.subr.bf16.mxu0 0
    %2377 = vmatpush1.bf16.msra.mxu0 0
    %2378 = vmatprep.subr.bf16.mxu0 0
    %2379 = vmatpush1.bf16.msra.mxu0 0
    %2380 = vmatprep.subr.bf16.mxu0 0
    %2381 = vmatpush1.bf16.msra.mxu0 0
    %2382 = vmatprep.subr.bf16.mxu0 0
    %2383 = vmatpush1.bf16.msra.mxu0 0
    %2384 = vmatprep.subr.bf16.mxu0 0
    %2385 = vmatpush1.bf16.msra.mxu0 0
    %2386 = vmatprep.subr.bf16.mxu0 0
    %2387 = vmatpush1.bf16.msra.mxu0 0
    %2388 = vmatprep.subr.bf16.mxu0 0
    %2389 = vmatpush1.bf16.msra.mxu0 0
    %2390 = vmatprep.subr.bf16.mxu0 0
    %2391 = vmatpush1.bf16.msra.mxu0 0
    %2392 = vmatprep.mubr.bf16.mxu0 0
    %2393 = vmatmul.mubr.bf16.gmra.mrb[0].mxu0 %v2133
    %v2394 = vpop.f32.mrb[0].mxu0
    %v2395 = vadd.f32 0.0, %v2394
    %v2396 = vpop.f32.mrb[0].mxu0
    %v2397 = vpop.f32.mrb[0].mxu0
    %v2398 = vpop.f32.mrb[0].mxu0
    %2399 = vdwg.mxu0
    %v2401 = vrot.slane %v2354, 6
    %v2403 = vadd.f32 %v271, %v2401
    %v2404 = vxor.u32 %v2403, 2147483648
    %v2405 = vmul.f32 %v2404, 1.442695
    %v2406 = vpow.pop %v2405
    %v2407 = vadd.f32 %v2406, 1.0
    %v2408 = vrcp.pop %v2407
    %v2409 = vmul.f32 1.0, %v2408
    %v2411 = vrot.slane %v2356, 6
    %v2413 = vadd.f32 %v273, %v2411
    %v2414 = vxor.u32 %v2413, 2147483648
    %v2415 = vmul.f32 %v2414, 1.442695
    %v2416 = vpow.pop %v2415
    %v2417 = vadd.f32 %v2416, 1.0
    %v2418 = vrcp.pop %v2417
    %v2419 = vmul.f32 1.0, %v2418
    %v2420 = vadd.f32 %v2395, %v434
    %v2422 = vrot.slane %v2420, 6
    %v2424 = vmul.f32 %v2409, %v2422
    %v2425 = vadd.f32 %v313, %v2424
    %v2426 = vtanh.pop %v2425
    %v2427 = vsub.f32 1.0, %v2419
    %v2428 = vmul.f32 %v2427, %v2426
    %v2430 = vrot.slane %v2132, 6
    %v2432 = vmul.f32 %v2419, %v2430
    %v2433 = vadd.f32 %v2428, %v2432
    %v2434 = vpack.c.bf16 %v2433, %v2433
    %v2436 = vrot.slane %v2434, 1
    %2438 = vmatprep.subr.bf16.mxu0 %v756
    %2439 = vmatpush1.bf16.msra.mxu0 %v755
    %2440 = vmatprep.subr.bf16.mxu0 %v759
    %2441 = vmatpush1.bf16.msra.mxu0 %v758
    %2442 = vmatprep.subr.bf16.mxu0 %v762
    %2443 = vmatpush1.bf16.msra.mxu0 %v761
    %2444 = vmatprep.subr.bf16.mxu0 %v765
    %2445 = vmatpush1.bf16.msra.mxu0 %v764
    %2446 = vmatprep.subr.bf16.mxu0 %v768
    %2447 = vmatpush1.bf16.msra.mxu0 %v767
    %2448 = vmatprep.subr.bf16.mxu0 %v771
    %2449 = vmatpush1.bf16.msra.mxu0 %v770
    %2450 = vmatprep.subr.bf16.mxu0 %v774
    %2451 = vmatpush1.bf16.msra.mxu0 %v773
    %2452 = vmatprep.subr.bf16.mxu0 %v777
    %2453 = vmatpush1.bf16.msra.mxu0 %v776
    %2454 = vmatprep.subr.bf16.mxu0 0
    %2455 = vmatpush1.bf16.msra.mxu0 0
    %2456 = vmatprep.subr.bf16.mxu0 0
    %2457 = vmatpush1.bf16.msra.mxu0 0
    %2458 = vmatprep.subr.bf16.mxu0 0
    %2459 = vmatpush1.bf16.msra.mxu0 0
    %2460 = vmatprep.subr.bf16.mxu0 0
    %2461 = vmatpush1.bf16.msra.mxu0 0
    %2462 = vmatprep.subr.bf16.mxu0 0
    %2463 = vmatpush1.bf16.msra.mxu0 0
    %2464 = vmatprep.subr.bf16.mxu0 0
    %2465 = vmatpush1.bf16.msra.mxu0 0
    %2466 = vmatprep.subr.bf16.mxu0 0
    %2467 = vmatpush1.bf16.msra.mxu0 0
    %2468 = vmatprep.subr.bf16.mxu0 0
    %2469 = vmatpush1.bf16.msra.mxu0 0
    %2470 = vmatprep.mubr.bf16.mxu0 0
    %2471 = vmatmul.mubr.bf16.gmra.mrb[0].mxu0 %v2436
    %v2472 = vpop.f32.mrb[0].mxu0
    %v2473 = vadd.f32 %v417, %v2472
    %v2474 = vpop.f32.mrb[0].mxu0
    %v2475 = vadd.f32 %v421, %v2474
    %v2476 = vpop.f32.mrb[0].mxu0
    %v2477 = vpop.f32.mrb[0].mxu0
    %2478 = vdwg.mxu0
    %2479 = vmatprep.subr.bf16.mxu0 0
    %2480 = vmatpush1.bf16.msra.mxu0 %v757
    %2481 = vmatprep.subr.bf16.mxu0 0
    %2482 = vmatpush1.bf16.msra.mxu0 %v760
    %2483 = vmatprep.subr.bf16.mxu0 0
    %2484 = vmatpush1.bf16.msra.mxu0 %v763
    %2485 = vmatprep.subr.bf16.mxu0 0
    %2486 = vmatpush1.bf16.msra.mxu0 %v766
    %2487 = vmatprep.subr.bf16.mxu0 0
    %2488 = vmatpush1.bf16.msra.mxu0 %v769
    %2489 = vmatprep.subr.bf16.mxu0 0
    %2490 = vmatpush1.bf16.msra.mxu0 %v772
    %2491 = vmatprep.subr.bf16.mxu0 0
    %2492 = vmatpush1.bf16.msra.mxu0 %v775
    %2493 = vmatprep.subr.bf16.mxu0 0
    %2494 = vmatpush1.bf16.msra.mxu0 %v778
    %2495 = vmatprep.subr.bf16.mxu0 0
    %2496 = vmatpush1.bf16.msra.mxu0 0
    %2497 = vmatprep.subr.bf16.mxu0 0
    %2498 = vmatpush1.bf16.msra.mxu0 0
    %2499 = vmatprep.subr.bf16.mxu0 0
    %2500 = vmatpush1.bf16.msra.mxu0 0
    %2501 = vmatprep.subr.bf16.mxu0 0
    %2502 = vmatpush1.bf16.msra.mxu0 0
    %2503 = vmatprep.subr.bf16.mxu0 0
    %2504 = vmatpush1.bf16.msra.mxu0 0
    %2505 = vmatprep.subr.bf16.mxu0 0
    %2506 = vmatpush1.bf16.msra.mxu0 0
    %2507 = vmatprep.subr.bf16.mxu0 0
    %2508 = vmatpush1.bf16.msra.mxu0 0
    %2509 = vmatprep.subr.bf16.mxu0 0
    %2510 = vmatpush1.bf16.msra.mxu0 0
    %2511 = vmatprep.mubr.bf16.mxu0 0
    %2512 = vmatmul.mubr.bf16.gmra.mrb[0].mxu0 %v2436
    %v2513 = vpop.f32.mrb[0].mxu0
    %v2514 = vadd.f32 %v425, %v2513
    %v2515 = vpop.f32.mrb[0].mxu0
    %v2516 = vpop.f32.mrb[0].mxu0
    %v2517 = vpop.f32.mrb[0].mxu0
    %2518 = vdwg.mxu0
    %v2519 = vpack.c.bf16 %v2318, %v2318
    %2520 = vmatprep.subr.bf16.mxu0 %v965
    %2521 = vmatpush1.bf16.msra.mxu0 %v964
    %2522 = vmatprep.subr.bf16.mxu0 %v968
    %2523 = vmatpush1.bf16.msra.mxu0 %v967
    %2524 = vmatprep.subr.bf16.mxu0 %v971
    %2525 = vmatpush1.bf16.msra.mxu0 %v970
    %2526 = vmatprep.subr.bf16.mxu0 %v974
    %2527 = vmatpush1.bf16.msra.mxu0 %v973
    %2528 = vmatprep.subr.bf16.mxu0 %v977
    %2529 = vmatpush1.bf16.msra.mxu0 %v976
    %2530 = vmatprep.subr.bf16.mxu0 %v980
    %2531 = vmatpush1.bf16.msra.mxu0 %v979
    %2532 = vmatprep.subr.bf16.mxu0 %v983
    %2533 = vmatpush1.bf16.msra.mxu0 %v982
    %2534 = vmatprep.subr.bf16.mxu0 %v986
    %2535 = vmatpush1.bf16.msra.mxu0 %v985
    %2536 = vmatprep.subr.bf16.mxu0 0
    %2537 = vmatpush1.bf16.msra.mxu0 0
    %2538 = vmatprep.subr.bf16.mxu0 0
    %2539 = vmatpush1.bf16.msra.mxu0 0
    %2540 = vmatprep.subr.bf16.mxu0 0
    %2541 = vmatpush1.bf16.msra.mxu0 0
    %2542 = vmatprep.subr.bf16.mxu0 0
    %2543 = vmatpush1.bf16.msra.mxu0 0
    %2544 = vmatprep.subr.bf16.mxu0 0
    %2545 = vmatpush1.bf16.msra.mxu0 0
    %2546 = vmatprep.subr.bf16.mxu0 0
    %2547 = vmatpush1.bf16.msra.mxu0 0
    %2548 = vmatprep.subr.bf16.mxu0 0
    %2549 = vmatpush1.bf16.msra.mxu0 0
    %2550 = vmatprep.subr.bf16.mxu0 0
    %2551 = vmatpush1.bf16.msra.mxu0 0
    %2552 = vmatprep.mubr.bf16.mxu0 0
    %2553 = vmatmul.mubr.bf16.gmra.mrb[0].mxu0 %v2519
    %v2554 = vpop.f32.mrb[0].mxu0
    %v2555 = vadd.f32 0.0, %v2554
    %v2556 = vpop.f32.mrb[0].mxu0
    %v2557 = vadd.f32 0.0, %v2556
    %v2558 = vpop.f32.mrb[0].mxu0
    %v2559 = vpop.f32.mrb[0].mxu0
    %2560 = vdwg.mxu0
    %2561 = vmatprep.subr.bf16.mxu0 0
    %2562 = vmatpush1.bf16.msra.mxu0 %v966
    %2563 = vmatprep.subr.bf16.mxu0 0
    %2564 = vmatpush1.bf16.msra.mxu0 %v969
    %2565 = vmatprep.subr.bf16.mxu0 0
    %2566 = vmatpush1.bf16.msra.mxu0 %v972
    %2567 = vmatprep.subr.bf16.mxu0 0
    %2568 = vmatpush1.bf16.msra.mxu0 %v975
    %2569 = vmatprep.subr.bf16.mxu0 0
    %2570 = vmatpush1.bf16.msra.mxu0 %v978
    %2571 = vmatprep.subr.bf16.mxu0 0
    %2572 = vmatpush1.bf16.msra.mxu0 %v981
    %2573 = vmatprep.subr.bf16.mxu0 0
    %2574 = vmatpush1.bf16.msra.mxu0 %v984
    %2575 = vmatprep.subr.bf16.mxu0 0
    %2576 = vmatpush1.bf16.msra.mxu0 %v987
    %2577 = vmatprep.subr.bf16.mxu0 0
    %2578 = vmatpush1.bf16.msra.mxu0 0
    %2579 = vmatprep.subr.bf16.mxu0 0
    %2580 = vmatpush1.bf16.msra.mxu0 0
    %2581 = vmatprep.subr.bf16.mxu0 0
    %2582 = vmatpush1.bf16.msra.mxu0 0
    %2583 = vmatprep.subr.bf16.mxu0 0
    %2584 = vmatpush1.bf16.msra.mxu0 0
    %2585 = vmatprep.subr.bf16.mxu0 0
    %2586 = vmatpush1.bf16.msra.mxu0 0
    %2587 = vmatprep.subr.bf16.mxu0 0
    %2588 = vmatpush1.bf16.msra.mxu0 0
    %2589 = vmatprep.subr.bf16.mxu0 0
    %2590 = vmatpush1.bf16.msra.mxu0 0
    %2591 = vmatprep.subr.bf16.mxu0 0
    %2592 = vmatpush1.bf16.msra.mxu0 0
    %2593 = vmatprep.mubr.bf16.mxu0 0
    %2594 = vmatmul.mubr.bf16.gmra.mrb[0].mxu0 %v2519
    %v2595 = vpop.f32.mrb[0].mxu0
    %v2596 = vadd.f32 0.0, %v2595
    %v2597 = vpop.f32.mrb[0].mxu0
    %v2598 = vpop.f32.mrb[0].mxu0
    %v2599 = vpop.f32.mrb[0].mxu0
    %2600 = vdwg.mxu0
    %v2601 = vadd.f32 %v2473, %v2555
    %v2602 = vxor.u32 %v2601, 2147483648
    %v2603 = vmul.f32 %v2602, 1.442695
    %v2604 = vpow.pop %v2603
    %v2605 = vadd.f32 %v2604, 1.0
    %v2606 = vrcp.pop %v2605
    %v2607 = vmul.f32 1.0, %v2606
    %v2608 = vadd.f32 %v2475, %v2557
    %v2609 = vxor.u32 %v2608, 2147483648
    %v2610 = vmul.f32 %v2609, 1.442695
    %v2611 = vpow.pop %v2610
    %v2612 = vadd.f32 %v2611, 1.0
    %v2613 = vrcp.pop %v2612
    %v2614 = vmul.f32 1.0, %v2613
    %v2615 = vadd.f32 %v2596, %v441
    %v2616 = vmul.f32 %v2607, %v2615
    %v2617 = vadd.f32 %v2514, %v2616
    %v2618 = vtanh.pop %v2617
    %v2619 = vsub.f32 1.0, %v2614
    %v2620 = vmul.f32 %v2619, %v2618
    %v2621 = vmul.f32 %v2614, %v2318
    %v2622 = vadd.f32 %v2620, %v2621
    %2623 = vmatprep.subr.bf16.mxu0 %v524
    %2624 = vmatpush1.bf16.msra.mxu0 %v523
    %2625 = vmatprep.subr.bf16.mxu0 %v527
    %2626 = vmatpush1.bf16.msra.mxu0 %v526
    %2627 = vmatprep.subr.bf16.mxu0 %v530
    %2628 = vmatpush1.bf16.msra.mxu0 %v529
    %2629 = vmatprep.subr.bf16.mxu0 %v533
    %2630 = vmatpush1.bf16.msra.mxu0 %v532
    %2631 = vmatprep.subr.bf16.mxu0 %v536
    %2632 = vmatpush1.bf16.msra.mxu0 %v535
    %2633 = vmatprep.subr.bf16.mxu0 %v539
    %2634 = vmatpush1.bf16.msra.mxu0 %v538
    %2635 = vmatprep.subr.bf16.mxu0 %v542
    %2636 = vmatpush1.bf16.msra.mxu0 %v541
    %2637 = vmatprep.subr.bf16.mxu0 %v545
    %2638 = vmatpush1.bf16.msra.mxu0 %v544
    %2639 = vmatprep.subr.bf16.mxu0 0
    %2640 = vmatpush1.bf16.msra.mxu0 0
    %2641 = vmatprep.subr.bf16.mxu0 0
    %2642 = vmatpush1.bf16.msra.mxu0 0
    %2643 = vmatprep.subr.bf16.mxu0 0
    %2644 = vmatpush1.bf16.msra.mxu0 0
    %2645 = vmatprep.subr.bf16.mxu0 0
    %2646 = vmatpush1.bf16.msra.mxu0 0
    %2647 = vmatprep.subr.bf16.mxu0 0
    %2648 = vmatpush1.bf16.msra.mxu0 0
    %2649 = vmatprep.subr.bf16.mxu0 0
    %2650 = vmatpush1.bf16.msra.mxu0 0
    %2651 = vmatprep.subr.bf16.mxu0 0
    %2652 = vmatpush1.bf16.msra.mxu0 0
    %2653 = vmatprep.subr.bf16.mxu0 0
    %2654 = vmatpush1.bf16.msra.mxu0 0
    %2655 = vmatprep.mubr.bf16.mxu0 0
    %2656 = vmatmul.mubr.bf16.gmra.mrb[0].mxu0 %v2436
    %v2657 = vpop.f32.mrb[0].mxu0
    %v2658 = vadd.f32 0.0, %v2657
    %v2659 = vpop.f32.mrb[0].mxu0
    %v2660 = vadd.f32 0.0, %v2659
    %v2661 = vpop.f32.mrb[0].mxu0
    %v2662 = vpop.f32.mrb[0].mxu0
    %2663 = vdwg.mxu0
    %2664 = vmatprep.subr.bf16.mxu0 0
    %2665 = vmatpush1.bf16.msra.mxu0 %v525
    %2666 = vmatprep.subr.bf16.mxu0 0
    %2667 = vmatpush1.bf16.msra.mxu0 %v528
    %2668 = vmatprep.subr.bf16.mxu0 0
    %2669 = vmatpush1.bf16.msra.mxu0 %v531
    %2670 = vmatprep.subr.bf16.mxu0 0
    %2671 = vmatpush1.bf16.msra.mxu0 %v534
    %2672 = vmatprep.subr.bf16.mxu0 0
    %2673 = vmatpush1.bf16.msra.mxu0 %v537
    %2674 = vmatprep.subr.bf16.mxu0 0
    %2675 = vmatpush1.bf16.msra.mxu0 %v540
    %2676 = vmatprep.subr.bf16.mxu0 0
    %2677 = vmatpush1.bf16.msra.mxu0 %v543
    %2678 = vmatprep.subr.bf16.mxu0 0
    %2679 = vmatpush1.bf16.msra.mxu0 %v546
    %2680 = vmatprep.subr.bf16.mxu0 0
    %2681 = vmatpush1.bf16.msra.mxu0 0
    %2682 = vmatprep.subr.bf16.mxu0 0
    %2683 = vmatpush1.bf16.msra.mxu0 0
    %2684 = vmatprep.subr.bf16.mxu0 0
    %2685 = vmatpush1.bf16.msra.mxu0 0
    %2686 = vmatprep.subr.bf16.mxu0 0
    %2687 = vmatpush1.bf16.msra.mxu0 0
    %2688 = vmatprep.subr.bf16.mxu0 0
    %2689 = vmatpush1.bf16.msra.mxu0 0
    %2690 = vmatprep.subr.bf16.mxu0 0
    %2691 = vmatpush1.bf16.msra.mxu0 0
    %2692 = vmatprep.subr.bf16.mxu0 0
    %2693 = vmatpush1.bf16.msra.mxu0 0
    %2694 = vmatprep.subr.bf16.mxu0 0
    %2695 = vmatpush1.bf16.msra.mxu0 0
    %2696 = vmatprep.mubr.bf16.mxu0 0
    %2697 = vmatmul.mubr.bf16.gmra.mrb[0].mxu0 %v2436
    %v2698 = vpop.f32.mrb[0].mxu0
    %v2699 = vadd.f32 0.0, %v2698
    %v2700 = vpop.f32.mrb[0].mxu0
    %v2701 = vpop.f32.mrb[0].mxu0
    %v2702 = vpop.f32.mrb[0].mxu0
    %2703 = vdwg.mxu0
    %v2705 = vrot.slane %v2658, 4
    %v2707 = vadd.f32 %v271, %v2705
    %v2708 = vxor.u32 %v2707, 2147483648
    %v2709 = vmul.f32 %v2708, 1.442695
    %v2710 = vpow.pop %v2709
    %v2711 = vadd.f32 %v2710, 1.0
    %v2712 = vrcp.pop %v2711
    %v2713 = vmul.f32 1.0, %v2712
    %v2715 = vrot.slane %v2660, 4
    %v2717 = vadd.f32 %v273, %v2715
    %v2718 = vxor.u32 %v2717, 2147483648
    %v2719 = vmul.f32 %v2718, 1.442695
    %v2720 = vpow.pop %v2719
    %v2721 = vadd.f32 %v2720, 1.0
    %v2722 = vrcp.pop %v2721
    %v2723 = vmul.f32 1.0, %v2722
    %v2724 = vadd.f32 %v2699, %v434
    %v2726 = vrot.slane %v2724, 4
    %v2728 = vmul.f32 %v2713, %v2726
    %v2729 = vadd.f32 %v313, %v2728
    %v2730 = vtanh.pop %v2729
    %v2731 = vsub.f32 1.0, %v2723
    %v2732 = vmul.f32 %v2731, %v2730
    %v2734 = vrot.slane %v2433, 6
    %v2736 = vmul.f32 %v2723, %v2734
    %v2737 = vadd.f32 %v2732, %v2736
    %v2738 = vpack.c.bf16 %v2737, %v2737
    %v2740 = vrot.slane %v2738, 2
    %2742 = vmatprep.subr.bf16.mxu0 %v756
    %2743 = vmatpush1.bf16.msra.mxu0 %v755
    %2744 = vmatprep.subr.bf16.mxu0 %v759
    %2745 = vmatpush1.bf16.msra.mxu0 %v758
    %2746 = vmatprep.subr.bf16.mxu0 %v762
    %2747 = vmatpush1.bf16.msra.mxu0 %v761
    %2748 = vmatprep.subr.bf16.mxu0 %v765
    %2749 = vmatpush1.bf16.msra.mxu0 %v764
    %2750 = vmatprep.subr.bf16.mxu0 %v768
    %2751 = vmatpush1.bf16.msra.mxu0 %v767
    %2752 = vmatprep.subr.bf16.mxu0 %v771
    %2753 = vmatpush1.bf16.msra.mxu0 %v770
    %2754 = vmatprep.subr.bf16.mxu0 %v774
    %2755 = vmatpush1.bf16.msra.mxu0 %v773
    %2756 = vmatprep.subr.bf16.mxu0 %v777
    %2757 = vmatpush1.bf16.msra.mxu0 %v776
    %2758 = vmatprep.subr.bf16.mxu0 0
    %2759 = vmatpush1.bf16.msra.mxu0 0
    %2760 = vmatprep.subr.bf16.mxu0 0
    %2761 = vmatpush1.bf16.msra.mxu0 0
    %2762 = vmatprep.subr.bf16.mxu0 0
    %2763 = vmatpush1.bf16.msra.mxu0 0
    %2764 = vmatprep.subr.bf16.mxu0 0
    %2765 = vmatpush1.bf16.msra.mxu0 0
    %2766 = vmatprep.subr.bf16.mxu0 0
    %2767 = vmatpush1.bf16.msra.mxu0 0
    %2768 = vmatprep.subr.bf16.mxu0 0
    %2769 = vmatpush1.bf16.msra.mxu0 0
    %2770 = vmatprep.subr.bf16.mxu0 0
    %2771 = vmatpush1.bf16.msra.mxu0 0
    %2772 = vmatprep.subr.bf16.mxu0 0
    %2773 = vmatpush1.bf16.msra.mxu0 0
    %2774 = vmatprep.mubr.bf16.mxu0 0
    %2775 = vmatmul.mubr.bf16.gmra.mrb[0].mxu0 %v2740
    %v2776 = vpop.f32.mrb[0].mxu0
    %v2777 = vadd.f32 %v417, %v2776
    %v2778 = vpop.f32.mrb[0].mxu0
    %v2779 = vadd.f32 %v421, %v2778
    %v2780 = vpop.f32.mrb[0].mxu0
    %v2781 = vpop.f32.mrb[0].mxu0
    %2782 = vdwg.mxu0
    %2783 = vmatprep.subr.bf16.mxu0 0
    %2784 = vmatpush1.bf16.msra.mxu0 %v757
    %2785 = vmatprep.subr.bf16.mxu0 0
    %2786 = vmatpush1.bf16.msra.mxu0 %v760
    %2787 = vmatprep.subr.bf16.mxu0 0
    %2788 = vmatpush1.bf16.msra.mxu0 %v763
    %2789 = vmatprep.subr.bf16.mxu0 0
    %2790 = vmatpush1.bf16.msra.mxu0 %v766
    %2791 = vmatprep.subr.bf16.mxu0 0
    %2792 = vmatpush1.bf16.msra.mxu0 %v769
    %2793 = vmatprep.subr.bf16.mxu0 0
    %2794 = vmatpush1.bf16.msra.mxu0 %v772
    %2795 = vmatprep.subr.bf16.mxu0 0
    %2796 = vmatpush1.bf16.msra.mxu0 %v775
    %2797 = vmatprep.subr.bf16.mxu0 0
    %2798 = vmatpush1.bf16.msra.mxu0 %v778
    %2799 = vmatprep.subr.bf16.mxu0 0
    %2800 = vmatpush1.bf16.msra.mxu0 0
    %2801 = vmatprep.subr.bf16.mxu0 0
    %2802 = vmatpush1.bf16.msra.mxu0 0
    %2803 = vmatprep.subr.bf16.mxu0 0
    %2804 = vmatpush1.bf16.msra.mxu0 0
    %2805 = vmatprep.subr.bf16.mxu0 0
    %2806 = vmatpush1.bf16.msra.mxu0 0
    %2807 = vmatprep.subr.bf16.mxu0 0
    %2808 = vmatpush1.bf16.msra.mxu0 0
    %2809 = vmatprep.subr.bf16.mxu0 0
    %2810 = vmatpush1.bf16.msra.mxu0 0
    %2811 = vmatprep.subr.bf16.mxu0 0
    %2812 = vmatpush1.bf16.msra.mxu0 0
    %2813 = vmatprep.subr.bf16.mxu0 0
    %2814 = vmatpush1.bf16.msra.mxu0 0
    %2815 = vmatprep.mubr.bf16.mxu0 0
    %2816 = vmatmul.mubr.bf16.gmra.mrb[0].mxu0 %v2740
    %v2817 = vpop.f32.mrb[0].mxu0
    %v2818 = vadd.f32 %v425, %v2817
    %v2819 = vpop.f32.mrb[0].mxu0
    %v2820 = vpop.f32.mrb[0].mxu0
    %v2821 = vpop.f32.mrb[0].mxu0
    %2822 = vdwg.mxu0
    %v2823 = vpack.c.bf16 %v2622, %v2622
    %2824 = vmatprep.subr.bf16.mxu0 %v965
    %2825 = vmatpush1.bf16.msra.mxu0 %v964
    %2826 = vmatprep.subr.bf16.mxu0 %v968
    %2827 = vmatpush1.bf16.msra.mxu0 %v967
    %2828 = vmatprep.subr.bf16.mxu0 %v971
    %2829 = vmatpush1.bf16.msra.mxu0 %v970
    %2830 = vmatprep.subr.bf16.mxu0 %v974
    %2831 = vmatpush1.bf16.msra.mxu0 %v973
    %2832 = vmatprep.subr.bf16.mxu0 %v977
    %2833 = vmatpush1.bf16.msra.mxu0 %v976
    %2834 = vmatprep.subr.bf16.mxu0 %v980
    %2835 = vmatpush1.bf16.msra.mxu0 %v979
    %2836 = vmatprep.subr.bf16.mxu0 %v983
    %2837 = vmatpush1.bf16.msra.mxu0 %v982
    %2838 = vmatprep.subr.bf16.mxu0 %v986
    %2839 = vmatpush1.bf16.msra.mxu0 %v985
    %2840 = vmatprep.subr.bf16.mxu0 0
    %2841 = vmatpush1.bf16.msra.mxu0 0
    %2842 = vmatprep.subr.bf16.mxu0 0
    %2843 = vmatpush1.bf16.msra.mxu0 0
    %2844 = vmatprep.subr.bf16.mxu0 0
    %2845 = vmatpush1.bf16.msra.mxu0 0
    %2846 = vmatprep.subr.bf16.mxu0 0
    %2847 = vmatpush1.bf16.msra.mxu0 0
    %2848 = vmatprep.subr.bf16.mxu0 0
    %2849 = vmatpush1.bf16.msra.mxu0 0
    %2850 = vmatprep.subr.bf16.mxu0 0
    %2851 = vmatpush1.bf16.msra.mxu0 0
    %2852 = vmatprep.subr.bf16.mxu0 0
    %2853 = vmatpush1.bf16.msra.mxu0 0
    %2854 = vmatprep.subr.bf16.mxu0 0
    %2855 = vmatpush1.bf16.msra.mxu0 0
    %2856 = vmatprep.mubr.bf16.mxu0 0
    %2857 = vmatmul.mubr.bf16.gmra.mrb[0].mxu0 %v2823
    %v2858 = vpop.f32.mrb[0].mxu0
    %v2859 = vadd.f32 0.0, %v2858
    %v2860 = vpop.f32.mrb[0].mxu0
    %v2861 = vadd.f32 0.0, %v2860
    %v2862 = vpop.f32.mrb[0].mxu0
    %v2863 = vpop.f32.mrb[0].mxu0
    %2864 = vdwg.mxu0
    %2865 = vmatprep.subr.bf16.mxu0 0
    %2866 = vmatpush1.bf16.msra.mxu0 %v966
    %2867 = vmatprep.subr.bf16.mxu0 0
    %2868 = vmatpush1.bf16.msra.mxu0 %v969
    %2869 = vmatprep.subr.bf16.mxu0 0
    %2870 = vmatpush1.bf16.msra.mxu0 %v972
    %2871 = vmatprep.subr.bf16.mxu0 0
    %2872 = vmatpush1.bf16.msra.mxu0 %v975
    %2873 = vmatprep.subr.bf16.mxu0 0
    %2874 = vmatpush1.bf16.msra.mxu0 %v978
    %2875 = vmatprep.subr.bf16.mxu0 0
    %2876 = vmatpush1.bf16.msra.mxu0 %v981
    %2877 = vmatprep.subr.bf16.mxu0 0
    %2878 = vmatpush1.bf16.msra.mxu0 %v984
    %2879 = vmatprep.subr.bf16.mxu0 0
    %2880 = vmatpush1.bf16.msra.mxu0 %v987
    %2881 = vmatprep.subr.bf16.mxu0 0
    %2882 = vmatpush1.bf16.msra.mxu0 0
    %2883 = vmatprep.subr.bf16.mxu0 0
    %2884 = vmatpush1.bf16.msra.mxu0 0
    %2885 = vmatprep.subr.bf16.mxu0 0
    %2886 = vmatpush1.bf16.msra.mxu0 0
    %2887 = vmatprep.subr.bf16.mxu0 0
    %2888 = vmatpush1.bf16.msra.mxu0 0
    %2889 = vmatprep.subr.bf16.mxu0 0
    %2890 = vmatpush1.bf16.msra.mxu0 0
    %2891 = vmatprep.subr.bf16.mxu0 0
    %2892 = vmatpush1.bf16.msra.mxu0 0
    %2893 = vmatprep.subr.bf16.mxu0 0
    %2894 = vmatpush1.bf16.msra.mxu0 0
    %2895 = vmatprep.subr.bf16.mxu0 0
    %2896 = vmatpush1.bf16.msra.mxu0 0
    %2897 = vmatprep.mubr.bf16.mxu0 0
    %2898 = vmatmul.mubr.bf16.gmra.mrb[0].mxu0 %v2823
    %v2899 = vpop.f32.mrb[0].mxu0
    %v2900 = vadd.f32 0.0, %v2899
    %v2901 = vpop.f32.mrb[0].mxu0
    %v2902 = vpop.f32.mrb[0].mxu0
    %v2903 = vpop.f32.mrb[0].mxu0
    %2904 = vdwg.mxu0
    %v2905 = vadd.f32 %v2777, %v2859
    %v2906 = vxor.u32 %v2905, 2147483648
    %v2907 = vmul.f32 %v2906, 1.442695
    %v2908 = vpow.pop %v2907
    %v2909 = vadd.f32 %v2908, 1.0
    %v2910 = vrcp.pop %v2909
    %v2911 = vmul.f32 1.0, %v2910
    %v2912 = vadd.f32 %v2779, %v2861
    %v2913 = vxor.u32 %v2912, 2147483648
    %v2914 = vmul.f32 %v2913, 1.442695
    %v2915 = vpow.pop %v2914
    %v2916 = vadd.f32 %v2915, 1.0
    %v2917 = vrcp.pop %v2916
    %v2918 = vmul.f32 1.0, %v2917
    %v2919 = vadd.f32 %v2900, %v441
    %v2920 = vmul.f32 %v2911, %v2919
    %v2921 = vadd.f32 %v2818, %v2920
    %v2922 = vtanh.pop %v2921
    %v2923 = vsub.f32 1.0, %v2918
    %v2924 = vmul.f32 %v2923, %v2922
    %v2925 = vmul.f32 %v2918, %v2622
    %v2926 = vadd.f32 %v2924, %v2925
    %2927 = vmatprep.subr.bf16.mxu0 %v524
    %2928 = vmatpush1.bf16.msra.mxu0 %v523
    %2929 = vmatprep.subr.bf16.mxu0 %v527
    %2930 = vmatpush1.bf16.msra.mxu0 %v526
    %2931 = vmatprep.subr.bf16.mxu0 %v530
    %2932 = vmatpush1.bf16.msra.mxu0 %v529
    %2933 = vmatprep.subr.bf16.mxu0 %v533
    %2934 = vmatpush1.bf16.msra.mxu0 %v532
    %2935 = vmatprep.subr.bf16.mxu0 %v536
    %2936 = vmatpush1.bf16.msra.mxu0 %v535
    %2937 = vmatprep.subr.bf16.mxu0 %v539
    %2938 = vmatpush1.bf16.msra.mxu0 %v538
    %2939 = vmatprep.subr.bf16.mxu0 %v542
    %2940 = vmatpush1.bf16.msra.mxu0 %v541
    %2941 = vmatprep.subr.bf16.mxu0 %v545
    %2942 = vmatpush1.bf16.msra.mxu0 %v544
    %2943 = vmatprep.subr.bf16.mxu0 0
    %2944 = vmatpush1.bf16.msra.mxu0 0
    %2945 = vmatprep.subr.bf16.mxu0 0
    %2946 = vmatpush1.bf16.msra.mxu0 0
    %2947 = vmatprep.subr.bf16.mxu0 0
    %2948 = vmatpush1.bf16.msra.mxu0 0
    %2949 = vmatprep.subr.bf16.mxu0 0
    %2950 = vmatpush1.bf16.msra.mxu0 0
    %2951 = vmatprep.subr.bf16.mxu0 0
    %2952 = vmatpush1.bf16.msra.mxu0 0
    %2953 = vmatprep.subr.bf16.mxu0 0
    %2954 = vmatpush1.bf16.msra.mxu0 0
    %2955 = vmatprep.subr.bf16.mxu0 0
    %2956 = vmatpush1.bf16.msra.mxu0 0
    %2957 = vmatprep.subr.bf16.mxu0 0
    %2958 = vmatpush1.bf16.msra.mxu0 0
    %2959 = vmatprep.mubr.bf16.mxu0 0
    %2960 = vmatmul.mubr.bf16.gmra.mrb[0].mxu0 %v2740
    %v2961 = vpop.f32.mrb[0].mxu0
    %v2962 = vadd.f32 0.0, %v2961
    %v2963 = vpop.f32.mrb[0].mxu0
    %v2964 = vadd.f32 0.0, %v2963
    %v2965 = vpop.f32.mrb[0].mxu0
    %v2966 = vpop.f32.mrb[0].mxu0
    %2967 = vdwg.mxu0
    %2968 = vmatprep.subr.bf16.mxu0 0
    %2969 = vmatpush1.bf16.msra.mxu0 %v525
    %2970 = vmatprep.subr.bf16.mxu0 0
    %2971 = vmatpush1.bf16.msra.mxu0 %v528
    %2972 = vmatprep.subr.bf16.mxu0 0
    %2973 = vmatpush1.bf16.msra.mxu0 %v531
    %2974 = vmatprep.subr.bf16.mxu0 0
    %2975 = vmatpush1.bf16.msra.mxu0 %v534
    %2976 = vmatprep.subr.bf16.mxu0 0
    %2977 = vmatpush1.bf16.msra.mxu0 %v537
    %2978 = vmatprep.subr.bf16.mxu0 0
    %2979 = vmatpush1.bf16.msra.mxu0 %v540
    %2980 = vmatprep.subr.bf16.mxu0 0
    %2981 = vmatpush1.bf16.msra.mxu0 %v543
    %2982 = vmatprep.subr.bf16.mxu0 0
    %2983 = vmatpush1.bf16.msra.mxu0 %v546
    %2984 = vmatprep.subr.bf16.mxu0 0
    %2985 = vmatpush1.bf16.msra.mxu0 0
    %2986 = vmatprep.subr.bf16.mxu0 0
    %2987 = vmatpush1.bf16.msra.mxu0 0
    %2988 = vmatprep.subr.bf16.mxu0 0
    %2989 = vmatpush1.bf16.msra.mxu0 0
    %2990 = vmatprep.subr.bf16.mxu0 0
    %2991 = vmatpush1.bf16.msra.mxu0 0
    %2992 = vmatprep.subr.bf16.mxu0 0
    %2993 = vmatpush1.bf16.msra.mxu0 0
    %2994 = vmatprep.subr.bf16.mxu0 0
    %2995 = vmatpush1.bf16.msra.mxu0 0
    %2996 = vmatprep.subr.bf16.mxu0 0
    %2997 = vmatpush1.bf16.msra.mxu0 0
    %2998 = vmatprep.subr.bf16.mxu0 0
    %2999 = vmatpush1.bf16.msra.mxu0 0
    %3000 = vmatprep.mubr.bf16.mxu0 0
    %3001 = vmatmul.mubr.bf16.gmra.mrb[0].mxu0 %v2740
    %v3002 = vpop.f32.mrb[0].mxu0
    %v3003 = vadd.f32 0.0, %v3002
    %v3004 = vpop.f32.mrb[0].mxu0
    %v3005 = vpop.f32.mrb[0].mxu0
    %v3006 = vpop.f32.mrb[0].mxu0
    %3007 = vdwg.mxu0
    %v3009 = vrot.slane %v2962, 2
    %v3011 = vadd.f32 %v271, %v3009
    %v3012 = vxor.u32 %v3011, 2147483648
    %v3013 = vmul.f32 %v3012, 1.442695
    %v3014 = vpow.pop %v3013
    %v3015 = vadd.f32 %v3014, 1.0
    %v3016 = vrcp.pop %v3015
    %v3017 = vmul.f32 1.0, %v3016
    %v3019 = vrot.slane %v2964, 2
    %v3021 = vadd.f32 %v273, %v3019
    %v3022 = vxor.u32 %v3021, 2147483648
    %v3023 = vmul.f32 %v3022, 1.442695
    %v3024 = vpow.pop %v3023
    %v3025 = vadd.f32 %v3024, 1.0
    %v3026 = vrcp.pop %v3025
    %v3027 = vmul.f32 1.0, %v3026
    %v3028 = vadd.f32 %v3003, %v434
    %v3030 = vrot.slane %v3028, 2
    %v3032 = vmul.f32 %v3017, %v3030
    %v3033 = vadd.f32 %v313, %v3032
    %v3034 = vtanh.pop %v3033
    %v3035 = vsub.f32 1.0, %v3027
    %v3036 = vmul.f32 %v3035, %v3034
    %v3038 = vrot.slane %v2737, 6
    %v3040 = vmul.f32 %v3027, %v3038
    %v3041 = vadd.f32 %v3036, %v3040
    %v3042 = vpack.c.bf16 %v3041, %v3041
    %v3044 = vrot.slane %v3042, 3
    %3046 = vmatprep.subr.bf16.mxu0 %v756
    %3047 = vmatpush1.bf16.msra.mxu0 %v755
    %3048 = vmatprep.subr.bf16.mxu0 %v759
    %3049 = vmatpush1.bf16.msra.mxu0 %v758
    %3050 = vmatprep.subr.bf16.mxu0 %v762
    %3051 = vmatpush1.bf16.msra.mxu0 %v761
    %3052 = vmatprep.subr.bf16.mxu0 %v765
    %3053 = vmatpush1.bf16.msra.mxu0 %v764
    %3054 = vmatprep.subr.bf16.mxu0 %v768
    %3055 = vmatpush1.bf16.msra.mxu0 %v767
    %3056 = vmatprep.subr.bf16.mxu0 %v771
    %3057 = vmatpush1.bf16.msra.mxu0 %v770
    %3058 = vmatprep.subr.bf16.mxu0 %v774
    %3059 = vmatpush1.bf16.msra.mxu0 %v773
    %3060 = vmatprep.subr.bf16.mxu0 %v777
    %3061 = vmatpush1.bf16.msra.mxu0 %v776
    %3062 = vmatprep.subr.bf16.mxu0 0
    %3063 = vmatpush1.bf16.msra.mxu0 0
    %3064 = vmatprep.subr.bf16.mxu0 0
    %3065 = vmatpush1.bf16.msra.mxu0 0
    %3066 = vmatprep.subr.bf16.mxu0 0
    %3067 = vmatpush1.bf16.msra.mxu0 0
    %3068 = vmatprep.subr.bf16.mxu0 0
    %3069 = vmatpush1.bf16.msra.mxu0 0
    %3070 = vmatprep.subr.bf16.mxu0 0
    %3071 = vmatpush1.bf16.msra.mxu0 0
    %3072 = vmatprep.subr.bf16.mxu0 0
    %3073 = vmatpush1.bf16.msra.mxu0 0
    %3074 = vmatprep.subr.bf16.mxu0 0
    %3075 = vmatpush1.bf16.msra.mxu0 0
    %3076 = vmatprep.subr.bf16.mxu0 0
    %3077 = vmatpush1.bf16.msra.mxu0 0
    %3078 = vmatprep.mubr.bf16.mxu0 0
    %3079 = vmatmul.mubr.bf16.gmra.mrb[0].mxu0 %v3044
    %v3080 = vpop.f32.mrb[0].mxu0
    %v3081 = vadd.f32 %v417, %v3080
    %v3082 = vpop.f32.mrb[0].mxu0
    %v3083 = vadd.f32 %v421, %v3082
    %v3084 = vpop.f32.mrb[0].mxu0
    %v3085 = vpop.f32.mrb[0].mxu0
    %3086 = vdwg.mxu0
    %3087 = vmatprep.subr.bf16.mxu0 0
    %3088 = vmatpush1.bf16.msra.mxu0 %v757
    %3089 = vmatprep.subr.bf16.mxu0 0
    %3090 = vmatpush1.bf16.msra.mxu0 %v760
    %3091 = vmatprep.subr.bf16.mxu0 0
    %3092 = vmatpush1.bf16.msra.mxu0 %v763
    %3093 = vmatprep.subr.bf16.mxu0 0
    %3094 = vmatpush1.bf16.msra.mxu0 %v766
    %3095 = vmatprep.subr.bf16.mxu0 0
    %3096 = vmatpush1.bf16.msra.mxu0 %v769
    %3097 = vmatprep.subr.bf16.mxu0 0
    %3098 = vmatpush1.bf16.msra.mxu0 %v772
    %3099 = vmatprep.subr.bf16.mxu0 0
    %3100 = vmatpush1.bf16.msra.mxu0 %v775
    %3101 = vmatprep.subr.bf16.mxu0 0
    %3102 = vmatpush1.bf16.msra.mxu0 %v778
    %3103 = vmatprep.subr.bf16.mxu0 0
    %3104 = vmatpush1.bf16.msra.mxu0 0
    %3105 = vmatprep.subr.bf16.mxu0 0
    %3106 = vmatpush1.bf16.msra.mxu0 0
    %3107 = vmatprep.subr.bf16.mxu0 0
    %3108 = vmatpush1.bf16.msra.mxu0 0
    %3109 = vmatprep.subr.bf16.mxu0 0
    %3110 = vmatpush1.bf16.msra.mxu0 0
    %3111 = vmatprep.subr.bf16.mxu0 0
    %3112 = vmatpush1.bf16.msra.mxu0 0
    %3113 = vmatprep.subr.bf16.mxu0 0
    %3114 = vmatpush1.bf16.msra.mxu0 0
    %3115 = vmatprep.subr.bf16.mxu0 0
    %3116 = vmatpush1.bf16.msra.mxu0 0
    %3117 = vmatprep.subr.bf16.mxu0 0
    %3118 = vmatpush1.bf16.msra.mxu0 0
    %3119 = vmatprep.mubr.bf16.mxu0 0
    %3120 = vmatmul.mubr.bf16.gmra.mrb[0].mxu0 %v3044
    %v3121 = vpop.f32.mrb[0].mxu0
    %v3122 = vadd.f32 %v425, %v3121
    %v3123 = vpop.f32.mrb[0].mxu0
    %v3124 = vpop.f32.mrb[0].mxu0
    %v3125 = vpop.f32.mrb[0].mxu0
    %3126 = vdwg.mxu0
    %v3127 = vpack.c.bf16 %v2926, %v2926
    %3128 = vmatprep.subr.bf16.mxu0 %v965
    %3129 = vmatpush1.bf16.msra.mxu0 %v964
    %3130 = vmatprep.subr.bf16.mxu0 %v968
    %3131 = vmatpush1.bf16.msra.mxu0 %v967
    %3132 = vmatprep.subr.bf16.mxu0 %v971
    %3133 = vmatpush1.bf16.msra.mxu0 %v970
    %3134 = vmatprep.subr.bf16.mxu0 %v974
    %3135 = vmatpush1.bf16.msra.mxu0 %v973
    %3136 = vmatprep.subr.bf16.mxu0 %v977
    %3137 = vmatpush1.bf16.msra.mxu0 %v976
    %3138 = vmatprep.subr.bf16.mxu0 %v980
    %3139 = vmatpush1.bf16.msra.mxu0 %v979
    %3140 = vmatprep.subr.bf16.mxu0 %v983
    %3141 = vmatpush1.bf16.msra.mxu0 %v982
    %3142 = vmatprep.subr.bf16.mxu0 %v986
    %3143 = vmatpush1.bf16.msra.mxu0 %v985
    %3144 = vmatprep.subr.bf16.mxu0 0
    %3145 = vmatpush1.bf16.msra.mxu0 0
    %3146 = vmatprep.subr.bf16.mxu0 0
    %3147 = vmatpush1.bf16.msra.mxu0 0
    %3148 = vmatprep.subr.bf16.mxu0 0
    %3149 = vmatpush1.bf16.msra.mxu0 0
    %3150 = vmatprep.subr.bf16.mxu0 0
    %3151 = vmatpush1.bf16.msra.mxu0 0
    %3152 = vmatprep.subr.bf16.mxu0 0
    %3153 = vmatpush1.bf16.msra.mxu0 0
    %3154 = vmatprep.subr.bf16.mxu0 0
    %3155 = vmatpush1.bf16.msra.mxu0 0
    %3156 = vmatprep.subr.bf16.mxu0 0
    %3157 = vmatpush1.bf16.msra.mxu0 0
    %3158 = vmatprep.subr.bf16.mxu0 0
    %3159 = vmatpush1.bf16.msra.mxu0 0
    %3160 = vmatprep.mubr.bf16.mxu0 0
    %3161 = vmatmul.mubr.bf16.gmra.mrb[0].mxu0 %v3127
    %v3162 = vpop.f32.mrb[0].mxu0
    %v3163 = vadd.f32 0.0, %v3162
    %v3164 = vpop.f32.mrb[0].mxu0
    %v3165 = vadd.f32 0.0, %v3164
    %v3166 = vpop.f32.mrb[0].mxu0
    %v3167 = vpop.f32.mrb[0].mxu0
    %3168 = vdwg.mxu0
    %3169 = vmatprep.subr.bf16.mxu0 0
    %3170 = vmatpush1.bf16.msra.mxu0 %v966
    %3171 = vmatprep.subr.bf16.mxu0 0
    %3172 = vmatpush1.bf16.msra.mxu0 %v969
    %3173 = vmatprep.subr.bf16.mxu0 0
    %3174 = vmatpush1.bf16.msra.mxu0 %v972
    %3175 = vmatprep.subr.bf16.mxu0 0
    %3176 = vmatpush1.bf16.msra.mxu0 %v975
    %3177 = vmatprep.subr.bf16.mxu0 0
    %3178 = vmatpush1.bf16.msra.mxu0 %v978
    %3179 = vmatprep.subr.bf16.mxu0 0
    %3180 = vmatpush1.bf16.msra.mxu0 %v981
    %3181 = vmatprep.subr.bf16.mxu0 0
    %3182 = vmatpush1.bf16.msra.mxu0 %v984
    %3183 = vmatprep.subr.bf16.mxu0 0
    %3184 = vmatpush1.bf16.msra.mxu0 %v987
    %3185 = vmatprep.subr.bf16.mxu0 0
    %3186 = vmatpush1.bf16.msra.mxu0 0
    %3187 = vmatprep.subr.bf16.mxu0 0
    %3188 = vmatpush1.bf16.msra.mxu0 0
    %3189 = vmatprep.subr.bf16.mxu0 0
    %3190 = vmatpush1.bf16.msra.mxu0 0
    %3191 = vmatprep.subr.bf16.mxu0 0
    %3192 = vmatpush1.bf16.msra.mxu0 0
    %3193 = vmatprep.subr.bf16.mxu0 0
    %3194 = vmatpush1.bf16.msra.mxu0 0
    %3195 = vmatprep.subr.bf16.mxu0 0
    %3196 = vmatpush1.bf16.msra.mxu0 0
    %3197 = vmatprep.subr.bf16.mxu0 0
    %3198 = vmatpush1.bf16.msra.mxu0 0
    %3199 = vmatprep.subr.bf16.mxu0 0
    %3200 = vmatpush1.bf16.msra.mxu0 0
    %3201 = vmatprep.mubr.bf16.mxu0 0
    %3202 = vmatmul.mubr.bf16.gmra.mrb[0].mxu0 %v3127
    %v3203 = vpop.f32.mrb[0].mxu0
    %v3204 = vadd.f32 0.0, %v3203
    %v3205 = vpop.f32.mrb[0].mxu0
    %v3206 = vpop.f32.mrb[0].mxu0
    %v3207 = vpop.f32.mrb[0].mxu0
    %3208 = vdwg.mxu0
    %v3209 = vadd.f32 %v3081, %v3163
    %v3210 = vxor.u32 %v3209, 2147483648
    %v3211 = vmul.f32 %v3210, 1.442695
    %v3212 = vpow.pop %v3211
    %v3213 = vadd.f32 %v3212, 1.0
    %v3214 = vrcp.pop %v3213
    %v3215 = vmul.f32 1.0, %v3214
    %v3216 = vadd.f32 %v3083, %v3165
    %v3217 = vxor.u32 %v3216, 2147483648
    %v3218 = vmul.f32 %v3217, 1.442695
    %v3219 = vpow.pop %v3218
    %v3220 = vadd.f32 %v3219, 1.0
    %v3221 = vrcp.pop %v3220
    %v3222 = vmul.f32 1.0, %v3221
    %v3223 = vadd.f32 %v3204, %v441
    %v3224 = vmul.f32 %v3215, %v3223
    %v3225 = vadd.f32 %v3122, %v3224
    %v3226 = vtanh.pop %v3225
    %v3227 = vsub.f32 1.0, %v3222
    %v3228 = vmul.f32 %v3227, %v3226
    %v3229 = vmul.f32 %v3222, %v2926
    %v3230 = vadd.f32 %v3228, %v3229
    %vm3231 = vcmask 261126
    %3232 = vst.msk [vmem:[#allocation8 - $0x6] sm:$0xc0] %vm3231, %v3041
    %s3233 = scalar_lea.vmem [#allocation8], 2
    %vm3234 = vcmask 254976
    %3235 = vst.msk [vmem:[%s3233] sm:$0x3] %vm3234, %v3230
    // Predicated region
    $region54: #{encoder_forward.1} parent=1 // pred_check
      _
    $region55: #{encoder_forward.1} parent=1 // pred_check_branch
      %3237 = sbr.rel (0) target = $region57
    $region56: #{encoder_forward.1} parent=1 // pred_region
      %s3239 = ssub.s32 64, 64
      %3240 = vsyncadd [#allocation4], %s3239
      %s3241 = sshll.u32 [#allocation8], 4
      %s3242 = int_to_ptr.vmem [resolvable:$true] %s3241
      %3247 = dma.vmem_to_hbm [thread:$0]  %s3242, 64, %s10, [#allocation4], 32, 32, 2
    $region57: #{encoder_forward.1} parent=1 // pred_fallthru
      _
    // Predicated region
    $region58: #{encoder_forward.1} parent=1 // pred_check
      _
    $region59: #{encoder_forward.1} parent=1 // pred_check_branch
      %3249 = sbr.rel (0) target = $region61
    $region60: #{encoder_forward.1} parent=1 // pred_region
      %3250 = dma.done [#allocation4], 64
    $region61: #{encoder_forward.1} parent=1 // pred_fallthru
      _
    %3251 = vsyncpa [#allocation3], 1
    %3252 = vsyncpa [#allocation6], 1
    %3253 = vsyncpa [#allocation4], 1

</llo_original>
